<compile_context>
chip_gen: v7x
topology: tpu7x:2x2x1
jax: 0.10.0
libtpu: 0.0.40
codegen_flags: <defaults>
</compile_context>

<pallas_src>
import jax
import jax.numpy as jnp
import numpy as np
from jax.experimental import pallas as pl
from jax.experimental.pallas import tpu as pltpu


def _mean_hw(a):
    """Mean over the two spatial (minor) axes, keepdims."""
    return jnp.mean(jnp.mean(a, axis=3, keepdims=True), axis=2, keepdims=True)


def _ema_kernel(gxp_ref, w1_ref, b1_ref, w3_ref, b3_ref, gnw_ref, gnb_ref,
                out_ref):
    # gxp_ref : (BG, CG, H+2, W+2) zero-padded grouped input slab in VMEM
    xp = gxp_ref[...].astype(jnp.float32)
    BG, CG, HP, WP = xp.shape
    H, W = HP - 2, WP - 2

    # centre view == the raw grouped input
    x = xp[:, :, 1:1 + H, 1:1 + W]                       # (BG, CG, H, W)

    # ---- hoist all learned parameters once (small resident VMEM tensors) ----
    w1 = w1_ref[...]      # (CG_in, CG_out, 1, 1)  conv1x1 weight columns
    b1 = b1_ref[...]      # (CG, 1, 1)
    w3 = w3_ref[...]      # (9*CG_in, CG_out, 1, 1) conv3x3 cols, (ky,kx,in)-major
    b3 = b3_ref[...]      # (CG, 1, 1)
    gnw = gnw_ref[...]    # (CG, 1, 1)  GroupNorm gamma
    gnb = gnb_ref[...]    # (CG, 1, 1)  GroupNorm beta

    # ---- adaptive average pools (pool_h / pool_w) ----------------------------
    x_h = jnp.mean(x, axis=3, keepdims=True)             # (BG, CG, H, 1)
    x_w = jnp.mean(x, axis=2, keepdims=True)             # (BG, CG, 1, W)

    # ---- conv1x1 channel mix on pooled descriptors (VPU broadcast FMAs) ------
    def channel_mix(v):
        acc = None
        for ci in range(CG):
            term = w1[ci][None] * v[:, ci:ci + 1]
            acc = term if acc is None else acc + term
        return acc + b1[None]

    xh_s = jax.nn.sigmoid(channel_mix(x_h))              # (BG, CG, H, 1)
    xw_s = jax.nn.sigmoid(channel_mix(x_w))              # (BG, CG, 1, W)

    t = x * xh_s * xw_s                                  # gated feature map

    # ---- GroupNorm(num_groups == num_channels): per-(b,c) instance norm ------
    mu = _mean_hw(t)
    var = _mean_hw(jnp.square(t - mu))
    x1 = (t - mu) * jax.lax.rsqrt(var + 1e-5)
    x1 = x1 * gnw[None] + gnb[None]

    # ---- conv3x3 (padding=1): nine static taps of the pre-padded slab --------
    acc = None
    for ky in range(3):
        for kx in range(3):
            sh = xp[:, :, ky:ky + H, kx:kx + W]          # x shifted by (ky-1, kx-1)
            k = ky * 3 + kx
            for ci in range(CG):
                col = w3[k * CG + ci][None]              # (1, CG_out, 1, 1)
                term = col * sh[:, ci:ci + 1]            # (BG, CG_out, H, W)
                acc = term if acc is None else acc + term
    x2 = acc + b3[None]

    # ---- cross-branch attention (agp -> channel softmax -> weighted sum) -----
    m1 = _mean_hw(x1)                                    # (BG, CG, 1, 1)
    m2 = _mean_hw(x2)

    def ch_softmax(m):
        cols = [m[:, ci:ci + 1] for ci in range(CG)]     # each (BG, 1, 1, 1)
        mx = cols[0]
        for v in cols[1:]:
            mx = jnp.maximum(mx, v)
        es = [jnp.exp(v - mx) for v in cols]
        s = es[0]
        for v in es[1:]:
            s = s + v
        return [e / s for e in es]

    x11 = ch_softmax(m1)                                 # gates x2
    x21 = ch_softmax(m2)                                 # gates x1

    wsum = None
    for ci in range(CG):
        term = x11[ci] * x2[:, ci:ci + 1] + x21[ci] * x1[:, ci:ci + 1]
        wsum = term if wsum is None else wsum + term     # (BG, 1, H, W)

    sig = jax.nn.sigmoid(wsum)                           # (BG, 1, H, W)
    # single full-block store
    out_ref[...] = (x * sig).astype(out_ref.dtype)


def ema_pallas(x, p, groups):
    b, c, h, w = x.shape
    assert c % groups == 0
    cg = c // groups
    c_keep = c // 2
    keep_groups = -(-c_keep // cg)        # only groups whose output survives
    bgk = b * keep_groups

    # keep only the grouped-batch elements that contribute to the narrowed output
    gx = x.reshape(b, groups, cg, h, w)[:, :keep_groups].reshape(bgk, cg, h, w)
    # zero-pad spatially once in XLA so the conv3x3 taps are static VMEM slices
    gxp = jnp.pad(gx, ((0, 0), (0, 0), (1, 1), (1, 1)))

    # 2 parallel grid steps when possible (both TCs on v7x), else 1
    n_blocks = 2 if (bgk >= 2 and bgk % 2 == 0) else 1
    bg_blk = bgk // n_blocks

    # parameter packing: shapes chosen so the kernel only adds leading axes
    w1p = jnp.transpose(p['w1'], (1, 0))[:, :, None, None]            # (I, O, 1, 1)
    w3p = jnp.transpose(p['w3'], (2, 3, 1, 0)).reshape(9 * cg, cg)    # (ky,kx,I rows, O)
    w3p = w3p[:, :, None, None]                                        # (9*I, O, 1, 1)
    b1p = p['b1'][:, None, None]
    b3p = p['b3'][:, None, None]
    gnwp = p['gnw'][:, None, None]
    gnbp = p['gnb'][:, None, None]

    out = pl.pallas_call(
        _ema_kernel,
        out_shape=jax.ShapeDtypeStruct((bgk, cg, h, w), x.dtype),
        grid_spec=pltpu.PrefetchScalarGridSpec(
            num_scalar_prefetch=0,
            grid=(n_blocks,),
            in_specs=[
                pl.BlockSpec((bg_blk, cg, h + 2, w + 2), lambda i: (i, 0, 0, 0)),
                pl.BlockSpec((cg, cg, 1, 1), lambda i: (0, 0, 0, 0)),
                pl.BlockSpec((cg, 1, 1), lambda i: (0, 0, 0)),
                pl.BlockSpec((9 * cg, cg, 1, 1), lambda i: (0, 0, 0, 0)),
                pl.BlockSpec((cg, 1, 1), lambda i: (0, 0, 0)),
                pl.BlockSpec((cg, 1, 1), lambda i: (0, 0, 0)),
                pl.BlockSpec((cg, 1, 1), lambda i: (0, 0, 0)),
            ],
            out_specs=pl.BlockSpec((bg_blk, cg, h, w), lambda i: (i, 0, 0, 0)),
        ),
        compiler_params=pltpu.CompilerParams(
            dimension_semantics=("parallel",)),
    )(gxp, w1p, b1p, w3p, b3p, gnwp, gnbp)

    # (b, keep_groups*cg, h, w) -> torch.narrow(..., 1, 0, c//2)
    ema = out.reshape(b, keep_groups * cg, h, w)
    return ema[:, :c_keep]


def ema_reference(x, p, groups):
    """Pure-JAX reference mirroring the PyTorch forward exactly."""
    b, c, h, w = x.shape
    cg = c // groups
    gx = x.reshape(b * groups, cg, h, w)
    hp = jax.lax.Precision.HIGHEST

    x_h = jnp.mean(gx, axis=3, keepdims=True)                       # (bg,cg,h,1)
    x_w = jnp.transpose(jnp.mean(gx, axis=2, keepdims=True), (0, 1, 3, 2))
    cat = jnp.concatenate([x_h, x_w], axis=2)                       # (bg,cg,h+w,1)
    hw_ = jnp.einsum('oc,bcpq->bopq', p['w1'], cat, precision=hp)
    hw_ = hw_ + p['b1'][None, :, None, None]
    xh, xw = hw_[:, :, :h], hw_[:, :, h:]
    t = gx * jax.nn.sigmoid(xh) * jax.nn.sigmoid(jnp.transpose(xw, (0, 1, 3, 2)))

    mu = jnp.mean(t, axis=(2, 3), keepdims=True)
    var = jnp.mean((t - mu) ** 2, axis=(2, 3), keepdims=True)
    x1 = (t - mu) / jnp.sqrt(var + 1e-5)
    x1 = x1 * p['gnw'][None, :, None, None] + p['gnb'][None, :, None, None]

    x2 = jax.lax.conv_general_dilated(
        gx, p['w3'], (1, 1), 'SAME',
        dimension_numbers=('NCHW', 'OIHW', 'NCHW'), precision=hp)
    x2 = x2 + p['b3'][None, :, None, None]

    x11 = jax.nn.softmax(jnp.mean(x1, axis=(2, 3)), axis=-1)        # (bg, cg)
    x21 = jax.nn.softmax(jnp.mean(x2, axis=(2, 3)), axis=-1)
    x12 = x2.reshape(b * groups, cg, h * w)
    x22 = x1.reshape(b * groups, cg, h * w)
    weights = (jnp.einsum('bc,bcp->bp', x11, x12, precision=hp)
               + jnp.einsum('bc,bcp->bp', x21, x22, precision=hp))
    weights = weights.reshape(b * groups, 1, h, w)
    out = (gx * jax.nn.sigmoid(weights)).reshape(b, c, h, w)
    return out[:, : c // 2]


if __name__ == "__main__":
    key = jax.random.PRNGKey(0)
    b, c, h, w = 2, 16, 16, 16
    factor = 8
    cg = c // factor

    k = jax.random.split(key, 8)
    x = jax.random.normal(k[0], (b, c, h, w), jnp.float32)
    w1 = jax.random.normal(k[1], (cg, cg), jnp.float32) * 0.2
    b1 = jax.random.normal(k[2], (cg,), jnp.float32) * 0.1
    w3 = jax.random.normal(k[3], (cg, cg, 3, 3), jnp.float32) * 0.2
    b3 = jax.random.normal(k[4], (cg,), jnp.float32) * 0.1
    gnw = 1.0 + 0.1 * jax.random.normal(k[5], (cg,), jnp.float32)
    gnb = 0.1 * jax.random.normal(k[6], (cg,), jnp.float32)

    params = dict(w1=w1, b1=b1, w3=w3, b3=b3, gnw=gnw, gnb=gnb)

    out = ema_pallas(x, params, factor)
    out = jax.block_until_ready(out)

    ref = ema_reference(x, params, factor)
    np.testing.assert_allclose(np.asarray(out), np.asarray(ref),
                               atol=1e-4, rtol=1e-4)
    assert out.shape == (b, c // 2, h, w)
    print("KERNEL_OK")
</pallas_src>

<mosaic_0001>
module attributes {stable_mosaic.version = 11 : i64} {
  func.func @_ema_kernel(%arg0: i32, %arg1: memref<4x2x18x18xf32, #tpu.memory_space<vmem>>, %arg2: memref<2x2x1x1xf32, #tpu.memory_space<vmem>>, %arg3: memref<2x1x1xf32, #tpu.memory_space<vmem>>, %arg4: memref<18x2x1x1xf32, #tpu.memory_space<vmem>>, %arg5: memref<2x1x1xf32, #tpu.memory_space<vmem>>, %arg6: memref<2x1x1xf32, #tpu.memory_space<vmem>>, %arg7: memref<2x1x1xf32, #tpu.memory_space<vmem>>, %arg8: memref<4x2x16x16xf32, #tpu.memory_space<vmem>>) attributes {dimension_semantics = [#tpu.dimension_semantics<parallel>], iteration_bounds = array<i64: 2>, scalar_prefetch = 0 : i64, scratch_operands = 0 : i64, tpu.core_type = #tpu.core_type<tc>, window_params = [{transform_indices = @transform_0, window_bounds = array<i64: 4, 2, 18, 18>}, {pipeline_mode = #tpu.pipeline_mode<synchronous>, transform_indices = @transform_1, window_bounds = array<i64: 2, 2, 1, 1>}, {pipeline_mode = #tpu.pipeline_mode<synchronous>, transform_indices = @transform_2, window_bounds = array<i64: 2, 1, 1>}, {pipeline_mode = #tpu.pipeline_mode<synchronous>, transform_indices = @transform_3, window_bounds = array<i64: 18, 2, 1, 1>}, {pipeline_mode = #tpu.pipeline_mode<synchronous>, transform_indices = @transform_4, window_bounds = array<i64: 2, 1, 1>}, {pipeline_mode = #tpu.pipeline_mode<synchronous>, transform_indices = @transform_5, window_bounds = array<i64: 2, 1, 1>}, {pipeline_mode = #tpu.pipeline_mode<synchronous>, transform_indices = @transform_6, window_bounds = array<i64: 2, 1, 1>}, {transform_indices = @transform_7, window_bounds = array<i64: 4, 2, 16, 16>}]} {
    %c0 = arith.constant 0 : index
    %c0_0 = arith.constant 0 : index
    %c0_1 = arith.constant 0 : index
    %c0_2 = arith.constant 0 : index
    %0 = vector.load %arg1[%c0, %c0_0, %c0_1, %c0_2] : memref<4x2x18x18xf32, #tpu.memory_space<vmem>>, vector<4x2x18x18xf32>
    %1 = vector.extract_strided_slice %0 {offsets = [0, 0, 1, 1], sizes = [4, 2, 16, 16], strides = [1, 1, 1, 1]} : vector<4x2x18x18xf32> to vector<4x2x16x16xf32>
    %c0_3 = arith.constant 0 : index
    %c0_4 = arith.constant 0 : index
    %c0_5 = arith.constant 0 : index
    %c0_6 = arith.constant 0 : index
    %2 = vector.load %arg2[%c0_3, %c0_4, %c0_5, %c0_6] : memref<2x2x1x1xf32, #tpu.memory_space<vmem>>, vector<2x2x1x1xf32>
    %c0_7 = arith.constant 0 : index
    %c0_8 = arith.constant 0 : index
    %c0_9 = arith.constant 0 : index
    %3 = vector.load %arg3[%c0_7, %c0_8, %c0_9] : memref<2x1x1xf32, #tpu.memory_space<vmem>>, vector<2x1x1xf32>
    %c0_10 = arith.constant 0 : index
    %c0_11 = arith.constant 0 : index
    %c0_12 = arith.constant 0 : index
    %c0_13 = arith.constant 0 : index
    %4 = vector.load %arg4[%c0_10, %c0_11, %c0_12, %c0_13] : memref<18x2x1x1xf32, #tpu.memory_space<vmem>>, vector<18x2x1x1xf32>
    %c0_14 = arith.constant 0 : index
    %c0_15 = arith.constant 0 : index
    %c0_16 = arith.constant 0 : index
    %5 = vector.load %arg5[%c0_14, %c0_15, %c0_16] : memref<2x1x1xf32, #tpu.memory_space<vmem>>, vector<2x1x1xf32>
    %c0_17 = arith.constant 0 : index
    %c0_18 = arith.constant 0 : index
    %c0_19 = arith.constant 0 : index
    %6 = vector.load %arg6[%c0_17, %c0_18, %c0_19] : memref<2x1x1xf32, #tpu.memory_space<vmem>>, vector<2x1x1xf32>
    %c0_20 = arith.constant 0 : index
    %c0_21 = arith.constant 0 : index
    %c0_22 = arith.constant 0 : index
    %7 = vector.load %arg7[%c0_20, %c0_21, %c0_22] : memref<2x1x1xf32, #tpu.memory_space<vmem>>, vector<2x1x1xf32>
    %cst = arith.constant dense<0.000000e+00> : vector<4x2x16xf32>
    %8 = vector.multi_reduction <add>, %1, %cst [3] : vector<4x2x16x16xf32> to vector<4x2x16xf32>
    %9 = vector.shape_cast %8 : vector<4x2x16xf32> to vector<4x2x16x1xf32>
    %cst_23 = arith.constant 1.600000e+01 : f32
    %10 = vector.broadcast %cst_23 : f32 to vector<4x2x16x1xf32>
    %11 = arith.divf %9, %10 : vector<4x2x16x1xf32>
    %cst_24 = arith.constant dense<0.000000e+00> : vector<4x2x16xf32>
    %12 = vector.multi_reduction <add>, %1, %cst_24 [2] : vector<4x2x16x16xf32> to vector<4x2x16xf32>
    %13 = vector.shape_cast %12 : vector<4x2x16xf32> to vector<4x2x1x16xf32>
    %cst_25 = arith.constant 1.600000e+01 : f32
    %14 = vector.broadcast %cst_25 : f32 to vector<4x2x1x16xf32>
    %15 = arith.divf %13, %14 : vector<4x2x1x16xf32>
    %16 = vector.extract_strided_slice %2 {offsets = [0, 0, 0, 0], sizes = [1, 2, 1, 1], strides = [1, 1, 1, 1]} : vector<2x2x1x1xf32> to vector<1x2x1x1xf32>
    %17 = vector.shape_cast %16 : vector<1x2x1x1xf32> to vector<2x1x1xf32>
    %18 = vector.shape_cast %17 : vector<2x1x1xf32> to vector<1x2x1x1xf32>
    %19 = vector.extract_strided_slice %11 {offsets = [0, 0, 0, 0], sizes = [4, 1, 16, 1], strides = [1, 1, 1, 1]} : vector<4x2x16x1xf32> to vector<4x1x16x1xf32>
    %20 = vector.broadcast %18 : vector<1x2x1x1xf32> to vector<4x2x16x1xf32>
    %21 = vector.broadcast %19 : vector<4x1x16x1xf32> to vector<4x2x16x1xf32>
    %22 = arith.mulf %20, %21 : vector<4x2x16x1xf32>
    %23 = vector.extract_strided_slice %2 {offsets = [1, 0, 0, 0], sizes = [1, 2, 1, 1], strides = [1, 1, 1, 1]} : vector<2x2x1x1xf32> to vector<1x2x1x1xf32>
    %24 = vector.shape_cast %23 : vector<1x2x1x1xf32> to vector<2x1x1xf32>
    %25 = vector.shape_cast %24 : vector<2x1x1xf32> to vector<1x2x1x1xf32>
    %26 = vector.extract_strided_slice %11 {offsets = [0, 1, 0, 0], sizes = [4, 1, 16, 1], strides = [1, 1, 1, 1]} : vector<4x2x16x1xf32> to vector<4x1x16x1xf32>
    %27 = vector.broadcast %25 : vector<1x2x1x1xf32> to vector<4x2x16x1xf32>
    %28 = vector.broadcast %26 : vector<4x1x16x1xf32> to vector<4x2x16x1xf32>
    %29 = arith.mulf %27, %28 : vector<4x2x16x1xf32>
    %30 = arith.addf %22, %29 : vector<4x2x16x1xf32>
    %31 = vector.shape_cast %3 : vector<2x1x1xf32> to vector<1x2x1x1xf32>
    %32 = vector.broadcast %31 : vector<1x2x1x1xf32> to vector<4x2x16x1xf32>
    %33 = arith.addf %30, %32 : vector<4x2x16x1xf32>
    %34 = arith.negf %33 : vector<4x2x16x1xf32>
    %35 = math.exp %34 : vector<4x2x16x1xf32>
    %cst_26 = arith.constant 1.000000e+00 : f32
    %36 = vector.broadcast %cst_26 : f32 to vector<4x2x16x1xf32>
    %37 = arith.addf %36, %35 : vector<4x2x16x1xf32>
    %38 = arith.divf %36, %37 : vector<4x2x16x1xf32>
    %39 = vector.extract_strided_slice %2 {offsets = [0, 0, 0, 0], sizes = [1, 2, 1, 1], strides = [1, 1, 1, 1]} : vector<2x2x1x1xf32> to vector<1x2x1x1xf32>
    %40 = vector.shape_cast %39 : vector<1x2x1x1xf32> to vector<2x1x1xf32>
    %41 = vector.shape_cast %40 : vector<2x1x1xf32> to vector<1x2x1x1xf32>
    %42 = vector.extract_strided_slice %15 {offsets = [0, 0, 0, 0], sizes = [4, 1, 1, 16], strides = [1, 1, 1, 1]} : vector<4x2x1x16xf32> to vector<4x1x1x16xf32>
    %43 = vector.broadcast %41 : vector<1x2x1x1xf32> to vector<4x2x1x16xf32>
    %44 = vector.broadcast %42 : vector<4x1x1x16xf32> to vector<4x2x1x16xf32>
    %45 = arith.mulf %43, %44 : vector<4x2x1x16xf32>
    %46 = vector.extract_strided_slice %2 {offsets = [1, 0, 0, 0], sizes = [1, 2, 1, 1], strides = [1, 1, 1, 1]} : vector<2x2x1x1xf32> to vector<1x2x1x1xf32>
    %47 = vector.shape_cast %46 : vector<1x2x1x1xf32> to vector<2x1x1xf32>
    %48 = vector.shape_cast %47 : vector<2x1x1xf32> to vector<1x2x1x1xf32>
    %49 = vector.extract_strided_slice %15 {offsets = [0, 1, 0, 0], sizes = [4, 1, 1, 16], strides = [1, 1, 1, 1]} : vector<4x2x1x16xf32> to vector<4x1x1x16xf32>
    %50 = vector.broadcast %48 : vector<1x2x1x1xf32> to vector<4x2x1x16xf32>
    %51 = vector.broadcast %49 : vector<4x1x1x16xf32> to vector<4x2x1x16xf32>
    %52 = arith.mulf %50, %51 : vector<4x2x1x16xf32>
    %53 = arith.addf %45, %52 : vector<4x2x1x16xf32>
    %54 = vector.shape_cast %3 : vector<2x1x1xf32> to vector<1x2x1x1xf32>
    %55 = vector.broadcast %54 : vector<1x2x1x1xf32> to vector<4x2x1x16xf32>
    %56 = arith.addf %53, %55 : vector<4x2x1x16xf32>
    %57 = arith.negf %56 : vector<4x2x1x16xf32>
    %58 = math.exp %57 : vector<4x2x1x16xf32>
    %cst_27 = arith.constant 1.000000e+00 : f32
    %59 = vector.broadcast %cst_27 : f32 to vector<4x2x1x16xf32>
    %60 = arith.addf %59, %58 : vector<4x2x1x16xf32>
    %61 = arith.divf %59, %60 : vector<4x2x1x16xf32>
    %62 = vector.broadcast %38 : vector<4x2x16x1xf32> to vector<4x2x16x16xf32>
    %63 = arith.mulf %1, %62 : vector<4x2x16x16xf32>
    %64 = vector.broadcast %61 : vector<4x2x1x16xf32> to vector<4x2x16x16xf32>
    %65 = arith.mulf %63, %64 : vector<4x2x16x16xf32>
    %cst_28 = arith.constant dense<0.000000e+00> : vector<4x2x16xf32>
    %66 = vector.multi_reduction <add>, %65, %cst_28 [3] : vector<4x2x16x16xf32> to vector<4x2x16xf32>
    %67 = vector.shape_cast %66 : vector<4x2x16xf32> to vector<4x2x16x1xf32>
    %cst_29 = arith.constant 1.600000e+01 : f32
    %68 = vector.broadcast %cst_29 : f32 to vector<4x2x16x1xf32>
    %69 = arith.divf %67, %68 : vector<4x2x16x1xf32>
    %cst_30 = arith.constant dense<0.000000e+00> : vector<4x2x1xf32>
    %70 = vector.multi_reduction <add>, %69, %cst_30 [2] : vector<4x2x16x1xf32> to vector<4x2x1xf32>
    %71 = vector.shape_cast %70 : vector<4x2x1xf32> to vector<4x2x1x1xf32>
    %cst_31 = arith.constant 1.600000e+01 : f32
    %72 = vector.broadcast %cst_31 : f32 to vector<4x2x1x1xf32>
    %73 = arith.divf %71, %72 : vector<4x2x1x1xf32>
    %74 = vector.broadcast %73 : vector<4x2x1x1xf32> to vector<4x2x16x16xf32>
    %75 = arith.subf %65, %74 : vector<4x2x16x16xf32>
    %76 = arith.mulf %75, %75 : vector<4x2x16x16xf32>
    %cst_32 = arith.constant dense<0.000000e+00> : vector<4x2x16xf32>
    %77 = vector.multi_reduction <add>, %76, %cst_32 [3] : vector<4x2x16x16xf32> to vector<4x2x16xf32>
    %78 = vector.shape_cast %77 : vector<4x2x16xf32> to vector<4x2x16x1xf32>
    %cst_33 = arith.constant 1.600000e+01 : f32
    %79 = vector.broadcast %cst_33 : f32 to vector<4x2x16x1xf32>
    %80 = arith.divf %78, %79 : vector<4x2x16x1xf32>
    %cst_34 = arith.constant dense<0.000000e+00> : vector<4x2x1xf32>
    %81 = vector.multi_reduction <add>, %80, %cst_34 [2] : vector<4x2x16x1xf32> to vector<4x2x1xf32>
    %82 = vector.shape_cast %81 : vector<4x2x1xf32> to vector<4x2x1x1xf32>
    %cst_35 = arith.constant 1.600000e+01 : f32
    %83 = vector.broadcast %cst_35 : f32 to vector<4x2x1x1xf32>
    %84 = arith.divf %82, %83 : vector<4x2x1x1xf32>
    %85 = vector.broadcast %73 : vector<4x2x1x1xf32> to vector<4x2x16x16xf32>
    %86 = arith.subf %65, %85 : vector<4x2x16x16xf32>
    %cst_36 = arith.constant 9.99999974E-6 : f32
    %87 = vector.broadcast %cst_36 : f32 to vector<4x2x1x1xf32>
    %88 = arith.addf %84, %87 : vector<4x2x1x1xf32>
    %89 = math.rsqrt %88 : vector<4x2x1x1xf32>
    %90 = vector.broadcast %89 : vector<4x2x1x1xf32> to vector<4x2x16x16xf32>
    %91 = arith.mulf %86, %90 : vector<4x2x16x16xf32>
    %92 = vector.shape_cast %6 : vector<2x1x1xf32> to vector<1x2x1x1xf32>
    %93 = vector.broadcast %92 : vector<1x2x1x1xf32> to vector<4x2x16x16xf32>
    %94 = arith.mulf %91, %93 : vector<4x2x16x16xf32>
    %95 = vector.shape_cast %7 : vector<2x1x1xf32> to vector<1x2x1x1xf32>
    %96 = vector.broadcast %95 : vector<1x2x1x1xf32> to vector<4x2x16x16xf32>
    %97 = arith.addf %94, %96 : vector<4x2x16x16xf32>
    %98 = vector.extract_strided_slice %0 {offsets = [0, 0, 0, 0], sizes = [4, 2, 16, 16], strides = [1, 1, 1, 1]} : vector<4x2x18x18xf32> to vector<4x2x16x16xf32>
    %99 = vector.extract_strided_slice %4 {offsets = [0, 0, 0, 0], sizes = [1, 2, 1, 1], strides = [1, 1, 1, 1]} : vector<18x2x1x1xf32> to vector<1x2x1x1xf32>
    %100 = vector.shape_cast %99 : vector<1x2x1x1xf32> to vector<2x1x1xf32>
    %101 = vector.shape_cast %100 : vector<2x1x1xf32> to vector<1x2x1x1xf32>
    %102 = vector.extract_strided_slice %98 {offsets = [0, 0, 0, 0], sizes = [4, 1, 16, 16], strides = [1, 1, 1, 1]} : vector<4x2x16x16xf32> to vector<4x1x16x16xf32>
    %103 = vector.broadcast %101 : vector<1x2x1x1xf32> to vector<4x2x16x16xf32>
    %104 = vector.broadcast %102 : vector<4x1x16x16xf32> to vector<4x2x16x16xf32>
    %105 = arith.mulf %103, %104 : vector<4x2x16x16xf32>
    %106 = vector.extract_strided_slice %4 {offsets = [1, 0, 0, 0], sizes = [1, 2, 1, 1], strides = [1, 1, 1, 1]} : vector<18x2x1x1xf32> to vector<1x2x1x1xf32>
    %107 = vector.shape_cast %106 : vector<1x2x1x1xf32> to vector<2x1x1xf32>
    %108 = vector.shape_cast %107 : vector<2x1x1xf32> to vector<1x2x1x1xf32>
    %109 = vector.extract_strided_slice %98 {offsets = [0, 1, 0, 0], sizes = [4, 1, 16, 16], strides = [1, 1, 1, 1]} : vector<4x2x16x16xf32> to vector<4x1x16x16xf32>
    %110 = vector.broadcast %108 : vector<1x2x1x1xf32> to vector<4x2x16x16xf32>
    %111 = vector.broadcast %109 : vector<4x1x16x16xf32> to vector<4x2x16x16xf32>
    %112 = arith.mulf %110, %111 : vector<4x2x16x16xf32>
    %113 = arith.addf %105, %112 : vector<4x2x16x16xf32>
    %114 = vector.extract_strided_slice %0 {offsets = [0, 0, 0, 1], sizes = [4, 2, 16, 16], strides = [1, 1, 1, 1]} : vector<4x2x18x18xf32> to vector<4x2x16x16xf32>
    %115 = vector.extract_strided_slice %4 {offsets = [2, 0, 0, 0], sizes = [1, 2, 1, 1], strides = [1, 1, 1, 1]} : vector<18x2x1x1xf32> to vector<1x2x1x1xf32>
    %116 = vector.shape_cast %115 : vector<1x2x1x1xf32> to vector<2x1x1xf32>
    %117 = vector.shape_cast %116 : vector<2x1x1xf32> to vector<1x2x1x1xf32>
    %118 = vector.extract_strided_slice %114 {offsets = [0, 0, 0, 0], sizes = [4, 1, 16, 16], strides = [1, 1, 1, 1]} : vector<4x2x16x16xf32> to vector<4x1x16x16xf32>
    %119 = vector.broadcast %117 : vector<1x2x1x1xf32> to vector<4x2x16x16xf32>
    %120 = vector.broadcast %118 : vector<4x1x16x16xf32> to vector<4x2x16x16xf32>
    %121 = arith.mulf %119, %120 : vector<4x2x16x16xf32>
    %122 = arith.addf %113, %121 : vector<4x2x16x16xf32>
    %123 = vector.extract_strided_slice %4 {offsets = [3, 0, 0, 0], sizes = [1, 2, 1, 1], strides = [1, 1, 1, 1]} : vector<18x2x1x1xf32> to vector<1x2x1x1xf32>
    %124 = vector.shape_cast %123 : vector<1x2x1x1xf32> to vector<2x1x1xf32>
    %125 = vector.shape_cast %124 : vector<2x1x1xf32> to vector<1x2x1x1xf32>
    %126 = vector.extract_strided_slice %114 {offsets = [0, 1, 0, 0], sizes = [4, 1, 16, 16], strides = [1, 1, 1, 1]} : vector<4x2x16x16xf32> to vector<4x1x16x16xf32>
    %127 = vector.broadcast %125 : vector<1x2x1x1xf32> to vector<4x2x16x16xf32>
    %128 = vector.broadcast %126 : vector<4x1x16x16xf32> to vector<4x2x16x16xf32>
    %129 = arith.mulf %127, %128 : vector<4x2x16x16xf32>
    %130 = arith.addf %122, %129 : vector<4x2x16x16xf32>
    %131 = vector.extract_strided_slice %0 {offsets = [0, 0, 0, 2], sizes = [4, 2, 16, 16], strides = [1, 1, 1, 1]} : vector<4x2x18x18xf32> to vector<4x2x16x16xf32>
    %132 = vector.extract_strided_slice %4 {offsets = [4, 0, 0, 0], sizes = [1, 2, 1, 1], strides = [1, 1, 1, 1]} : vector<18x2x1x1xf32> to vector<1x2x1x1xf32>
    %133 = vector.shape_cast %132 : vector<1x2x1x1xf32> to vector<2x1x1xf32>
    %134 = vector.shape_cast %133 : vector<2x1x1xf32> to vector<1x2x1x1xf32>
    %135 = vector.extract_strided_slice %131 {offsets = [0, 0, 0, 0], sizes = [4, 1, 16, 16], strides = [1, 1, 1, 1]} : vector<4x2x16x16xf32> to vector<4x1x16x16xf32>
    %136 = vector.broadcast %134 : vector<1x2x1x1xf32> to vector<4x2x16x16xf32>
    %137 = vector.broadcast %135 : vector<4x1x16x16xf32> to vector<4x2x16x16xf32>
    %138 = arith.mulf %136, %137 : vector<4x2x16x16xf32>
    %139 = arith.addf %130, %138 : vector<4x2x16x16xf32>
    %140 = vector.extract_strided_slice %4 {offsets = [5, 0, 0, 0], sizes = [1, 2, 1, 1], strides = [1, 1, 1, 1]} : vector<18x2x1x1xf32> to vector<1x2x1x1xf32>
    %141 = vector.shape_cast %140 : vector<1x2x1x1xf32> to vector<2x1x1xf32>
    %142 = vector.shape_cast %141 : vector<2x1x1xf32> to vector<1x2x1x1xf32>
    %143 = vector.extract_strided_slice %131 {offsets = [0, 1, 0, 0], sizes = [4, 1, 16, 16], strides = [1, 1, 1, 1]} : vector<4x2x16x16xf32> to vector<4x1x16x16xf32>
    %144 = vector.broadcast %142 : vector<1x2x1x1xf32> to vector<4x2x16x16xf32>
    %145 = vector.broadcast %143 : vector<4x1x16x16xf32> to vector<4x2x16x16xf32>
    %146 = arith.mulf %144, %145 : vector<4x2x16x16xf32>
    %147 = arith.addf %139, %146 : vector<4x2x16x16xf32>
    %148 = vector.extract_strided_slice %0 {offsets = [0, 0, 1, 0], sizes = [4, 2, 16, 16], strides = [1, 1, 1, 1]} : vector<4x2x18x18xf32> to vector<4x2x16x16xf32>
    %149 = vector.extract_strided_slice %4 {offsets = [6, 0, 0, 0], sizes = [1, 2, 1, 1], strides = [1, 1, 1, 1]} : vector<18x2x1x1xf32> to vector<1x2x1x1xf32>
    %150 = vector.shape_cast %149 : vector<1x2x1x1xf32> to vector<2x1x1xf32>
    %151 = vector.shape_cast %150 : vector<2x1x1xf32> to vector<1x2x1x1xf32>
    %152 = vector.extract_strided_slice %148 {offsets = [0, 0, 0, 0], sizes = [4, 1, 16, 16], strides = [1, 1, 1, 1]} : vector<4x2x16x16xf32> to vector<4x1x16x16xf32>
    %153 = vector.broadcast %151 : vector<1x2x1x1xf32> to vector<4x2x16x16xf32>
    %154 = vector.broadcast %152 : vector<4x1x16x16xf32> to vector<4x2x16x16xf32>
    %155 = arith.mulf %153, %154 : vector<4x2x16x16xf32>
    %156 = arith.addf %147, %155 : vector<4x2x16x16xf32>
    %157 = vector.extract_strided_slice %4 {offsets = [7, 0, 0, 0], sizes = [1, 2, 1, 1], strides = [1, 1, 1, 1]} : vector<18x2x1x1xf32> to vector<1x2x1x1xf32>
    %158 = vector.shape_cast %157 : vector<1x2x1x1xf32> to vector<2x1x1xf32>
    %159 = vector.shape_cast %158 : vector<2x1x1xf32> to vector<1x2x1x1xf32>
    %160 = vector.extract_strided_slice %148 {offsets = [0, 1, 0, 0], sizes = [4, 1, 16, 16], strides = [1, 1, 1, 1]} : vector<4x2x16x16xf32> to vector<4x1x16x16xf32>
    %161 = vector.broadcast %159 : vector<1x2x1x1xf32> to vector<4x2x16x16xf32>
    %162 = vector.broadcast %160 : vector<4x1x16x16xf32> to vector<4x2x16x16xf32>
    %163 = arith.mulf %161, %162 : vector<4x2x16x16xf32>
    %164 = arith.addf %156, %163 : vector<4x2x16x16xf32>
    %165 = vector.extract_strided_slice %0 {offsets = [0, 0, 1, 1], sizes = [4, 2, 16, 16], strides = [1, 1, 1, 1]} : vector<4x2x18x18xf32> to vector<4x2x16x16xf32>
    %166 = vector.extract_strided_slice %4 {offsets = [8, 0, 0, 0], sizes = [1, 2, 1, 1], strides = [1, 1, 1, 1]} : vector<18x2x1x1xf32> to vector<1x2x1x1xf32>
    %167 = vector.shape_cast %166 : vector<1x2x1x1xf32> to vector<2x1x1xf32>
    %168 = vector.shape_cast %167 : vector<2x1x1xf32> to vector<1x2x1x1xf32>
    %169 = vector.extract_strided_slice %165 {offsets = [0, 0, 0, 0], sizes = [4, 1, 16, 16], strides = [1, 1, 1, 1]} : vector<4x2x16x16xf32> to vector<4x1x16x16xf32>
    %170 = vector.broadcast %168 : vector<1x2x1x1xf32> to vector<4x2x16x16xf32>
    %171 = vector.broadcast %169 : vector<4x1x16x16xf32> to vector<4x2x16x16xf32>
    %172 = arith.mulf %170, %171 : vector<4x2x16x16xf32>
    %173 = arith.addf %164, %172 : vector<4x2x16x16xf32>
    %174 = vector.extract_strided_slice %4 {offsets = [9, 0, 0, 0], sizes = [1, 2, 1, 1], strides = [1, 1, 1, 1]} : vector<18x2x1x1xf32> to vector<1x2x1x1xf32>
    %175 = vector.shape_cast %174 : vector<1x2x1x1xf32> to vector<2x1x1xf32>
    %176 = vector.shape_cast %175 : vector<2x1x1xf32> to vector<1x2x1x1xf32>
    %177 = vector.extract_strided_slice %165 {offsets = [0, 1, 0, 0], sizes = [4, 1, 16, 16], strides = [1, 1, 1, 1]} : vector<4x2x16x16xf32> to vector<4x1x16x16xf32>
    %178 = vector.broadcast %176 : vector<1x2x1x1xf32> to vector<4x2x16x16xf32>
    %179 = vector.broadcast %177 : vector<4x1x16x16xf32> to vector<4x2x16x16xf32>
    %180 = arith.mulf %178, %179 : vector<4x2x16x16xf32>
    %181 = arith.addf %173, %180 : vector<4x2x16x16xf32>
    %182 = vector.extract_strided_slice %0 {offsets = [0, 0, 1, 2], sizes = [4, 2, 16, 16], strides = [1, 1, 1, 1]} : vector<4x2x18x18xf32> to vector<4x2x16x16xf32>
    %183 = vector.extract_strided_slice %4 {offsets = [10, 0, 0, 0], sizes = [1, 2, 1, 1], strides = [1, 1, 1, 1]} : vector<18x2x1x1xf32> to vector<1x2x1x1xf32>
    %184 = vector.shape_cast %183 : vector<1x2x1x1xf32> to vector<2x1x1xf32>
    %185 = vector.shape_cast %184 : vector<2x1x1xf32> to vector<1x2x1x1xf32>
    %186 = vector.extract_strided_slice %182 {offsets = [0, 0, 0, 0], sizes = [4, 1, 16, 16], strides = [1, 1, 1, 1]} : vector<4x2x16x16xf32> to vector<4x1x16x16xf32>
    %187 = vector.broadcast %185 : vector<1x2x1x1xf32> to vector<4x2x16x16xf32>
    %188 = vector.broadcast %186 : vector<4x1x16x16xf32> to vector<4x2x16x16xf32>
    %189 = arith.mulf %187, %188 : vector<4x2x16x16xf32>
    %190 = arith.addf %181, %189 : vector<4x2x16x16xf32>
    %191 = vector.extract_strided_slice %4 {offsets = [11, 0, 0, 0], sizes = [1, 2, 1, 1], strides = [1, 1, 1, 1]} : vector<18x2x1x1xf32> to vector<1x2x1x1xf32>
    %192 = vector.shape_cast %191 : vector<1x2x1x1xf32> to vector<2x1x1xf32>
    %193 = vector.shape_cast %192 : vector<2x1x1xf32> to vector<1x2x1x1xf32>
    %194 = vector.extract_strided_slice %182 {offsets = [0, 1, 0, 0], sizes = [4, 1, 16, 16], strides = [1, 1, 1, 1]} : vector<4x2x16x16xf32> to vector<4x1x16x16xf32>
    %195 = vector.broadcast %193 : vector<1x2x1x1xf32> to vector<4x2x16x16xf32>
    %196 = vector.broadcast %194 : vector<4x1x16x16xf32> to vector<4x2x16x16xf32>
    %197 = arith.mulf %195, %196 : vector<4x2x16x16xf32>
    %198 = arith.addf %190, %197 : vector<4x2x16x16xf32>
    %199 = vector.extract_strided_slice %0 {offsets = [0, 0, 2, 0], sizes = [4, 2, 16, 16], strides = [1, 1, 1, 1]} : vector<4x2x18x18xf32> to vector<4x2x16x16xf32>
    %200 = vector.extract_strided_slice %4 {offsets = [12, 0, 0, 0], sizes = [1, 2, 1, 1], strides = [1, 1, 1, 1]} : vector<18x2x1x1xf32> to vector<1x2x1x1xf32>
    %201 = vector.shape_cast %200 : vector<1x2x1x1xf32> to vector<2x1x1xf32>
    %202 = vector.shape_cast %201 : vector<2x1x1xf32> to vector<1x2x1x1xf32>
    %203 = vector.extract_strided_slice %199 {offsets = [0, 0, 0, 0], sizes = [4, 1, 16, 16], strides = [1, 1, 1, 1]} : vector<4x2x16x16xf32> to vector<4x1x16x16xf32>
    %204 = vector.broadcast %202 : vector<1x2x1x1xf32> to vector<4x2x16x16xf32>
    %205 = vector.broadcast %203 : vector<4x1x16x16xf32> to vector<4x2x16x16xf32>
    %206 = arith.mulf %204, %205 : vector<4x2x16x16xf32>
    %207 = arith.addf %198, %206 : vector<4x2x16x16xf32>
    %208 = vector.extract_strided_slice %4 {offsets = [13, 0, 0, 0], sizes = [1, 2, 1, 1], strides = [1, 1, 1, 1]} : vector<18x2x1x1xf32> to vector<1x2x1x1xf32>
    %209 = vector.shape_cast %208 : vector<1x2x1x1xf32> to vector<2x1x1xf32>
    %210 = vector.shape_cast %209 : vector<2x1x1xf32> to vector<1x2x1x1xf32>
    %211 = vector.extract_strided_slice %199 {offsets = [0, 1, 0, 0], sizes = [4, 1, 16, 16], strides = [1, 1, 1, 1]} : vector<4x2x16x16xf32> to vector<4x1x16x16xf32>
    %212 = vector.broadcast %210 : vector<1x2x1x1xf32> to vector<4x2x16x16xf32>
    %213 = vector.broadcast %211 : vector<4x1x16x16xf32> to vector<4x2x16x16xf32>
    %214 = arith.mulf %212, %213 : vector<4x2x16x16xf32>
    %215 = arith.addf %207, %214 : vector<4x2x16x16xf32>
    %216 = vector.extract_strided_slice %0 {offsets = [0, 0, 2, 1], sizes = [4, 2, 16, 16], strides = [1, 1, 1, 1]} : vector<4x2x18x18xf32> to vector<4x2x16x16xf32>
    %217 = vector.extract_strided_slice %4 {offsets = [14, 0, 0, 0], sizes = [1, 2, 1, 1], strides = [1, 1, 1, 1]} : vector<18x2x1x1xf32> to vector<1x2x1x1xf32>
    %218 = vector.shape_cast %217 : vector<1x2x1x1xf32> to vector<2x1x1xf32>
    %219 = vector.shape_cast %218 : vector<2x1x1xf32> to vector<1x2x1x1xf32>
    %220 = vector.extract_strided_slice %216 {offsets = [0, 0, 0, 0], sizes = [4, 1, 16, 16], strides = [1, 1, 1, 1]} : vector<4x2x16x16xf32> to vector<4x1x16x16xf32>
    %221 = vector.broadcast %219 : vector<1x2x1x1xf32> to vector<4x2x16x16xf32>
    %222 = vector.broadcast %220 : vector<4x1x16x16xf32> to vector<4x2x16x16xf32>
    %223 = arith.mulf %221, %222 : vector<4x2x16x16xf32>
    %224 = arith.addf %215, %223 : vector<4x2x16x16xf32>
    %225 = vector.extract_strided_slice %4 {offsets = [15, 0, 0, 0], sizes = [1, 2, 1, 1], strides = [1, 1, 1, 1]} : vector<18x2x1x1xf32> to vector<1x2x1x1xf32>
    %226 = vector.shape_cast %225 : vector<1x2x1x1xf32> to vector<2x1x1xf32>
    %227 = vector.shape_cast %226 : vector<2x1x1xf32> to vector<1x2x1x1xf32>
    %228 = vector.extract_strided_slice %216 {offsets = [0, 1, 0, 0], sizes = [4, 1, 16, 16], strides = [1, 1, 1, 1]} : vector<4x2x16x16xf32> to vector<4x1x16x16xf32>
    %229 = vector.broadcast %227 : vector<1x2x1x1xf32> to vector<4x2x16x16xf32>
    %230 = vector.broadcast %228 : vector<4x1x16x16xf32> to vector<4x2x16x16xf32>
    %231 = arith.mulf %229, %230 : vector<4x2x16x16xf32>
    %232 = arith.addf %224, %231 : vector<4x2x16x16xf32>
    %233 = vector.extract_strided_slice %0 {offsets = [0, 0, 2, 2], sizes = [4, 2, 16, 16], strides = [1, 1, 1, 1]} : vector<4x2x18x18xf32> to vector<4x2x16x16xf32>
    %234 = vector.extract_strided_slice %4 {offsets = [16, 0, 0, 0], sizes = [1, 2, 1, 1], strides = [1, 1, 1, 1]} : vector<18x2x1x1xf32> to vector<1x2x1x1xf32>
    %235 = vector.shape_cast %234 : vector<1x2x1x1xf32> to vector<2x1x1xf32>
    %236 = vector.shape_cast %235 : vector<2x1x1xf32> to vector<1x2x1x1xf32>
    %237 = vector.extract_strided_slice %233 {offsets = [0, 0, 0, 0], sizes = [4, 1, 16, 16], strides = [1, 1, 1, 1]} : vector<4x2x16x16xf32> to vector<4x1x16x16xf32>
    %238 = vector.broadcast %236 : vector<1x2x1x1xf32> to vector<4x2x16x16xf32>
    %239 = vector.broadcast %237 : vector<4x1x16x16xf32> to vector<4x2x16x16xf32>
    %240 = arith.mulf %238, %239 : vector<4x2x16x16xf32>
    %241 = arith.addf %232, %240 : vector<4x2x16x16xf32>
    %242 = vector.extract_strided_slice %4 {offsets = [17, 0, 0, 0], sizes = [1, 2, 1, 1], strides = [1, 1, 1, 1]} : vector<18x2x1x1xf32> to vector<1x2x1x1xf32>
    %243 = vector.shape_cast %242 : vector<1x2x1x1xf32> to vector<2x1x1xf32>
    %244 = vector.shape_cast %243 : vector<2x1x1xf32> to vector<1x2x1x1xf32>
    %245 = vector.extract_strided_slice %233 {offsets = [0, 1, 0, 0], sizes = [4, 1, 16, 16], strides = [1, 1, 1, 1]} : vector<4x2x16x16xf32> to vector<4x1x16x16xf32>
    %246 = vector.broadcast %244 : vector<1x2x1x1xf32> to vector<4x2x16x16xf32>
    %247 = vector.broadcast %245 : vector<4x1x16x16xf32> to vector<4x2x16x16xf32>
    %248 = arith.mulf %246, %247 : vector<4x2x16x16xf32>
    %249 = arith.addf %241, %248 : vector<4x2x16x16xf32>
    %250 = vector.shape_cast %5 : vector<2x1x1xf32> to vector<1x2x1x1xf32>
    %251 = vector.broadcast %250 : vector<1x2x1x1xf32> to vector<4x2x16x16xf32>
    %252 = arith.addf %249, %251 : vector<4x2x16x16xf32>
    %cst_37 = arith.constant dense<0.000000e+00> : vector<4x2x16xf32>
    %253 = vector.multi_reduction <add>, %97, %cst_37 [3] : vector<4x2x16x16xf32> to vector<4x2x16xf32>
    %254 = vector.shape_cast %253 : vector<4x2x16xf32> to vector<4x2x16x1xf32>
    %cst_38 = arith.constant 1.600000e+01 : f32
    %255 = vector.broadcast %cst_38 : f32 to vector<4x2x16x1xf32>
    %256 = arith.divf %254, %255 : vector<4x2x16x1xf32>
    %cst_39 = arith.constant dense<0.000000e+00> : vector<4x2x1xf32>
    %257 = vector.multi_reduction <add>, %256, %cst_39 [2] : vector<4x2x16x1xf32> to vector<4x2x1xf32>
    %258 = vector.shape_cast %257 : vector<4x2x1xf32> to vector<4x2x1x1xf32>
    %cst_40 = arith.constant 1.600000e+01 : f32
    %259 = vector.broadcast %cst_40 : f32 to vector<4x2x1x1xf32>
    %260 = arith.divf %258, %259 : vector<4x2x1x1xf32>
    %cst_41 = arith.constant dense<0.000000e+00> : vector<4x2x16xf32>
    %261 = vector.multi_reduction <add>, %252, %cst_41 [3] : vector<4x2x16x16xf32> to vector<4x2x16xf32>
    %262 = vector.shape_cast %261 : vector<4x2x16xf32> to vector<4x2x16x1xf32>
    %cst_42 = arith.constant 1.600000e+01 : f32
    %263 = vector.broadcast %cst_42 : f32 to vector<4x2x16x1xf32>
    %264 = arith.divf %262, %263 : vector<4x2x16x1xf32>
    %cst_43 = arith.constant dense<0.000000e+00> : vector<4x2x1xf32>
    %265 = vector.multi_reduction <add>, %264, %cst_43 [2] : vector<4x2x16x1xf32> to vector<4x2x1xf32>
    %266 = vector.shape_cast %265 : vector<4x2x1xf32> to vector<4x2x1x1xf32>
    %cst_44 = arith.constant 1.600000e+01 : f32
    %267 = vector.broadcast %cst_44 : f32 to vector<4x2x1x1xf32>
    %268 = arith.divf %266, %267 : vector<4x2x1x1xf32>
    %269 = vector.extract_strided_slice %260 {offsets = [0, 0, 0, 0], sizes = [4, 1, 1, 1], strides = [1, 1, 1, 1]} : vector<4x2x1x1xf32> to vector<4x1x1x1xf32>
    %270 = vector.extract_strided_slice %260 {offsets = [0, 1, 0, 0], sizes = [4, 1, 1, 1], strides = [1, 1, 1, 1]} : vector<4x2x1x1xf32> to vector<4x1x1x1xf32>
    %271 = arith.maximumf %269, %270 : vector<4x1x1x1xf32>
    %272 = arith.subf %269, %271 : vector<4x1x1x1xf32>
    %273 = math.exp %272 : vector<4x1x1x1xf32>
    %274 = arith.subf %270, %271 : vector<4x1x1x1xf32>
    %275 = math.exp %274 : vector<4x1x1x1xf32>
    %276 = arith.addf %273, %275 : vector<4x1x1x1xf32>
    %277 = arith.divf %273, %276 : vector<4x1x1x1xf32>
    %278 = arith.divf %275, %276 : vector<4x1x1x1xf32>
    %279 = vector.extract_strided_slice %268 {offsets = [0, 0, 0, 0], sizes = [4, 1, 1, 1], strides = [1, 1, 1, 1]} : vector<4x2x1x1xf32> to vector<4x1x1x1xf32>
    %280 = vector.extract_strided_slice %268 {offsets = [0, 1, 0, 0], sizes = [4, 1, 1, 1], strides = [1, 1, 1, 1]} : vector<4x2x1x1xf32> to vector<4x1x1x1xf32>
    %281 = arith.maximumf %279, %280 : vector<4x1x1x1xf32>
    %282 = arith.subf %279, %281 : vector<4x1x1x1xf32>
    %283 = math.exp %282 : vector<4x1x1x1xf32>
    %284 = arith.subf %280, %281 : vector<4x1x1x1xf32>
    %285 = math.exp %284 : vector<4x1x1x1xf32>
    %286 = arith.addf %283, %285 : vector<4x1x1x1xf32>
    %287 = arith.divf %283, %286 : vector<4x1x1x1xf32>
    %288 = arith.divf %285, %286 : vector<4x1x1x1xf32>
    %289 = vector.extract_strided_slice %252 {offsets = [0, 0, 0, 0], sizes = [4, 1, 16, 16], strides = [1, 1, 1, 1]} : vector<4x2x16x16xf32> to vector<4x1x16x16xf32>
    %290 = vector.broadcast %277 : vector<4x1x1x1xf32> to vector<4x1x16x16xf32>
    %291 = arith.mulf %290, %289 : vector<4x1x16x16xf32>
    %292 = vector.extract_strided_slice %97 {offsets = [0, 0, 0, 0], sizes = [4, 1, 16, 16], strides = [1, 1, 1, 1]} : vector<4x2x16x16xf32> to vector<4x1x16x16xf32>
    %293 = vector.broadcast %287 : vector<4x1x1x1xf32> to vector<4x1x16x16xf32>
    %294 = arith.mulf %293, %292 : vector<4x1x16x16xf32>
    %295 = arith.addf %291, %294 : vector<4x1x16x16xf32>
    %296 = vector.extract_strided_slice %252 {offsets = [0, 1, 0, 0], sizes = [4, 1, 16, 16], strides = [1, 1, 1, 1]} : vector<4x2x16x16xf32> to vector<4x1x16x16xf32>
    %297 = vector.broadcast %278 : vector<4x1x1x1xf32> to vector<4x1x16x16xf32>
    %298 = arith.mulf %297, %296 : vector<4x1x16x16xf32>
    %299 = vector.extract_strided_slice %97 {offsets = [0, 1, 0, 0], sizes = [4, 1, 16, 16], strides = [1, 1, 1, 1]} : vector<4x2x16x16xf32> to vector<4x1x16x16xf32>
    %300 = vector.broadcast %288 : vector<4x1x1x1xf32> to vector<4x1x16x16xf32>
    %301 = arith.mulf %300, %299 : vector<4x1x16x16xf32>
    %302 = arith.addf %298, %301 : vector<4x1x16x16xf32>
    %303 = arith.addf %295, %302 : vector<4x1x16x16xf32>
    %304 = arith.negf %303 : vector<4x1x16x16xf32>
    %305 = math.exp %304 : vector<4x1x16x16xf32>
    %cst_45 = arith.constant 1.000000e+00 : f32
    %306 = vector.broadcast %cst_45 : f32 to vector<4x1x16x16xf32>
    %307 = arith.addf %306, %305 : vector<4x1x16x16xf32>
    %308 = arith.divf %306, %307 : vector<4x1x16x16xf32>
    %309 = vector.broadcast %308 : vector<4x1x16x16xf32> to vector<4x2x16x16xf32>
    %310 = arith.mulf %1, %309 : vector<4x2x16x16xf32>
    %c0_46 = arith.constant 0 : index
    %c0_47 = arith.constant 0 : index
    %c0_48 = arith.constant 0 : index
    %c0_49 = arith.constant 0 : index
    %311 = vector.load %arg8[%c0_46, %c0_47, %c0_48, %c0_49] : memref<4x2x16x16xf32, #tpu.memory_space<vmem>>, vector<4x2x16x16xf32>
    tpu.vector_store %arg8[%c0_46, %c0_47, %c0_48, %c0_49], %310 {strides = array<i32>} : memref<4x2x16x16xf32, #tpu.memory_space<vmem>>, vector<4x2x16x16xf32>,
    return
  }
  func.func @transform_0(%arg0: i32) -> (i32, i32, i32, i32) {
    %c0_i32 = arith.constant 0 : i32
    %c0_i32_0 = arith.constant 0 : i32
    %c0_i32_1 = arith.constant 0 : i32
    %c0_i32_2 = arith.constant 0 : i32
    return %arg0, %c0_i32, %c0_i32_0, %c0_i32_1 : i32, i32, i32, i32
  }
  func.func @transform_1(%arg0: i32) -> (i32, i32, i32, i32) {
    %c0_i32 = arith.constant 0 : i32
    %c0_i32_0 = arith.constant 0 : i32
    %c0_i32_1 = arith.constant 0 : i32
    %c0_i32_2 = arith.constant 0 : i32
    %c0_i32_3 = arith.constant 0 : i32
    return %c0_i32, %c0_i32_0, %c0_i32_1, %c0_i32_2 : i32, i32, i32, i32
  }
  func.func @transform_2(%arg0: i32) -> (i32, i32, i32) {
    %c0_i32 = arith.constant 0 : i32
    %c0_i32_0 = arith.constant 0 : i32
    %c0_i32_1 = arith.constant 0 : i32
    %c0_i32_2 = arith.constant 0 : i32
    return %c0_i32, %c0_i32_0, %c0_i32_1 : i32, i32, i32
  }
  func.func @transform_3(%arg0: i32) -> (i32, i32, i32, i32) {
    %c0_i32 = arith.constant 0 : i32
    %c0_i32_0 = arith.constant 0 : i32
    %c0_i32_1 = arith.constant 0 : i32
    %c0_i32_2 = arith.constant 0 : i32
    %c0_i32_3 = arith.constant 0 : i32
    return %c0_i32, %c0_i32_0, %c0_i32_1, %c0_i32_2 : i32, i32, i32, i32
  }
  func.func @transform_4(%arg0: i32) -> (i32, i32, i32) {
    %c0_i32 = arith.constant 0 : i32
    %c0_i32_0 = arith.constant 0 : i32
    %c0_i32_1 = arith.constant 0 : i32
    %c0_i32_2 = arith.constant 0 : i32
    return %c0_i32, %c0_i32_0, %c0_i32_1 : i32, i32, i32
  }
  func.func @transform_5(%arg0: i32) -> (i32, i32, i32) {
    %c0_i32 = arith.constant 0 : i32
    %c0_i32_0 = arith.constant 0 : i32
    %c0_i32_1 = arith.constant 0 : i32
    %c0_i32_2 = arith.constant 0 : i32
    return %c0_i32, %c0_i32_0, %c0_i32_1 : i32, i32, i32
  }
  func.func @transform_6(%arg0: i32) -> (i32, i32, i32) {
    %c0_i32 = arith.constant 0 : i32
    %c0_i32_0 = arith.constant 0 : i32
    %c0_i32_1 = arith.constant 0 : i32
    %c0_i32_2 = arith.constant 0 : i32
    return %c0_i32, %c0_i32_0, %c0_i32_1 : i32, i32, i32
  }
  func.func @transform_7(%arg0: i32) -> (i32, i32, i32, i32) {
    %c0_i32 = arith.constant 0 : i32
    %c0_i32_0 = arith.constant 0 : i32
    %c0_i32_1 = arith.constant 0 : i32
    %c0_i32_2 = arith.constant 0 : i32
    return %arg0, %c0_i32, %c0_i32_0, %c0_i32_1 : i32, i32, i32, i32
  }
}

</mosaic_0001>

<llo_original>
// kernel: tpu_custom_call.1
$region0: #{tpu_custom_call.1}
  #allocation0 [shape = 'u32[]', space=smem, size = 0x4, offset = 0x4, fixed_abs, tag = 'smem constant byte address 0x4 - core index']
  #allocation1 [shape = 'u32[144,128]{1,0:T(1,128)}', space=vmem, size = 0x12000, scoped, tag = 'internal scratch']
  %s0 = inlined_call_operand.vmem [shape: f32[8,2,18,18], index: 0, kind: input, shape index: {}]
  %s1 = inlined_call_operand.vmem [shape: f32[2,2,1,1], index: 1, kind: input, shape index: {}]
  %s2 = inlined_call_operand.vmem [shape: f32[2,1,1], index: 2, kind: input, shape index: {}]
  %s3 = inlined_call_operand.vmem [shape: f32[18,2,1,1], index: 3, kind: input, shape index: {}]
  %s4 = inlined_call_operand.vmem [shape: f32[2,1,1], index: 4, kind: input, shape index: {}]
  %s5 = inlined_call_operand.vmem [shape: f32[2,1,1], index: 5, kind: input, shape index: {}]
  %s6 = inlined_call_operand.vmem [shape: f32[2,1,1], index: 6, kind: input, shape index: {}]
  %s7 = inlined_call_operand.hbm [shape: f32[8,2,16,16], index: 7, kind: output, shape index: {}]
  %s8 = sld [smem:[#allocation0]]
  $region61: #{tpu_custom_call.1} parent=0
    _
  %s10 = ssub.s32 1, %s8
  %s11 = scalar_select 0, %s10, %s8
  $region1: #{tpu_custom_call.1} parent=0
    #allocation2 [shape = 'u8[131072]{0}', space=vmem, size = 0x20000, scoped, tag = 'output window, operand 0']
    #allocation3 [shape = 's32[2]{0}', space=sflag, size = 0x8, scoped, tag = 'scoped memory for tpu_custom_call.1']
    %12 = vsyncpa [#allocation3], 0
    %s13 = scalar_lea.sflag [#allocation3], 1
    %14 = vsyncpa %s13, 0
    loop: start=0, step=1, limit=4
    $region2: #{tpu_custom_call.1} parent=1 // loop_pre_header
      _
    $region3: #{tpu_custom_call.1} parent=1 // loop_header
      %s16 = sphi 0, %s20
      %p17 = scmp.ge.s32.totalorder %s16, 4
      %s26 = sphi 0, %s28
      %s29 = sphi 0, %s26
      %s30 = sphi 0, %s29
      %s46 = sphi 0, %s30
      %s50 = sphi 0, %s50
      %s52 = sphi 0, %s50
      %s53 = sphi 0, %s52
      %s67 = sphi 0, %s53
      %s71 = sphi 0, %s71
      %s73 = sphi 0, %s71
      %s74 = sphi 0, %s73
      %s88 = sphi 0, %s74
      %s92 = sphi 0, %s92
      %s94 = sphi 0, %s92
      %s95 = sphi 0, %s94
      %s109 = sphi 0, %s95
      %s113 = sphi 0, %s113
      %s115 = sphi 0, %s113
      %s116 = sphi 0, %s115
      %s130 = sphi 0, %s116
      %s134 = sphi 0, %s134
      %s136 = sphi 0, %s134
      %s137 = sphi 0, %s136
      %s151 = sphi 0, %s137
      %s155 = sphi 0, %s155
      %s157 = sphi 0, %s155
      %s158 = sphi 0, %s157
      %s172 = sphi 0, %s158
      %s178 = sphi 0, %s180
      %s181 = sphi 0, %s178
      %s182 = sphi 0, %s181
      %s198 = sphi 0, %s182
    $region4: #{tpu_custom_call.1} parent=1 // loop_header_branch
      %19 = sbr.rel (%p17) target = $region8
    $region5: #{tpu_custom_call.1} parent=1 // loop_body
      %s21 = ssub.s32 %s16, 1
      %s22 = ssub.s32 %s16, 2
      %s23 = sadd.s32 %s16, 1
      %s24 = ssub.s32 %s16, %s23
      %p25 = scmp.eq.s32.totalorder %s24, 0
      %s27 = sadd.s32 %s26, 1
      %s28 = scalar_select %p25, %s26, %s27
      %p31 = pneg %p25
      %p32 = scmp.eq.s32.totalorder %s16, 1
      %p33 = por %p31, %p32
      %p34 = scmp.ne.s32.totalorder %s26, %s29
      %p35 = scmp.eq.s32.totalorder %s16, 0
      %p36 = por %p34, %p35
      %p37 = scmp.ne.s32.totalorder %s26, %s29
      %p38 = scmp.eq.s32.totalorder %s21, 1
      %p39 = por %p37, %p38
      %p40 = scmp.ne.s32.totalorder %s29, %s30
      %p41 = scmp.eq.s32.totalorder %s21, 0
      %p42 = por %p40, %p41
      %p43 = scmp.ne.s32.totalorder %s29, %s30
      %p44 = scmp.eq.s32.totalorder %s22, 1
      %p45 = por %p43, %p44
      %p47 = scmp.ne.s32.totalorder %s30, %s46
      %p48 = scmp.eq.s32.totalorder %s22, 0
      %p49 = por %p47, %p48
      %s51 = sadd.s32 %s50, 1
      %p54 = scmp.eq.s32.totalorder %s16, 1
      %p55 = scmp.ne.s32.totalorder %s50, %s52
      %p56 = scmp.eq.s32.totalorder %s16, 0
      %p57 = por %p55, %p56
      %p58 = scmp.ne.s32.totalorder %s50, %s52
      %p59 = scmp.eq.s32.totalorder %s21, 1
      %p60 = por %p58, %p59
      %p61 = scmp.ne.s32.totalorder %s52, %s53
      %p62 = scmp.eq.s32.totalorder %s21, 0
      %p63 = por %p61, %p62
      %p64 = scmp.ne.s32.totalorder %s52, %s53
      %p65 = scmp.eq.s32.totalorder %s22, 1
      %p66 = por %p64, %p65
      %p68 = scmp.ne.s32.totalorder %s53, %s67
      %p69 = scmp.eq.s32.totalorder %s22, 0
      %p70 = por %p68, %p69
      %s72 = sadd.s32 %s71, 1
      %p75 = scmp.eq.s32.totalorder %s16, 1
      %p76 = scmp.ne.s32.totalorder %s71, %s73
      %p77 = scmp.eq.s32.totalorder %s16, 0
      %p78 = por %p76, %p77
      %p79 = scmp.ne.s32.totalorder %s71, %s73
      %p80 = scmp.eq.s32.totalorder %s21, 1
      %p81 = por %p79, %p80
      %p82 = scmp.ne.s32.totalorder %s73, %s74
      %p83 = scmp.eq.s32.totalorder %s21, 0
      %p84 = por %p82, %p83
      %p85 = scmp.ne.s32.totalorder %s73, %s74
      %p86 = scmp.eq.s32.totalorder %s22, 1
      %p87 = por %p85, %p86
      %p89 = scmp.ne.s32.totalorder %s74, %s88
      %p90 = scmp.eq.s32.totalorder %s22, 0
      %p91 = por %p89, %p90
      %s93 = sadd.s32 %s92, 1
      %p96 = scmp.eq.s32.totalorder %s16, 1
      %p97 = scmp.ne.s32.totalorder %s92, %s94
      %p98 = scmp.eq.s32.totalorder %s16, 0
      %p99 = por %p97, %p98
      %p100 = scmp.ne.s32.totalorder %s92, %s94
      %p101 = scmp.eq.s32.totalorder %s21, 1
      %p102 = por %p100, %p101
      %p103 = scmp.ne.s32.totalorder %s94, %s95
      %p104 = scmp.eq.s32.totalorder %s21, 0
      %p105 = por %p103, %p104
      %p106 = scmp.ne.s32.totalorder %s94, %s95
      %p107 = scmp.eq.s32.totalorder %s22, 1
      %p108 = por %p106, %p107
      %p110 = scmp.ne.s32.totalorder %s95, %s109
      %p111 = scmp.eq.s32.totalorder %s22, 0
      %p112 = por %p110, %p111
      %s114 = sadd.s32 %s113, 1
      %p117 = scmp.eq.s32.totalorder %s16, 1
      %p118 = scmp.ne.s32.totalorder %s113, %s115
      %p119 = scmp.eq.s32.totalorder %s16, 0
      %p120 = por %p118, %p119
      %p121 = scmp.ne.s32.totalorder %s113, %s115
      %p122 = scmp.eq.s32.totalorder %s21, 1
      %p123 = por %p121, %p122
      %p124 = scmp.ne.s32.totalorder %s115, %s116
      %p125 = scmp.eq.s32.totalorder %s21, 0
      %p126 = por %p124, %p125
      %p127 = scmp.ne.s32.totalorder %s115, %s116
      %p128 = scmp.eq.s32.totalorder %s22, 1
      %p129 = por %p127, %p128
      %p131 = scmp.ne.s32.totalorder %s116, %s130
      %p132 = scmp.eq.s32.totalorder %s22, 0
      %p133 = por %p131, %p132
      %s135 = sadd.s32 %s134, 1
      %p138 = scmp.eq.s32.totalorder %s16, 1
      %p139 = scmp.ne.s32.totalorder %s134, %s136
      %p140 = scmp.eq.s32.totalorder %s16, 0
      %p141 = por %p139, %p140
      %p142 = scmp.ne.s32.totalorder %s134, %s136
      %p143 = scmp.eq.s32.totalorder %s21, 1
      %p144 = por %p142, %p143
      %p145 = scmp.ne.s32.totalorder %s136, %s137
      %p146 = scmp.eq.s32.totalorder %s21, 0
      %p147 = por %p145, %p146
      %p148 = scmp.ne.s32.totalorder %s136, %s137
      %p149 = scmp.eq.s32.totalorder %s22, 1
      %p150 = por %p148, %p149
      %p152 = scmp.ne.s32.totalorder %s137, %s151
      %p153 = scmp.eq.s32.totalorder %s22, 0
      %p154 = por %p152, %p153
      %s156 = sadd.s32 %s155, 1
      %p159 = scmp.eq.s32.totalorder %s16, 1
      %p160 = scmp.ne.s32.totalorder %s155, %s157
      %p161 = scmp.eq.s32.totalorder %s16, 0
      %p162 = por %p160, %p161
      %p163 = scmp.ne.s32.totalorder %s155, %s157
      %p164 = scmp.eq.s32.totalorder %s21, 1
      %p165 = por %p163, %p164
      %p166 = scmp.ne.s32.totalorder %s157, %s158
      %p167 = scmp.eq.s32.totalorder %s21, 0
      %p168 = por %p166, %p167
      %p169 = scmp.ne.s32.totalorder %s157, %s158
      %p170 = scmp.eq.s32.totalorder %s22, 1
      %p171 = por %p169, %p170
      %p173 = scmp.ne.s32.totalorder %s158, %s172
      %p174 = scmp.eq.s32.totalorder %s22, 0
      %p175 = por %p173, %p174
      %s176 = ssub.s32 %s16, %s23
      %p177 = scmp.eq.s32.totalorder %s176, 0
      %s179 = sadd.s32 %s178, 1
      %s180 = scalar_select %p177, %s178, %s179
      %p183 = pneg %p177
      %p184 = scmp.eq.s32.totalorder %s16, 1
      %p185 = por %p183, %p184
      %p186 = scmp.ne.s32.totalorder %s178, %s181
      %p187 = scmp.eq.s32.totalorder %s16, 0
      %p188 = por %p186, %p187
      %p189 = scmp.ne.s32.totalorder %s178, %s181
      %p190 = scmp.eq.s32.totalorder %s21, 1
      %p191 = por %p189, %p190
      %p192 = scmp.ne.s32.totalorder %s181, %s182
      %p193 = scmp.eq.s32.totalorder %s21, 0
      %p194 = por %p192, %p193
      %p195 = scmp.ne.s32.totalorder %s181, %s182
      %p196 = scmp.eq.s32.totalorder %s22, 1
      %p197 = por %p195, %p196
      %p199 = scmp.ne.s32.totalorder %s182, %s198
      %p200 = scmp.eq.s32.totalorder %s22, 0
      %p201 = por %p199, %p200
      %p202 = scmp.le.s32.totalorder 1, %s16
      %p203 = scmp.lt.s32.totalorder %s16, 3
      %p204 = pnand %p202, %p203
      %p205 = pneg %p204
      // Predicated region
      $region9: #{tpu_custom_call.1} parent=5 // pred_check
        _
      $region10: #{tpu_custom_call.1} parent=5 // pred_check_branch
        %207 = sbr.rel (%p204) target = $region12
      $region11: #{tpu_custom_call.1} parent=5 // pred_region
        %s208 = ssub.s32 %s16, 1
        // Predicated region
        $region13: #{tpu_custom_call.1} parent=11 // pred_check
          %p209 = pneg %p63
        $region14: #{tpu_custom_call.1} parent=11 // pred_check_branch
          %211 = sbr.rel (%p209) target = $region16
        $region15: #{tpu_custom_call.1} parent=11 // pred_region
          _
        $region16: #{tpu_custom_call.1} parent=11 // pred_fallthru
          _
        // Predicated region
        $region17: #{tpu_custom_call.1} parent=11 // pred_check
          %p212 = pneg %p84
        $region18: #{tpu_custom_call.1} parent=11 // pred_check_branch
          %214 = sbr.rel (%p212) target = $region20
        $region19: #{tpu_custom_call.1} parent=11 // pred_region
          _
        $region20: #{tpu_custom_call.1} parent=11 // pred_fallthru
          _
        // Predicated region
        $region21: #{tpu_custom_call.1} parent=11 // pred_check
          %p215 = pneg %p105
        $region22: #{tpu_custom_call.1} parent=11 // pred_check_branch
          %217 = sbr.rel (%p215) target = $region24
        $region23: #{tpu_custom_call.1} parent=11 // pred_region
          _
        $region24: #{tpu_custom_call.1} parent=11 // pred_fallthru
          _
        // Predicated region
        $region25: #{tpu_custom_call.1} parent=11 // pred_check
          %p218 = pneg %p126
        $region26: #{tpu_custom_call.1} parent=11 // pred_check_branch
          %220 = sbr.rel (%p218) target = $region28
        $region27: #{tpu_custom_call.1} parent=11 // pred_region
          _
        $region28: #{tpu_custom_call.1} parent=11 // pred_fallthru
          _
        // Predicated region
        $region29: #{tpu_custom_call.1} parent=11 // pred_check
          %p221 = pneg %p147
        $region30: #{tpu_custom_call.1} parent=11 // pred_check_branch
          %223 = sbr.rel (%p221) target = $region32
        $region31: #{tpu_custom_call.1} parent=11 // pred_region
          _
        $region32: #{tpu_custom_call.1} parent=11 // pred_fallthru
          _
        // Predicated region
        $region33: #{tpu_custom_call.1} parent=11 // pred_check
          %p224 = pneg %p168
        $region34: #{tpu_custom_call.1} parent=11 // pred_check_branch
          %226 = sbr.rel (%p224) target = $region36
        $region35: #{tpu_custom_call.1} parent=11 // pred_region
          _
        $region36: #{tpu_custom_call.1} parent=11 // pred_fallthru
          _
      $region12: #{tpu_custom_call.1} parent=5 // pred_fallthru
        _
      %p227 = scmp.lt.s32.totalorder %s16, 2
      // Predicated region
      $region37: #{tpu_custom_call.1} parent=5 // pred_check
        %p228 = pneg %p227
      $region38: #{tpu_custom_call.1} parent=5 // pred_check_branch
        %230 = sbr.rel (%p228) target = $region40
      $region39: #{tpu_custom_call.1} parent=5 // pred_region
        // Predicated region
        $region41: #{tpu_custom_call.1} parent=39 // pred_check
          %p231 = pneg %p36
        $region42: #{tpu_custom_call.1} parent=39 // pred_check_branch
          %233 = sbr.rel (%p231) target = $region44
        $region43: #{tpu_custom_call.1} parent=39 // pred_region
          %s234 = smul.u32 4, %s16
          %p235 = scmp.lt.s32.totalorder %s234, 7
          %s236 = scalar_select %p235, %s234, 7
          %s237 = smul.addr %s236, 6
          %s238 = smul.addr %s237, 8
          %s239 = scalar_lea.vmem %s0, %s238
          %s240 = smul.u32 4, %s16
        $region44: #{tpu_custom_call.1} parent=39 // pred_fallthru
          _
      $region40: #{tpu_custom_call.1} parent=5 // pred_fallthru
        _
      %p241 = scmp.le.s32.totalorder 1, %s16
      %p242 = scmp.lt.s32.totalorder %s16, 3
      %p243 = pnand %p241, %p242
      %p244 = pneg %p243
      // Predicated region
      $region45: #{tpu_custom_call.1} parent=5 // pred_check
        _
      $region46: #{tpu_custom_call.1} parent=5 // pred_check_branch
        %246 = sbr.rel (%p243) target = $region48
      $region47: #{tpu_custom_call.1} parent=5 // pred_region
        %s247 = ssub.s32 %s16, 1
        %s248 = smul.u32 4, %s21
        %p249 = scmp.lt.s32.totalorder %s248, 7
        %s250 = scalar_select %p249, %s248, 7
        %s251 = smul.addr %s250, 6
        %s252 = smul.addr %s251, 8
        %s253 = scalar_lea.vmem %s0, %s252
        %p254 = pneg %p42
        %p255 = pneg %p39
        %p256 = pneg %p63
        %p257 = pneg %p60
        %p258 = pneg %p84
        %p259 = pneg %p81
        %p260 = pneg %p105
        %p261 = pneg %p102
        %p262 = pneg %p126
        %p263 = pneg %p123
        %p264 = pneg %p147
        %p265 = pneg %p144
        %p266 = pneg %p168
        %p267 = pneg %p165
        %p268 = pneg %p194
        %p269 = pneg %p191
        %s270 = sand.u32 %s181, 1
        %s271 = scalar_lea.sflag [#allocation3], %s270
        %s272 = sand.u32 %s181, 1
        %s273 = smul.addr %s272, 128
        %s274 = scalar_lea.vmem [#allocation2], %s273
        %s275 = smul.u32 4, %s21
        %p276 = scmp.lt.s32.totalorder %s275, 7
        %s277 = scalar_select %p276, %s275, 7
        %s278 = smul.addr %s277, 6
        %s279 = smul.addr %s278, 8
        %s280 = scalar_lea.vmem %s0, %s279
        %s281 = smul.u32 4, %s21
        %s282 = smul.u32 4, %s21
        %v283 = vld [vmem:[%s280] sm:$0xff]
        %v284 = vld [vmem:[%s280 + $0x8] sm:$0xff]
        %v285 = vld [vmem:[%s280 + $0x10] sm:$0x3]
        %v286 = vld [vmem:[%s280 + $0x18] sm:$0xff]
        %v287 = vld [vmem:[%s280 + $0x20] sm:$0xff]
        %v288 = vld [vmem:[%s280 + $0x28] sm:$0x3]
        %v289 = vld [vmem:[%s280 + $0x30] sm:$0xff]
        %v290 = vld [vmem:[%s280 + $0x38] sm:$0xff]
        %v291 = vld [vmem:[%s280 + $0x40] sm:$0x3]
        %v292 = vld [vmem:[%s280 + $0x48] sm:$0xff]
        %v293 = vld [vmem:[%s280 + $0x50] sm:$0xff]
        %v294 = vld [vmem:[%s280 + $0x58] sm:$0x3]
        %v295 = vld [vmem:[%s280 + $0x60] sm:$0xff]
        %v296 = vld [vmem:[%s280 + $0x68] sm:$0xff]
        %v297 = vld [vmem:[%s280 + $0x70] sm:$0x3]
        %v298 = vld [vmem:[%s280 + $0x78] sm:$0xff]
        %v299 = vld [vmem:[%s280 + $0x80] sm:$0xff]
        %v300 = vld [vmem:[%s280 + $0x88] sm:$0x3]
        %v301 = vld [vmem:[%s280 + $0x90] sm:$0xff]
        %v302 = vld [vmem:[%s280 + $0x98] sm:$0xff]
        %v303 = vld [vmem:[%s280 + $0xa0] sm:$0x3]
        %v304 = vld [vmem:[%s280 + $0xa8] sm:$0xff]
        %v305 = vld [vmem:[%s280 + $0xb0] sm:$0xff]
        %v306 = vld [vmem:[%s280 + $0xb8] sm:$0x3]
        %v307 = vld [vmem:[%s1] sm:$0x1]
        %v308 = vld [vmem:[%s1 + $0x1] sm:$0x1]
        %v309 = vld [vmem:[%s1 + $0x2] sm:$0x1]
        %v310 = vld [vmem:[%s1 + $0x3] sm:$0x1]
        %v311 = vld [vmem:[%s2] sm:$0x1]
        %v312 = vld [vmem:[%s2 + $0x1] sm:$0x1]
        %v313 = vld [vmem:[%s3] sm:$0x1]
        %v314 = vld [vmem:[%s3 + $0x1] sm:$0x1]
        %v315 = vld [vmem:[%s3 + $0x2] sm:$0x1]
        %v316 = vld [vmem:[%s3 + $0x3] sm:$0x1]
        %v317 = vld [vmem:[%s3 + $0x4] sm:$0x1]
        %v318 = vld [vmem:[%s3 + $0x5] sm:$0x1]
        %v319 = vld [vmem:[%s3 + $0x6] sm:$0x1]
        %v320 = vld [vmem:[%s3 + $0x7] sm:$0x1]
        %v321 = vld [vmem:[%s3 + $0x8] sm:$0x1]
        %v322 = vld [vmem:[%s3 + $0x9] sm:$0x1]
        %v323 = vld [vmem:[%s3 + $0xa] sm:$0x1]
        %v324 = vld [vmem:[%s3 + $0xb] sm:$0x1]
        %v325 = vld [vmem:[%s3 + $0xc] sm:$0x1]
        %v326 = vld [vmem:[%s3 + $0xd] sm:$0x1]
        %v327 = vld [vmem:[%s3 + $0xe] sm:$0x1]
        %v328 = vld [vmem:[%s3 + $0xf] sm:$0x1]
        %v329 = vld [vmem:[%s3 + $0x10] sm:$0x1]
        %v330 = vld [vmem:[%s3 + $0x11] sm:$0x1]
        %v331 = vld [vmem:[%s3 + $0x12] sm:$0x1]
        %v332 = vld [vmem:[%s3 + $0x13] sm:$0x1]
        %v333 = vld [vmem:[%s3 + $0x14] sm:$0x1]
        %v334 = vld [vmem:[%s3 + $0x15] sm:$0x1]
        %v335 = vld [vmem:[%s3 + $0x16] sm:$0x1]
        %v336 = vld [vmem:[%s3 + $0x17] sm:$0x1]
        %v337 = vld [vmem:[%s3 + $0x18] sm:$0x1]
        %v338 = vld [vmem:[%s3 + $0x19] sm:$0x1]
        %v339 = vld [vmem:[%s3 + $0x1a] sm:$0x1]
        %v340 = vld [vmem:[%s3 + $0x1b] sm:$0x1]
        %v341 = vld [vmem:[%s3 + $0x1c] sm:$0x1]
        %v342 = vld [vmem:[%s3 + $0x1d] sm:$0x1]
        %v343 = vld [vmem:[%s3 + $0x1e] sm:$0x1]
        %v344 = vld [vmem:[%s3 + $0x1f] sm:$0x1]
        %v345 = vld [vmem:[%s3 + $0x20] sm:$0x1]
        %v346 = vld [vmem:[%s3 + $0x21] sm:$0x1]
        %v347 = vld [vmem:[%s3 + $0x22] sm:$0x1]
        %v348 = vld [vmem:[%s3 + $0x23] sm:$0x1]
        %v349 = vld [vmem:[%s4] sm:$0x1]
        %v350 = vld [vmem:[%s4 + $0x1] sm:$0x1]
        %v351 = vld [vmem:[%s5] sm:$0x1]
        %v352 = vld [vmem:[%s5 + $0x1] sm:$0x1]
        %v353 = vld [vmem:[%s6] sm:$0x1]
        %v354 = vld [vmem:[%s6 + $0x1] sm:$0x1]
        %379 = vrot.lane.b32.xlu0 %v283, 127
        %v380 = vpop.permute.xlu0 %379
        %381 = vrot.lane.b32.xlu0 %v284, 127
        %v382 = vpop.permute.xlu0 %381
        %383 = vrot.lane.b32.xlu0 %v285, 127
        %v384 = vpop.permute.xlu0 %383
        %385 = vrot.lane.b32.xlu0 %v286, 127
        %v386 = vpop.permute.xlu0 %385
        %387 = vrot.lane.b32.xlu0 %v287, 127
        %v388 = vpop.permute.xlu0 %387
        %389 = vrot.lane.b32.xlu0 %v288, 127
        %v390 = vpop.permute.xlu0 %389
        %391 = vrot.lane.b32.xlu0 %v289, 127
        %v392 = vpop.permute.xlu0 %391
        %393 = vrot.lane.b32.xlu0 %v290, 127
        %v394 = vpop.permute.xlu0 %393
        %395 = vrot.lane.b32.xlu0 %v291, 127
        %v396 = vpop.permute.xlu0 %395
        %397 = vrot.lane.b32.xlu0 %v292, 127
        %v398 = vpop.permute.xlu0 %397
        %399 = vrot.lane.b32.xlu0 %v293, 127
        %v400 = vpop.permute.xlu0 %399
        %401 = vrot.lane.b32.xlu0 %v294, 127
        %v402 = vpop.permute.xlu0 %401
        %403 = vrot.lane.b32.xlu0 %v295, 127
        %v404 = vpop.permute.xlu0 %403
        %405 = vrot.lane.b32.xlu0 %v296, 127
        %v406 = vpop.permute.xlu0 %405
        %407 = vrot.lane.b32.xlu0 %v297, 127
        %v408 = vpop.permute.xlu0 %407
        %409 = vrot.lane.b32.xlu0 %v298, 127
        %v410 = vpop.permute.xlu0 %409
        %411 = vrot.lane.b32.xlu0 %v299, 127
        %v412 = vpop.permute.xlu0 %411
        %413 = vrot.lane.b32.xlu0 %v300, 127
        %v414 = vpop.permute.xlu0 %413
        %415 = vrot.lane.b32.xlu0 %v301, 127
        %v416 = vpop.permute.xlu0 %415
        %417 = vrot.lane.b32.xlu0 %v302, 127
        %v418 = vpop.permute.xlu0 %417
        %419 = vrot.lane.b32.xlu0 %v303, 127
        %v420 = vpop.permute.xlu0 %419
        %421 = vrot.lane.b32.xlu0 %v304, 127
        %v422 = vpop.permute.xlu0 %421
        %423 = vrot.lane.b32.xlu0 %v305, 127
        %v424 = vpop.permute.xlu0 %423
        %425 = vrot.lane.b32.xlu0 %v306, 127
        %v426 = vpop.permute.xlu0 %425
        %vm451 = vcmask 130049
        %v452 = vsel %vm451, %v380, 0.0
        %453 = vadd.xlane.f32.xlu0 %v452
        %v454 = vpop.xlane.xlu0 %453
        %vm455 = vcmask 130048
        %v456 = vsel %vm455, %v382, 0.0
        %457 = vadd.xlane.f32.xlu0 %v456
        %v458 = vpop.xlane.xlu0 %457
        %vm459 = vcmask 122880
        %v460 = vsel %vm459, %v384, 0.0
        %461 = vadd.xlane.f32.xlu0 %v460
        %v462 = vpop.xlane.xlu0 %461
        %v463 = vsel %vm451, %v386, 0.0
        %464 = vadd.xlane.f32.xlu0 %v463
        %v465 = vpop.xlane.xlu0 %464
        %v466 = vsel %vm455, %v388, 0.0
        %467 = vadd.xlane.f32.xlu0 %v466
        %v468 = vpop.xlane.xlu0 %467
        %v469 = vsel %vm459, %v390, 0.0
        %470 = vadd.xlane.f32.xlu0 %v469
        %v471 = vpop.xlane.xlu0 %470
        %v472 = vsel %vm451, %v392, 0.0
        %473 = vadd.xlane.f32.xlu0 %v472
        %v474 = vpop.xlane.xlu0 %473
        %v475 = vsel %vm455, %v394, 0.0
        %476 = vadd.xlane.f32.xlu0 %v475
        %v477 = vpop.xlane.xlu0 %476
        %v478 = vsel %vm459, %v396, 0.0
        %479 = vadd.xlane.f32.xlu0 %v478
        %v480 = vpop.xlane.xlu0 %479
        %v481 = vsel %vm451, %v398, 0.0
        %482 = vadd.xlane.f32.xlu0 %v481
        %v483 = vpop.xlane.xlu0 %482
        %v484 = vsel %vm455, %v400, 0.0
        %485 = vadd.xlane.f32.xlu0 %v484
        %v486 = vpop.xlane.xlu0 %485
        %v487 = vsel %vm459, %v402, 0.0
        %488 = vadd.xlane.f32.xlu0 %v487
        %v489 = vpop.xlane.xlu0 %488
        %v490 = vsel %vm451, %v404, 0.0
        %491 = vadd.xlane.f32.xlu0 %v490
        %v492 = vpop.xlane.xlu0 %491
        %v493 = vsel %vm455, %v406, 0.0
        %494 = vadd.xlane.f32.xlu0 %v493
        %v495 = vpop.xlane.xlu0 %494
        %v496 = vsel %vm459, %v408, 0.0
        %497 = vadd.xlane.f32.xlu0 %v496
        %v498 = vpop.xlane.xlu0 %497
        %v499 = vsel %vm451, %v410, 0.0
        %500 = vadd.xlane.f32.xlu0 %v499
        %v501 = vpop.xlane.xlu0 %500
        %v502 = vsel %vm455, %v412, 0.0
        %503 = vadd.xlane.f32.xlu0 %v502
        %v504 = vpop.xlane.xlu0 %503
        %v505 = vsel %vm459, %v414, 0.0
        %506 = vadd.xlane.f32.xlu0 %v505
        %v507 = vpop.xlane.xlu0 %506
        %v508 = vsel %vm451, %v416, 0.0
        %509 = vadd.xlane.f32.xlu0 %v508
        %v510 = vpop.xlane.xlu0 %509
        %v511 = vsel %vm455, %v418, 0.0
        %512 = vadd.xlane.f32.xlu0 %v511
        %v513 = vpop.xlane.xlu0 %512
        %v514 = vsel %vm459, %v420, 0.0
        %515 = vadd.xlane.f32.xlu0 %v514
        %v516 = vpop.xlane.xlu0 %515
        %v517 = vsel %vm451, %v422, 0.0
        %518 = vadd.xlane.f32.xlu0 %v517
        %v519 = vpop.xlane.xlu0 %518
        %v520 = vsel %vm455, %v424, 0.0
        %521 = vadd.xlane.f32.xlu0 %v520
        %v522 = vpop.xlane.xlu0 %521
        %v523 = vsel %vm459, %v426, 0.0
        %524 = vadd.xlane.f32.xlu0 %v523
        %v525 = vpop.xlane.xlu0 %524
        %v526 = vrcp.pop 16.0
        %v527 = vmul.f32 %v454, %v526
        %v528 = vmul.f32 %v458, %v526
        %v529 = vmul.f32 %v462, %v526
        %v530 = vmul.f32 %v465, %v526
        %v531 = vmul.f32 %v468, %v526
        %v532 = vmul.f32 %v471, %v526
        %v533 = vmul.f32 %v474, %v526
        %v534 = vmul.f32 %v477, %v526
        %v535 = vmul.f32 %v480, %v526
        %v536 = vmul.f32 %v483, %v526
        %v537 = vmul.f32 %v486, %v526
        %v538 = vmul.f32 %v489, %v526
        %v539 = vmul.f32 %v492, %v526
        %v540 = vmul.f32 %v495, %v526
        %v541 = vmul.f32 %v498, %v526
        %v542 = vmul.f32 %v501, %v526
        %v543 = vmul.f32 %v504, %v526
        %v544 = vmul.f32 %v507, %v526
        %v545 = vmul.f32 %v510, %v526
        %v546 = vmul.f32 %v513, %v526
        %v547 = vmul.f32 %v516, %v526
        %v548 = vmul.f32 %v519, %v526
        %v549 = vmul.f32 %v522, %v526
        %v550 = vmul.f32 %v525, %v526
        %vm551 = vcmask 1046528
        %v552 = vrot.slane %v283, 1
        %v553 = vrot.slane %v284, 1
        %v554 = vsel %vm551, %v552, %v553
        %v555 = vrot.slane %v285, 1
        %v556 = vsel %vm551, %v553, %v555
        %v557 = vrot.slane %v286, 1
        %v558 = vrot.slane %v287, 1
        %v559 = vsel %vm551, %v557, %v558
        %v560 = vrot.slane %v288, 1
        %v561 = vsel %vm551, %v558, %v560
        %v562 = vrot.slane %v289, 1
        %v563 = vrot.slane %v290, 1
        %v564 = vsel %vm551, %v562, %v563
        %v565 = vrot.slane %v291, 1
        %v566 = vsel %vm551, %v563, %v565
        %v567 = vrot.slane %v292, 1
        %v568 = vrot.slane %v293, 1
        %v569 = vsel %vm551, %v567, %v568
        %v570 = vrot.slane %v294, 1
        %v571 = vsel %vm551, %v568, %v570
        %v572 = vrot.slane %v295, 1
        %v573 = vrot.slane %v296, 1
        %v574 = vsel %vm551, %v572, %v573
        %v575 = vrot.slane %v297, 1
        %v576 = vsel %vm551, %v573, %v575
        %v577 = vrot.slane %v298, 1
        %v578 = vrot.slane %v299, 1
        %v579 = vsel %vm551, %v577, %v578
        %v580 = vrot.slane %v300, 1
        %v581 = vsel %vm551, %v578, %v580
        %v582 = vrot.slane %v301, 1
        %v583 = vrot.slane %v302, 1
        %v584 = vsel %vm551, %v582, %v583
        %v585 = vrot.slane %v303, 1
        %v586 = vsel %vm551, %v583, %v585
        %v587 = vrot.slane %v304, 1
        %v588 = vrot.slane %v305, 1
        %v589 = vsel %vm551, %v587, %v588
        %v590 = vrot.slane %v306, 1
        %v591 = vsel %vm551, %v588, %v590
        %vm608 = vcmask 138248
        %v609 = vsel %vm608, %v554, 0.0
        %v610 = vsel %vm608, %v556, 0.0
        %v611 = vadd.f32 %v609, %v610
        %v612 = vrot.slane %v611, 4
        %v613 = vadd.f32 %v611, %v612
        %v614 = vrot.slane %v613, 2
        %v615 = vadd.f32 %v613, %v614
        %v616 = vrot.slane %v615, 1
        %v617 = vadd.f32 %v615, %v616
        %v618 = vsel %vm608, %v559, 0.0
        %v619 = vsel %vm608, %v561, 0.0
        %v620 = vadd.f32 %v618, %v619
        %v621 = vrot.slane %v620, 4
        %v622 = vadd.f32 %v620, %v621
        %v623 = vrot.slane %v622, 2
        %v624 = vadd.f32 %v622, %v623
        %v625 = vrot.slane %v624, 1
        %v626 = vadd.f32 %v624, %v625
        %v627 = vsel %vm608, %v564, 0.0
        %v628 = vsel %vm608, %v566, 0.0
        %v629 = vadd.f32 %v627, %v628
        %v630 = vrot.slane %v629, 4
        %v631 = vadd.f32 %v629, %v630
        %v632 = vrot.slane %v631, 2
        %v633 = vadd.f32 %v631, %v632
        %v634 = vrot.slane %v633, 1
        %v635 = vadd.f32 %v633, %v634
        %v636 = vsel %vm608, %v569, 0.0
        %v637 = vsel %vm608, %v571, 0.0
        %v638 = vadd.f32 %v636, %v637
        %v639 = vrot.slane %v638, 4
        %v640 = vadd.f32 %v638, %v639
        %v641 = vrot.slane %v640, 2
        %v642 = vadd.f32 %v640, %v641
        %v643 = vrot.slane %v642, 1
        %v644 = vadd.f32 %v642, %v643
        %v645 = vsel %vm608, %v574, 0.0
        %v646 = vsel %vm608, %v576, 0.0
        %v647 = vadd.f32 %v645, %v646
        %v648 = vrot.slane %v647, 4
        %v649 = vadd.f32 %v647, %v648
        %v650 = vrot.slane %v649, 2
        %v651 = vadd.f32 %v649, %v650
        %v652 = vrot.slane %v651, 1
        %v653 = vadd.f32 %v651, %v652
        %v654 = vsel %vm608, %v579, 0.0
        %v655 = vsel %vm608, %v581, 0.0
        %v656 = vadd.f32 %v654, %v655
        %v657 = vrot.slane %v656, 4
        %v658 = vadd.f32 %v656, %v657
        %v659 = vrot.slane %v658, 2
        %v660 = vadd.f32 %v658, %v659
        %v661 = vrot.slane %v660, 1
        %v662 = vadd.f32 %v660, %v661
        %v663 = vsel %vm608, %v584, 0.0
        %v664 = vsel %vm608, %v586, 0.0
        %v665 = vadd.f32 %v663, %v664
        %v666 = vrot.slane %v665, 4
        %v667 = vadd.f32 %v665, %v666
        %v668 = vrot.slane %v667, 2
        %v669 = vadd.f32 %v667, %v668
        %v670 = vrot.slane %v669, 1
        %v671 = vadd.f32 %v669, %v670
        %v672 = vsel %vm608, %v589, 0.0
        %v673 = vsel %vm608, %v591, 0.0
        %v674 = vadd.f32 %v672, %v673
        %v675 = vrot.slane %v674, 4
        %v676 = vadd.f32 %v674, %v675
        %v677 = vrot.slane %v676, 2
        %v678 = vadd.f32 %v676, %v677
        %v679 = vrot.slane %v678, 1
        %v680 = vadd.f32 %v678, %v679
        %v681 = vmul.f32 %v617, %v526
        %v682 = vmul.f32 %v626, %v526
        %v683 = vmul.f32 %v635, %v526
        %v684 = vmul.f32 %v644, %v526
        %v685 = vmul.f32 %v653, %v526
        %v686 = vmul.f32 %v662, %v526
        %v687 = vmul.f32 %v671, %v526
        %v688 = vmul.f32 %v680, %v526
        %v691 = vlaneseq
        %v692 = vshrl.u32 %v691, 7
        %v693 = vsub.s32 0, %v692
        %v694 = vrot.slane %v307, %v693
        %v695 = vlaneseq
        %v696 = vshrl.u32 %v695, 7
        %v697 = vsub.s32 0, %v696
        %v698 = vrot.slane %v308, %v697
        %v701 = vmul.f32 %v694, %v527
        %v702 = vmul.f32 %v694, %v528
        %v703 = vmul.f32 %v694, %v529
        %v704 = vmul.f32 %v698, %v527
        %v705 = vmul.f32 %v698, %v528
        %v706 = vmul.f32 %v698, %v529
        %v707 = vmul.f32 %v694, %v533
        %v708 = vmul.f32 %v694, %v534
        %v709 = vmul.f32 %v694, %v535
        %v710 = vmul.f32 %v698, %v533
        %v711 = vmul.f32 %v698, %v534
        %v712 = vmul.f32 %v698, %v535
        %v713 = vmul.f32 %v694, %v539
        %v714 = vmul.f32 %v694, %v540
        %v715 = vmul.f32 %v694, %v541
        %v716 = vmul.f32 %v698, %v539
        %v717 = vmul.f32 %v698, %v540
        %v718 = vmul.f32 %v698, %v541
        %v719 = vmul.f32 %v694, %v545
        %v720 = vmul.f32 %v694, %v546
        %v721 = vmul.f32 %v694, %v547
        %v722 = vmul.f32 %v698, %v545
        %v723 = vmul.f32 %v698, %v546
        %v724 = vmul.f32 %v698, %v547
        %v727 = vlaneseq
        %v728 = vshrl.u32 %v727, 7
        %v729 = vsub.s32 0, %v728
        %v730 = vrot.slane %v309, %v729
        %v731 = vlaneseq
        %v732 = vshrl.u32 %v731, 7
        %v733 = vsub.s32 0, %v732
        %v734 = vrot.slane %v310, %v733
        %v737 = vmul.f32 %v730, %v530
        %v738 = vmul.f32 %v730, %v531
        %v739 = vmul.f32 %v730, %v532
        %v740 = vmul.f32 %v734, %v530
        %v741 = vmul.f32 %v734, %v531
        %v742 = vmul.f32 %v734, %v532
        %v743 = vmul.f32 %v730, %v536
        %v744 = vmul.f32 %v730, %v537
        %v745 = vmul.f32 %v730, %v538
        %v746 = vmul.f32 %v734, %v536
        %v747 = vmul.f32 %v734, %v537
        %v748 = vmul.f32 %v734, %v538
        %v749 = vmul.f32 %v730, %v542
        %v750 = vmul.f32 %v730, %v543
        %v751 = vmul.f32 %v730, %v544
        %v752 = vmul.f32 %v734, %v542
        %v753 = vmul.f32 %v734, %v543
        %v754 = vmul.f32 %v734, %v544
        %v755 = vmul.f32 %v730, %v548
        %v756 = vmul.f32 %v730, %v549
        %v757 = vmul.f32 %v730, %v550
        %v758 = vmul.f32 %v734, %v548
        %v759 = vmul.f32 %v734, %v549
        %v760 = vmul.f32 %v734, %v550
        %v761 = vadd.f32 %v701, %v737
        %v762 = vadd.f32 %v702, %v738
        %v763 = vadd.f32 %v703, %v739
        %v764 = vadd.f32 %v704, %v740
        %v765 = vadd.f32 %v705, %v741
        %v766 = vadd.f32 %v706, %v742
        %v767 = vadd.f32 %v707, %v743
        %v768 = vadd.f32 %v708, %v744
        %v769 = vadd.f32 %v709, %v745
        %v770 = vadd.f32 %v710, %v746
        %v771 = vadd.f32 %v711, %v747
        %v772 = vadd.f32 %v712, %v748
        %v773 = vadd.f32 %v713, %v749
        %v774 = vadd.f32 %v714, %v750
        %v775 = vadd.f32 %v715, %v751
        %v776 = vadd.f32 %v716, %v752
        %v777 = vadd.f32 %v717, %v753
        %v778 = vadd.f32 %v718, %v754
        %v779 = vadd.f32 %v719, %v755
        %v780 = vadd.f32 %v720, %v756
        %v781 = vadd.f32 %v721, %v757
        %v782 = vadd.f32 %v722, %v758
        %v783 = vadd.f32 %v723, %v759
        %v784 = vadd.f32 %v724, %v760
        %v787 = vlaneseq
        %v788 = vshrl.u32 %v787, 7
        %v789 = vsub.s32 0, %v788
        %v790 = vrot.slane %v311, %v789
        %v791 = vlaneseq
        %v792 = vshrl.u32 %v791, 7
        %v793 = vsub.s32 0, %v792
        %v794 = vrot.slane %v312, %v793
        %v797 = vadd.f32 %v761, %v790
        %v798 = vadd.f32 %v762, %v790
        %v799 = vadd.f32 %v763, %v790
        %v800 = vadd.f32 %v764, %v794
        %v801 = vadd.f32 %v765, %v794
        %v802 = vadd.f32 %v766, %v794
        %v803 = vadd.f32 %v767, %v790
        %v804 = vadd.f32 %v768, %v790
        %v805 = vadd.f32 %v769, %v790
        %v806 = vadd.f32 %v770, %v794
        %v807 = vadd.f32 %v771, %v794
        %v808 = vadd.f32 %v772, %v794
        %v809 = vadd.f32 %v773, %v790
        %v810 = vadd.f32 %v774, %v790
        %v811 = vadd.f32 %v775, %v790
        %v812 = vadd.f32 %v776, %v794
        %v813 = vadd.f32 %v777, %v794
        %v814 = vadd.f32 %v778, %v794
        %v815 = vadd.f32 %v779, %v790
        %v816 = vadd.f32 %v780, %v790
        %v817 = vadd.f32 %v781, %v790
        %v818 = vadd.f32 %v782, %v794
        %v819 = vadd.f32 %v783, %v794
        %v820 = vadd.f32 %v784, %v794
        %v821 = vxor.u32 %v797, 2147483648
        %v822 = vxor.u32 %v798, 2147483648
        %v823 = vxor.u32 %v799, 2147483648
        %v824 = vxor.u32 %v800, 2147483648
        %v825 = vxor.u32 %v801, 2147483648
        %v826 = vxor.u32 %v802, 2147483648
        %v827 = vxor.u32 %v803, 2147483648
        %v828 = vxor.u32 %v804, 2147483648
        %v829 = vxor.u32 %v805, 2147483648
        %v830 = vxor.u32 %v806, 2147483648
        %v831 = vxor.u32 %v807, 2147483648
        %v832 = vxor.u32 %v808, 2147483648
        %v833 = vxor.u32 %v809, 2147483648
        %v834 = vxor.u32 %v810, 2147483648
        %v835 = vxor.u32 %v811, 2147483648
        %v836 = vxor.u32 %v812, 2147483648
        %v837 = vxor.u32 %v813, 2147483648
        %v838 = vxor.u32 %v814, 2147483648
        %v839 = vxor.u32 %v815, 2147483648
        %v840 = vxor.u32 %v816, 2147483648
        %v841 = vxor.u32 %v817, 2147483648
        %v842 = vxor.u32 %v818, 2147483648
        %v843 = vxor.u32 %v819, 2147483648
        %v844 = vxor.u32 %v820, 2147483648
        %v845 = vmul.f32 %v821, 1.442695
        %v846 = vpow.pop %v845
        %v847 = vmul.f32 %v822, 1.442695
        %v848 = vpow.pop %v847
        %v849 = vmul.f32 %v823, 1.442695
        %v850 = vpow.pop %v849
        %v851 = vmul.f32 %v824, 1.442695
        %v852 = vpow.pop %v851
        %v853 = vmul.f32 %v825, 1.442695
        %v854 = vpow.pop %v853
        %v855 = vmul.f32 %v826, 1.442695
        %v856 = vpow.pop %v855
        %v857 = vmul.f32 %v827, 1.442695
        %v858 = vpow.pop %v857
        %v859 = vmul.f32 %v828, 1.442695
        %v860 = vpow.pop %v859
        %v861 = vmul.f32 %v829, 1.442695
        %v862 = vpow.pop %v861
        %v863 = vmul.f32 %v830, 1.442695
        %v864 = vpow.pop %v863
        %v865 = vmul.f32 %v831, 1.442695
        %v866 = vpow.pop %v865
        %v867 = vmul.f32 %v832, 1.442695
        %v868 = vpow.pop %v867
        %v869 = vmul.f32 %v833, 1.442695
        %v870 = vpow.pop %v869
        %v871 = vmul.f32 %v834, 1.442695
        %v872 = vpow.pop %v871
        %v873 = vmul.f32 %v835, 1.442695
        %v874 = vpow.pop %v873
        %v875 = vmul.f32 %v836, 1.442695
        %v876 = vpow.pop %v875
        %v877 = vmul.f32 %v837, 1.442695
        %v878 = vpow.pop %v877
        %v879 = vmul.f32 %v838, 1.442695
        %v880 = vpow.pop %v879
        %v881 = vmul.f32 %v839, 1.442695
        %v882 = vpow.pop %v881
        %v883 = vmul.f32 %v840, 1.442695
        %v884 = vpow.pop %v883
        %v885 = vmul.f32 %v841, 1.442695
        %v886 = vpow.pop %v885
        %v887 = vmul.f32 %v842, 1.442695
        %v888 = vpow.pop %v887
        %v889 = vmul.f32 %v843, 1.442695
        %v890 = vpow.pop %v889
        %v891 = vmul.f32 %v844, 1.442695
        %v892 = vpow.pop %v891
        %v893 = vadd.f32 %v846, 1.0
        %v894 = vadd.f32 %v848, 1.0
        %v895 = vadd.f32 %v850, 1.0
        %v896 = vadd.f32 %v852, 1.0
        %v897 = vadd.f32 %v854, 1.0
        %v898 = vadd.f32 %v856, 1.0
        %v899 = vadd.f32 %v858, 1.0
        %v900 = vadd.f32 %v860, 1.0
        %v901 = vadd.f32 %v862, 1.0
        %v902 = vadd.f32 %v864, 1.0
        %v903 = vadd.f32 %v866, 1.0
        %v904 = vadd.f32 %v868, 1.0
        %v905 = vadd.f32 %v870, 1.0
        %v906 = vadd.f32 %v872, 1.0
        %v907 = vadd.f32 %v874, 1.0
        %v908 = vadd.f32 %v876, 1.0
        %v909 = vadd.f32 %v878, 1.0
        %v910 = vadd.f32 %v880, 1.0
        %v911 = vadd.f32 %v882, 1.0
        %v912 = vadd.f32 %v884, 1.0
        %v913 = vadd.f32 %v886, 1.0
        %v914 = vadd.f32 %v888, 1.0
        %v915 = vadd.f32 %v890, 1.0
        %v916 = vadd.f32 %v892, 1.0
        %v917 = vrcp.pop %v893
        %v918 = vmul.f32 1.0, %v917
        %v919 = vrcp.pop %v894
        %v920 = vmul.f32 1.0, %v919
        %v921 = vrcp.pop %v895
        %v922 = vmul.f32 1.0, %v921
        %v923 = vrcp.pop %v896
        %v924 = vmul.f32 1.0, %v923
        %v925 = vrcp.pop %v897
        %v926 = vmul.f32 1.0, %v925
        %v927 = vrcp.pop %v898
        %v928 = vmul.f32 1.0, %v927
        %v929 = vrcp.pop %v899
        %v930 = vmul.f32 1.0, %v929
        %v931 = vrcp.pop %v900
        %v932 = vmul.f32 1.0, %v931
        %v933 = vrcp.pop %v901
        %v934 = vmul.f32 1.0, %v933
        %v935 = vrcp.pop %v902
        %v936 = vmul.f32 1.0, %v935
        %v937 = vrcp.pop %v903
        %v938 = vmul.f32 1.0, %v937
        %v939 = vrcp.pop %v904
        %v940 = vmul.f32 1.0, %v939
        %v941 = vrcp.pop %v905
        %v942 = vmul.f32 1.0, %v941
        %v943 = vrcp.pop %v906
        %v944 = vmul.f32 1.0, %v943
        %v945 = vrcp.pop %v907
        %v946 = vmul.f32 1.0, %v945
        %v947 = vrcp.pop %v908
        %v948 = vmul.f32 1.0, %v947
        %v949 = vrcp.pop %v909
        %v950 = vmul.f32 1.0, %v949
        %v951 = vrcp.pop %v910
        %v952 = vmul.f32 1.0, %v951
        %v953 = vrcp.pop %v911
        %v954 = vmul.f32 1.0, %v953
        %v955 = vrcp.pop %v912
        %v956 = vmul.f32 1.0, %v955
        %v957 = vrcp.pop %v913
        %v958 = vmul.f32 1.0, %v957
        %v959 = vrcp.pop %v914
        %v960 = vmul.f32 1.0, %v959
        %v961 = vrcp.pop %v915
        %v962 = vmul.f32 1.0, %v961
        %v963 = vrcp.pop %v916
        %v964 = vmul.f32 1.0, %v963
        %965 = vset.pattern.permute.xlu0 0
        %966 = vperm.xlu0 %965, %v307
        %v967 = vpop.permute.xlu0 %966
        %v969 = vlaneseq
        %v970 = vshrl.u32 %v969, 7
        %v971 = vsub.s32 0, %v970
        %v972 = vrot.slane %v967, %v971
        %973 = vset.pattern.permute.xlu0 0
        %974 = vperm.xlu0 %973, %v308
        %v975 = vpop.permute.xlu0 %974
        %v977 = vlaneseq
        %v978 = vshrl.u32 %v977, 7
        %v979 = vsub.s32 0, %v978
        %v980 = vrot.slane %v975, %v979
        %v981 = vmul.f32 %v972, %v681
        %v982 = vmul.f32 %v980, %v681
        %v983 = vmul.f32 %v972, %v683
        %v984 = vmul.f32 %v980, %v683
        %v985 = vmul.f32 %v972, %v685
        %v986 = vmul.f32 %v980, %v685
        %v987 = vmul.f32 %v972, %v687
        %v988 = vmul.f32 %v980, %v687
        %989 = vset.pattern.permute.xlu0 0
        %990 = vperm.xlu0 %989, %v309
        %v991 = vpop.permute.xlu0 %990
        %v993 = vlaneseq
        %v994 = vshrl.u32 %v993, 7
        %v995 = vsub.s32 0, %v994
        %v996 = vrot.slane %v991, %v995
        %997 = vset.pattern.permute.xlu0 0
        %998 = vperm.xlu0 %997, %v310
        %v999 = vpop.permute.xlu0 %998
        %v1001 = vlaneseq
        %v1002 = vshrl.u32 %v1001, 7
        %v1003 = vsub.s32 0, %v1002
        %v1004 = vrot.slane %v999, %v1003
        %v1005 = vmul.f32 %v996, %v682
        %v1006 = vmul.f32 %v1004, %v682
        %v1007 = vmul.f32 %v996, %v684
        %v1008 = vmul.f32 %v1004, %v684
        %v1009 = vmul.f32 %v996, %v686
        %v1010 = vmul.f32 %v1004, %v686
        %v1011 = vmul.f32 %v996, %v688
        %v1012 = vmul.f32 %v1004, %v688
        %v1013 = vadd.f32 %v981, %v1005
        %v1014 = vadd.f32 %v982, %v1006
        %v1015 = vadd.f32 %v983, %v1007
        %v1016 = vadd.f32 %v984, %v1008
        %v1017 = vadd.f32 %v985, %v1009
        %v1018 = vadd.f32 %v986, %v1010
        %v1019 = vadd.f32 %v987, %v1011
        %v1020 = vadd.f32 %v988, %v1012
        %1021 = vset.pattern.permute.xlu0 0
        %1022 = vperm.xlu0 %1021, %v311
        %v1023 = vpop.permute.xlu0 %1022
        %v1025 = vlaneseq
        %v1026 = vshrl.u32 %v1025, 7
        %v1027 = vsub.s32 0, %v1026
        %v1028 = vrot.slane %v1023, %v1027
        %1029 = vset.pattern.permute.xlu0 0
        %1030 = vperm.xlu0 %1029, %v312
        %v1031 = vpop.permute.xlu0 %1030
        %v1033 = vlaneseq
        %v1034 = vshrl.u32 %v1033, 7
        %v1035 = vsub.s32 0, %v1034
        %v1036 = vrot.slane %v1031, %v1035
        %v1037 = vadd.f32 %v1013, %v1028
        %v1038 = vadd.f32 %v1014, %v1036
        %v1039 = vadd.f32 %v1015, %v1028
        %v1040 = vadd.f32 %v1016, %v1036
        %v1041 = vadd.f32 %v1017, %v1028
        %v1042 = vadd.f32 %v1018, %v1036
        %v1043 = vadd.f32 %v1019, %v1028
        %v1044 = vadd.f32 %v1020, %v1036
        %v1045 = vxor.u32 %v1037, 2147483648
        %v1046 = vxor.u32 %v1038, 2147483648
        %v1047 = vxor.u32 %v1039, 2147483648
        %v1048 = vxor.u32 %v1040, 2147483648
        %v1049 = vxor.u32 %v1041, 2147483648
        %v1050 = vxor.u32 %v1042, 2147483648
        %v1051 = vxor.u32 %v1043, 2147483648
        %v1052 = vxor.u32 %v1044, 2147483648
        %v1053 = vmul.f32 %v1045, 1.442695
        %v1054 = vpow.pop %v1053
        %v1055 = vmul.f32 %v1046, 1.442695
        %v1056 = vpow.pop %v1055
        %v1057 = vmul.f32 %v1047, 1.442695
        %v1058 = vpow.pop %v1057
        %v1059 = vmul.f32 %v1048, 1.442695
        %v1060 = vpow.pop %v1059
        %v1061 = vmul.f32 %v1049, 1.442695
        %v1062 = vpow.pop %v1061
        %v1063 = vmul.f32 %v1050, 1.442695
        %v1064 = vpow.pop %v1063
        %v1065 = vmul.f32 %v1051, 1.442695
        %v1066 = vpow.pop %v1065
        %v1067 = vmul.f32 %v1052, 1.442695
        %v1068 = vpow.pop %v1067
        %v1069 = vadd.f32 %v1054, 1.0
        %v1070 = vadd.f32 %v1056, 1.0
        %v1071 = vadd.f32 %v1058, 1.0
        %v1072 = vadd.f32 %v1060, 1.0
        %v1073 = vadd.f32 %v1062, 1.0
        %v1074 = vadd.f32 %v1064, 1.0
        %v1075 = vadd.f32 %v1066, 1.0
        %v1076 = vadd.f32 %v1068, 1.0
        %v1077 = vrcp.pop %v1069
        %v1078 = vmul.f32 1.0, %v1077
        %v1079 = vrcp.pop %v1070
        %v1080 = vmul.f32 1.0, %v1079
        %v1081 = vrcp.pop %v1071
        %v1082 = vmul.f32 1.0, %v1081
        %v1083 = vrcp.pop %v1072
        %v1084 = vmul.f32 1.0, %v1083
        %v1085 = vrcp.pop %v1073
        %v1086 = vmul.f32 1.0, %v1085
        %v1087 = vrcp.pop %v1074
        %v1088 = vmul.f32 1.0, %v1087
        %v1089 = vrcp.pop %v1075
        %v1090 = vmul.f32 1.0, %v1089
        %v1091 = vrcp.pop %v1076
        %v1092 = vmul.f32 1.0, %v1091
        %1094 = vset.pattern.permute.xlu0 0
        %1095 = vperm.xlu0 %1094, %v918
        %v1096 = vpop.permute.xlu0 %1095
        %1099 = vset.pattern.permute.xlu0 0
        %1100 = vperm.xlu0 %1099, %v920
        %v1101 = vpop.permute.xlu0 %1100
        %1104 = vset.pattern.permute.xlu0 0
        %1105 = vperm.xlu0 %1104, %v922
        %v1106 = vpop.permute.xlu0 %1105
        %1109 = vset.pattern.permute.xlu0 0
        %1110 = vperm.xlu0 %1109, %v924
        %v1111 = vpop.permute.xlu0 %1110
        %1114 = vset.pattern.permute.xlu0 0
        %1115 = vperm.xlu0 %1114, %v926
        %v1116 = vpop.permute.xlu0 %1115
        %1119 = vset.pattern.permute.xlu0 0
        %1120 = vperm.xlu0 %1119, %v928
        %v1121 = vpop.permute.xlu0 %1120
        %1124 = vset.pattern.permute.xlu0 0
        %1125 = vperm.xlu0 %1124, %v930
        %v1126 = vpop.permute.xlu0 %1125
        %1129 = vset.pattern.permute.xlu0 0
        %1130 = vperm.xlu0 %1129, %v932
        %v1131 = vpop.permute.xlu0 %1130
        %1134 = vset.pattern.permute.xlu0 0
        %1135 = vperm.xlu0 %1134, %v934
        %v1136 = vpop.permute.xlu0 %1135
        %1139 = vset.pattern.permute.xlu0 0
        %1140 = vperm.xlu0 %1139, %v936
        %v1141 = vpop.permute.xlu0 %1140
        %1144 = vset.pattern.permute.xlu0 0
        %1145 = vperm.xlu0 %1144, %v938
        %v1146 = vpop.permute.xlu0 %1145
        %1149 = vset.pattern.permute.xlu0 0
        %1150 = vperm.xlu0 %1149, %v940
        %v1151 = vpop.permute.xlu0 %1150
        %1154 = vset.pattern.permute.xlu0 0
        %1155 = vperm.xlu0 %1154, %v942
        %v1156 = vpop.permute.xlu0 %1155
        %1159 = vset.pattern.permute.xlu0 0
        %1160 = vperm.xlu0 %1159, %v944
        %v1161 = vpop.permute.xlu0 %1160
        %1164 = vset.pattern.permute.xlu0 0
        %1165 = vperm.xlu0 %1164, %v946
        %v1166 = vpop.permute.xlu0 %1165
        %1169 = vset.pattern.permute.xlu0 0
        %1170 = vperm.xlu0 %1169, %v948
        %v1171 = vpop.permute.xlu0 %1170
        %1174 = vset.pattern.permute.xlu0 0
        %1175 = vperm.xlu0 %1174, %v950
        %v1176 = vpop.permute.xlu0 %1175
        %1179 = vset.pattern.permute.xlu0 0
        %1180 = vperm.xlu0 %1179, %v952
        %v1181 = vpop.permute.xlu0 %1180
        %1184 = vset.pattern.permute.xlu0 0
        %1185 = vperm.xlu0 %1184, %v954
        %v1186 = vpop.permute.xlu0 %1185
        %1189 = vset.pattern.permute.xlu0 0
        %1190 = vperm.xlu0 %1189, %v956
        %v1191 = vpop.permute.xlu0 %1190
        %1194 = vset.pattern.permute.xlu0 0
        %1195 = vperm.xlu0 %1194, %v958
        %v1196 = vpop.permute.xlu0 %1195
        %1199 = vset.pattern.permute.xlu0 0
        %1200 = vperm.xlu0 %1199, %v960
        %v1201 = vpop.permute.xlu0 %1200
        %1204 = vset.pattern.permute.xlu0 0
        %1205 = vperm.xlu0 %1204, %v962
        %v1206 = vpop.permute.xlu0 %1205
        %1209 = vset.pattern.permute.xlu0 0
        %1210 = vperm.xlu0 %1209, %v964
        %v1211 = vpop.permute.xlu0 %1210
        %v1213 = vmul.f32 %v283, %v1096
        %v1214 = vmul.f32 %v284, %v1101
        %v1215 = vmul.f32 %v285, %v1106
        %v1216 = vmul.f32 %v286, %v1111
        %v1217 = vmul.f32 %v287, %v1116
        %v1218 = vmul.f32 %v288, %v1121
        %v1219 = vmul.f32 %v289, %v1126
        %v1220 = vmul.f32 %v290, %v1131
        %v1221 = vmul.f32 %v291, %v1136
        %v1222 = vmul.f32 %v292, %v1141
        %v1223 = vmul.f32 %v293, %v1146
        %v1224 = vmul.f32 %v294, %v1151
        %v1225 = vmul.f32 %v295, %v1156
        %v1226 = vmul.f32 %v296, %v1161
        %v1227 = vmul.f32 %v297, %v1166
        %v1228 = vmul.f32 %v298, %v1171
        %v1229 = vmul.f32 %v299, %v1176
        %v1230 = vmul.f32 %v300, %v1181
        %v1231 = vmul.f32 %v301, %v1186
        %v1232 = vmul.f32 %v302, %v1191
        %v1233 = vmul.f32 %v303, %v1196
        %v1234 = vmul.f32 %v304, %v1201
        %v1235 = vmul.f32 %v305, %v1206
        %v1236 = vmul.f32 %v306, %v1211
        %v1237 = vmul.f32 %v1213, %v1078
        %v1238 = vmul.f32 %v1214, %v1078
        %v1239 = vmul.f32 %v1215, %v1078
        %v1240 = vmul.f32 %v1216, %v1080
        %v1241 = vmul.f32 %v1217, %v1080
        %v1242 = vmul.f32 %v1218, %v1080
        %v1243 = vmul.f32 %v1219, %v1082
        %v1244 = vmul.f32 %v1220, %v1082
        %v1245 = vmul.f32 %v1221, %v1082
        %v1246 = vmul.f32 %v1222, %v1084
        %v1247 = vmul.f32 %v1223, %v1084
        %v1248 = vmul.f32 %v1224, %v1084
        %v1249 = vmul.f32 %v1225, %v1086
        %v1250 = vmul.f32 %v1226, %v1086
        %v1251 = vmul.f32 %v1227, %v1086
        %v1252 = vmul.f32 %v1228, %v1088
        %v1253 = vmul.f32 %v1229, %v1088
        %v1254 = vmul.f32 %v1230, %v1088
        %v1255 = vmul.f32 %v1231, %v1090
        %v1256 = vmul.f32 %v1232, %v1090
        %v1257 = vmul.f32 %v1233, %v1090
        %v1258 = vmul.f32 %v1234, %v1092
        %v1259 = vmul.f32 %v1235, %v1092
        %v1260 = vmul.f32 %v1236, %v1092
        %1285 = vrot.lane.b32.xlu0 %v1237, 127
        %v1286 = vpop.permute.xlu0 %1285
        %1287 = vrot.lane.b32.xlu0 %v1238, 127
        %v1288 = vpop.permute.xlu0 %1287
        %1289 = vrot.lane.b32.xlu0 %v1239, 127
        %v1290 = vpop.permute.xlu0 %1289
        %1291 = vrot.lane.b32.xlu0 %v1240, 127
        %v1292 = vpop.permute.xlu0 %1291
        %1293 = vrot.lane.b32.xlu0 %v1241, 127
        %v1294 = vpop.permute.xlu0 %1293
        %1295 = vrot.lane.b32.xlu0 %v1242, 127
        %v1296 = vpop.permute.xlu0 %1295
        %1297 = vrot.lane.b32.xlu0 %v1243, 127
        %v1298 = vpop.permute.xlu0 %1297
        %1299 = vrot.lane.b32.xlu0 %v1244, 127
        %v1300 = vpop.permute.xlu0 %1299
        %1301 = vrot.lane.b32.xlu0 %v1245, 127
        %v1302 = vpop.permute.xlu0 %1301
        %1303 = vrot.lane.b32.xlu0 %v1246, 127
        %v1304 = vpop.permute.xlu0 %1303
        %1305 = vrot.lane.b32.xlu0 %v1247, 127
        %v1306 = vpop.permute.xlu0 %1305
        %1307 = vrot.lane.b32.xlu0 %v1248, 127
        %v1308 = vpop.permute.xlu0 %1307
        %1309 = vrot.lane.b32.xlu0 %v1249, 127
        %v1310 = vpop.permute.xlu0 %1309
        %1311 = vrot.lane.b32.xlu0 %v1250, 127
        %v1312 = vpop.permute.xlu0 %1311
        %1313 = vrot.lane.b32.xlu0 %v1251, 127
        %v1314 = vpop.permute.xlu0 %1313
        %1315 = vrot.lane.b32.xlu0 %v1252, 127
        %v1316 = vpop.permute.xlu0 %1315
        %1317 = vrot.lane.b32.xlu0 %v1253, 127
        %v1318 = vpop.permute.xlu0 %1317
        %1319 = vrot.lane.b32.xlu0 %v1254, 127
        %v1320 = vpop.permute.xlu0 %1319
        %1321 = vrot.lane.b32.xlu0 %v1255, 127
        %v1322 = vpop.permute.xlu0 %1321
        %1323 = vrot.lane.b32.xlu0 %v1256, 127
        %v1324 = vpop.permute.xlu0 %1323
        %1325 = vrot.lane.b32.xlu0 %v1257, 127
        %v1326 = vpop.permute.xlu0 %1325
        %1327 = vrot.lane.b32.xlu0 %v1258, 127
        %v1328 = vpop.permute.xlu0 %1327
        %1329 = vrot.lane.b32.xlu0 %v1259, 127
        %v1330 = vpop.permute.xlu0 %1329
        %1331 = vrot.lane.b32.xlu0 %v1260, 127
        %v1332 = vpop.permute.xlu0 %1331
        %v1357 = vsel %vm451, %v1286, 0.0
        %1358 = vadd.xlane.f32.xlu0 %v1357
        %v1359 = vpop.xlane.xlu0 %1358
        %v1360 = vsel %vm455, %v1288, 0.0
        %1361 = vadd.xlane.f32.xlu0 %v1360
        %v1362 = vpop.xlane.xlu0 %1361
        %v1363 = vsel %vm459, %v1290, 0.0
        %1364 = vadd.xlane.f32.xlu0 %v1363
        %v1365 = vpop.xlane.xlu0 %1364
        %v1366 = vsel %vm451, %v1292, 0.0
        %1367 = vadd.xlane.f32.xlu0 %v1366
        %v1368 = vpop.xlane.xlu0 %1367
        %v1369 = vsel %vm455, %v1294, 0.0
        %1370 = vadd.xlane.f32.xlu0 %v1369
        %v1371 = vpop.xlane.xlu0 %1370
        %v1372 = vsel %vm459, %v1296, 0.0
        %1373 = vadd.xlane.f32.xlu0 %v1372
        %v1374 = vpop.xlane.xlu0 %1373
        %v1375 = vsel %vm451, %v1298, 0.0
        %1376 = vadd.xlane.f32.xlu0 %v1375
        %v1377 = vpop.xlane.xlu0 %1376
        %v1378 = vsel %vm455, %v1300, 0.0
        %1379 = vadd.xlane.f32.xlu0 %v1378
        %v1380 = vpop.xlane.xlu0 %1379
        %v1381 = vsel %vm459, %v1302, 0.0
        %1382 = vadd.xlane.f32.xlu0 %v1381
        %v1383 = vpop.xlane.xlu0 %1382
        %v1384 = vsel %vm451, %v1304, 0.0
        %1385 = vadd.xlane.f32.xlu0 %v1384
        %v1386 = vpop.xlane.xlu0 %1385
        %v1387 = vsel %vm455, %v1306, 0.0
        %1388 = vadd.xlane.f32.xlu0 %v1387
        %v1389 = vpop.xlane.xlu0 %1388
        %v1390 = vsel %vm459, %v1308, 0.0
        %1391 = vadd.xlane.f32.xlu0 %v1390
        %v1392 = vpop.xlane.xlu0 %1391
        %v1393 = vsel %vm451, %v1310, 0.0
        %1394 = vadd.xlane.f32.xlu0 %v1393
        %v1395 = vpop.xlane.xlu0 %1394
        %v1396 = vsel %vm455, %v1312, 0.0
        %1397 = vadd.xlane.f32.xlu0 %v1396
        %v1398 = vpop.xlane.xlu0 %1397
        %v1399 = vsel %vm459, %v1314, 0.0
        %1400 = vadd.xlane.f32.xlu0 %v1399
        %v1401 = vpop.xlane.xlu0 %1400
        %v1402 = vsel %vm451, %v1316, 0.0
        %1403 = vadd.xlane.f32.xlu0 %v1402
        %v1404 = vpop.xlane.xlu0 %1403
        %v1405 = vsel %vm455, %v1318, 0.0
        %1406 = vadd.xlane.f32.xlu0 %v1405
        %v1407 = vpop.xlane.xlu0 %1406
        %v1408 = vsel %vm459, %v1320, 0.0
        %1409 = vadd.xlane.f32.xlu0 %v1408
        %v1410 = vpop.xlane.xlu0 %1409
        %v1411 = vsel %vm451, %v1322, 0.0
        %1412 = vadd.xlane.f32.xlu0 %v1411
        %v1413 = vpop.xlane.xlu0 %1412
        %v1414 = vsel %vm455, %v1324, 0.0
        %1415 = vadd.xlane.f32.xlu0 %v1414
        %v1416 = vpop.xlane.xlu0 %1415
        %v1417 = vsel %vm459, %v1326, 0.0
        %1418 = vadd.xlane.f32.xlu0 %v1417
        %v1419 = vpop.xlane.xlu0 %1418
        %v1420 = vsel %vm451, %v1328, 0.0
        %1421 = vadd.xlane.f32.xlu0 %v1420
        %v1422 = vpop.xlane.xlu0 %1421
        %v1423 = vsel %vm455, %v1330, 0.0
        %1424 = vadd.xlane.f32.xlu0 %v1423
        %v1425 = vpop.xlane.xlu0 %1424
        %v1426 = vsel %vm459, %v1332, 0.0
        %1427 = vadd.xlane.f32.xlu0 %v1426
        %v1428 = vpop.xlane.xlu0 %1427
        %v1429 = vmul.f32 %v1359, %v526
        %v1430 = vmul.f32 %v1362, %v526
        %v1431 = vmul.f32 %v1365, %v526
        %v1432 = vmul.f32 %v1368, %v526
        %v1433 = vmul.f32 %v1371, %v526
        %v1434 = vmul.f32 %v1374, %v526
        %v1435 = vmul.f32 %v1377, %v526
        %v1436 = vmul.f32 %v1380, %v526
        %v1437 = vmul.f32 %v1383, %v526
        %v1438 = vmul.f32 %v1386, %v526
        %v1439 = vmul.f32 %v1389, %v526
        %v1440 = vmul.f32 %v1392, %v526
        %v1441 = vmul.f32 %v1395, %v526
        %v1442 = vmul.f32 %v1398, %v526
        %v1443 = vmul.f32 %v1401, %v526
        %v1444 = vmul.f32 %v1404, %v526
        %v1445 = vmul.f32 %v1407, %v526
        %v1446 = vmul.f32 %v1410, %v526
        %v1447 = vmul.f32 %v1413, %v526
        %v1448 = vmul.f32 %v1416, %v526
        %v1449 = vmul.f32 %v1419, %v526
        %v1450 = vmul.f32 %v1422, %v526
        %v1451 = vmul.f32 %v1425, %v526
        %v1452 = vmul.f32 %v1428, %v526
        %v1477 = vrot.slane %v1429, 1
        %v1478 = vrot.slane %v1430, 1
        %v1479 = vsel %vm551, %v1477, %v1478
        %v1480 = vrot.slane %v1431, 1
        %v1481 = vsel %vm551, %v1478, %v1480
        %v1482 = vrot.slane %v1432, 1
        %v1483 = vrot.slane %v1433, 1
        %v1484 = vsel %vm551, %v1482, %v1483
        %v1485 = vrot.slane %v1434, 1
        %v1486 = vsel %vm551, %v1483, %v1485
        %v1487 = vrot.slane %v1435, 1
        %v1488 = vrot.slane %v1436, 1
        %v1489 = vsel %vm551, %v1487, %v1488
        %v1490 = vrot.slane %v1437, 1
        %v1491 = vsel %vm551, %v1488, %v1490
        %v1492 = vrot.slane %v1438, 1
        %v1493 = vrot.slane %v1439, 1
        %v1494 = vsel %vm551, %v1492, %v1493
        %v1495 = vrot.slane %v1440, 1
        %v1496 = vsel %vm551, %v1493, %v1495
        %v1497 = vrot.slane %v1441, 1
        %v1498 = vrot.slane %v1442, 1
        %v1499 = vsel %vm551, %v1497, %v1498
        %v1500 = vrot.slane %v1443, 1
        %v1501 = vsel %vm551, %v1498, %v1500
        %v1502 = vrot.slane %v1444, 1
        %v1503 = vrot.slane %v1445, 1
        %v1504 = vsel %vm551, %v1502, %v1503
        %v1505 = vrot.slane %v1446, 1
        %v1506 = vsel %vm551, %v1503, %v1505
        %v1507 = vrot.slane %v1447, 1
        %v1508 = vrot.slane %v1448, 1
        %v1509 = vsel %vm551, %v1507, %v1508
        %v1510 = vrot.slane %v1449, 1
        %v1511 = vsel %vm551, %v1508, %v1510
        %v1512 = vrot.slane %v1450, 1
        %v1513 = vrot.slane %v1451, 1
        %v1514 = vsel %vm551, %v1512, %v1513
        %v1515 = vrot.slane %v1452, 1
        %v1516 = vsel %vm551, %v1513, %v1515
        %v1533 = vadd.f32 %v1479, %v1481
        %v1534 = vrot.slane %v1533, 4
        %v1535 = vadd.f32 %v1533, %v1534
        %v1536 = vrot.slane %v1535, 2
        %v1537 = vadd.f32 %v1535, %v1536
        %v1538 = vrot.slane %v1537, 1
        %v1539 = vadd.f32 %v1537, %v1538
        %v1540 = vadd.f32 %v1484, %v1486
        %v1541 = vrot.slane %v1540, 4
        %v1542 = vadd.f32 %v1540, %v1541
        %v1543 = vrot.slane %v1542, 2
        %v1544 = vadd.f32 %v1542, %v1543
        %v1545 = vrot.slane %v1544, 1
        %v1546 = vadd.f32 %v1544, %v1545
        %v1547 = vadd.f32 %v1489, %v1491
        %v1548 = vrot.slane %v1547, 4
        %v1549 = vadd.f32 %v1547, %v1548
        %v1550 = vrot.slane %v1549, 2
        %v1551 = vadd.f32 %v1549, %v1550
        %v1552 = vrot.slane %v1551, 1
        %v1553 = vadd.f32 %v1551, %v1552
        %v1554 = vadd.f32 %v1494, %v1496
        %v1555 = vrot.slane %v1554, 4
        %v1556 = vadd.f32 %v1554, %v1555
        %v1557 = vrot.slane %v1556, 2
        %v1558 = vadd.f32 %v1556, %v1557
        %v1559 = vrot.slane %v1558, 1
        %v1560 = vadd.f32 %v1558, %v1559
        %v1561 = vadd.f32 %v1499, %v1501
        %v1562 = vrot.slane %v1561, 4
        %v1563 = vadd.f32 %v1561, %v1562
        %v1564 = vrot.slane %v1563, 2
        %v1565 = vadd.f32 %v1563, %v1564
        %v1566 = vrot.slane %v1565, 1
        %v1567 = vadd.f32 %v1565, %v1566
        %v1568 = vadd.f32 %v1504, %v1506
        %v1569 = vrot.slane %v1568, 4
        %v1570 = vadd.f32 %v1568, %v1569
        %v1571 = vrot.slane %v1570, 2
        %v1572 = vadd.f32 %v1570, %v1571
        %v1573 = vrot.slane %v1572, 1
        %v1574 = vadd.f32 %v1572, %v1573
        %v1575 = vadd.f32 %v1509, %v1511
        %v1576 = vrot.slane %v1575, 4
        %v1577 = vadd.f32 %v1575, %v1576
        %v1578 = vrot.slane %v1577, 2
        %v1579 = vadd.f32 %v1577, %v1578
        %v1580 = vrot.slane %v1579, 1
        %v1581 = vadd.f32 %v1579, %v1580
        %v1582 = vadd.f32 %v1514, %v1516
        %v1583 = vrot.slane %v1582, 4
        %v1584 = vadd.f32 %v1582, %v1583
        %v1585 = vrot.slane %v1584, 2
        %v1586 = vadd.f32 %v1584, %v1585
        %v1587 = vrot.slane %v1586, 1
        %v1588 = vadd.f32 %v1586, %v1587
        %v1589 = vmul.f32 %v1539, %v526
        %v1590 = vmul.f32 %v1546, %v526
        %v1591 = vmul.f32 %v1553, %v526
        %v1592 = vmul.f32 %v1560, %v526
        %v1593 = vmul.f32 %v1567, %v526
        %v1594 = vmul.f32 %v1574, %v526
        %v1595 = vmul.f32 %v1581, %v526
        %v1596 = vmul.f32 %v1588, %v526
        %v1597 = vsub.f32 %v1237, %v1589
        %v1598 = vsub.f32 %v1238, %v1589
        %v1599 = vsub.f32 %v1239, %v1589
        %v1600 = vsub.f32 %v1240, %v1590
        %v1601 = vsub.f32 %v1241, %v1590
        %v1602 = vsub.f32 %v1242, %v1590
        %v1603 = vsub.f32 %v1243, %v1591
        %v1604 = vsub.f32 %v1244, %v1591
        %v1605 = vsub.f32 %v1245, %v1591
        %v1606 = vsub.f32 %v1246, %v1592
        %v1607 = vsub.f32 %v1247, %v1592
        %v1608 = vsub.f32 %v1248, %v1592
        %v1609 = vsub.f32 %v1249, %v1593
        %v1610 = vsub.f32 %v1250, %v1593
        %v1611 = vsub.f32 %v1251, %v1593
        %v1612 = vsub.f32 %v1252, %v1594
        %v1613 = vsub.f32 %v1253, %v1594
        %v1614 = vsub.f32 %v1254, %v1594
        %v1615 = vsub.f32 %v1255, %v1595
        %v1616 = vsub.f32 %v1256, %v1595
        %v1617 = vsub.f32 %v1257, %v1595
        %v1618 = vsub.f32 %v1258, %v1596
        %v1619 = vsub.f32 %v1259, %v1596
        %v1620 = vsub.f32 %v1260, %v1596
        %v1621 = vmul.f32 %v1597, %v1597
        %v1622 = vmul.f32 %v1598, %v1598
        %v1623 = vmul.f32 %v1599, %v1599
        %v1624 = vmul.f32 %v1600, %v1600
        %v1625 = vmul.f32 %v1601, %v1601
        %v1626 = vmul.f32 %v1602, %v1602
        %v1627 = vmul.f32 %v1603, %v1603
        %v1628 = vmul.f32 %v1604, %v1604
        %v1629 = vmul.f32 %v1605, %v1605
        %v1630 = vmul.f32 %v1606, %v1606
        %v1631 = vmul.f32 %v1607, %v1607
        %v1632 = vmul.f32 %v1608, %v1608
        %v1633 = vmul.f32 %v1609, %v1609
        %v1634 = vmul.f32 %v1610, %v1610
        %v1635 = vmul.f32 %v1611, %v1611
        %v1636 = vmul.f32 %v1612, %v1612
        %v1637 = vmul.f32 %v1613, %v1613
        %v1638 = vmul.f32 %v1614, %v1614
        %v1639 = vmul.f32 %v1615, %v1615
        %v1640 = vmul.f32 %v1616, %v1616
        %v1641 = vmul.f32 %v1617, %v1617
        %v1642 = vmul.f32 %v1618, %v1618
        %v1643 = vmul.f32 %v1619, %v1619
        %v1644 = vmul.f32 %v1620, %v1620
        %1669 = vrot.lane.b32.xlu0 %v1621, 127
        %v1670 = vpop.permute.xlu0 %1669
        %1671 = vrot.lane.b32.xlu0 %v1622, 127
        %v1672 = vpop.permute.xlu0 %1671
        %1673 = vrot.lane.b32.xlu0 %v1623, 127
        %v1674 = vpop.permute.xlu0 %1673
        %1675 = vrot.lane.b32.xlu0 %v1624, 127
        %v1676 = vpop.permute.xlu0 %1675
        %1677 = vrot.lane.b32.xlu0 %v1625, 127
        %v1678 = vpop.permute.xlu0 %1677
        %1679 = vrot.lane.b32.xlu0 %v1626, 127
        %v1680 = vpop.permute.xlu0 %1679
        %1681 = vrot.lane.b32.xlu0 %v1627, 127
        %v1682 = vpop.permute.xlu0 %1681
        %1683 = vrot.lane.b32.xlu0 %v1628, 127
        %v1684 = vpop.permute.xlu0 %1683
        %1685 = vrot.lane.b32.xlu0 %v1629, 127
        %v1686 = vpop.permute.xlu0 %1685
        %1687 = vrot.lane.b32.xlu0 %v1630, 127
        %v1688 = vpop.permute.xlu0 %1687
        %1689 = vrot.lane.b32.xlu0 %v1631, 127
        %v1690 = vpop.permute.xlu0 %1689
        %1691 = vrot.lane.b32.xlu0 %v1632, 127
        %v1692 = vpop.permute.xlu0 %1691
        %1693 = vrot.lane.b32.xlu0 %v1633, 127
        %v1694 = vpop.permute.xlu0 %1693
        %1695 = vrot.lane.b32.xlu0 %v1634, 127
        %v1696 = vpop.permute.xlu0 %1695
        %1697 = vrot.lane.b32.xlu0 %v1635, 127
        %v1698 = vpop.permute.xlu0 %1697
        %1699 = vrot.lane.b32.xlu0 %v1636, 127
        %v1700 = vpop.permute.xlu0 %1699
        %1701 = vrot.lane.b32.xlu0 %v1637, 127
        %v1702 = vpop.permute.xlu0 %1701
        %1703 = vrot.lane.b32.xlu0 %v1638, 127
        %v1704 = vpop.permute.xlu0 %1703
        %1705 = vrot.lane.b32.xlu0 %v1639, 127
        %v1706 = vpop.permute.xlu0 %1705
        %1707 = vrot.lane.b32.xlu0 %v1640, 127
        %v1708 = vpop.permute.xlu0 %1707
        %1709 = vrot.lane.b32.xlu0 %v1641, 127
        %v1710 = vpop.permute.xlu0 %1709
        %1711 = vrot.lane.b32.xlu0 %v1642, 127
        %v1712 = vpop.permute.xlu0 %1711
        %1713 = vrot.lane.b32.xlu0 %v1643, 127
        %v1714 = vpop.permute.xlu0 %1713
        %1715 = vrot.lane.b32.xlu0 %v1644, 127
        %v1716 = vpop.permute.xlu0 %1715
        %v1741 = vsel %vm451, %v1670, 0.0
        %1742 = vadd.xlane.f32.xlu0 %v1741
        %v1743 = vpop.xlane.xlu0 %1742
        %v1744 = vsel %vm455, %v1672, 0.0
        %1745 = vadd.xlane.f32.xlu0 %v1744
        %v1746 = vpop.xlane.xlu0 %1745
        %v1747 = vsel %vm459, %v1674, 0.0
        %1748 = vadd.xlane.f32.xlu0 %v1747
        %v1749 = vpop.xlane.xlu0 %1748
        %v1750 = vsel %vm451, %v1676, 0.0
        %1751 = vadd.xlane.f32.xlu0 %v1750
        %v1752 = vpop.xlane.xlu0 %1751
        %v1753 = vsel %vm455, %v1678, 0.0
        %1754 = vadd.xlane.f32.xlu0 %v1753
        %v1755 = vpop.xlane.xlu0 %1754
        %v1756 = vsel %vm459, %v1680, 0.0
        %1757 = vadd.xlane.f32.xlu0 %v1756
        %v1758 = vpop.xlane.xlu0 %1757
        %v1759 = vsel %vm451, %v1682, 0.0
        %1760 = vadd.xlane.f32.xlu0 %v1759
        %v1761 = vpop.xlane.xlu0 %1760
        %v1762 = vsel %vm455, %v1684, 0.0
        %1763 = vadd.xlane.f32.xlu0 %v1762
        %v1764 = vpop.xlane.xlu0 %1763
        %v1765 = vsel %vm459, %v1686, 0.0
        %1766 = vadd.xlane.f32.xlu0 %v1765
        %v1767 = vpop.xlane.xlu0 %1766
        %v1768 = vsel %vm451, %v1688, 0.0
        %1769 = vadd.xlane.f32.xlu0 %v1768
        %v1770 = vpop.xlane.xlu0 %1769
        %v1771 = vsel %vm455, %v1690, 0.0
        %1772 = vadd.xlane.f32.xlu0 %v1771
        %v1773 = vpop.xlane.xlu0 %1772
        %v1774 = vsel %vm459, %v1692, 0.0
        %1775 = vadd.xlane.f32.xlu0 %v1774
        %v1776 = vpop.xlane.xlu0 %1775
        %v1777 = vsel %vm451, %v1694, 0.0
        %1778 = vadd.xlane.f32.xlu0 %v1777
        %v1779 = vpop.xlane.xlu0 %1778
        %v1780 = vsel %vm455, %v1696, 0.0
        %1781 = vadd.xlane.f32.xlu0 %v1780
        %v1782 = vpop.xlane.xlu0 %1781
        %v1783 = vsel %vm459, %v1698, 0.0
        %1784 = vadd.xlane.f32.xlu0 %v1783
        %v1785 = vpop.xlane.xlu0 %1784
        %v1786 = vsel %vm451, %v1700, 0.0
        %1787 = vadd.xlane.f32.xlu0 %v1786
        %v1788 = vpop.xlane.xlu0 %1787
        %v1789 = vsel %vm455, %v1702, 0.0
        %1790 = vadd.xlane.f32.xlu0 %v1789
        %v1791 = vpop.xlane.xlu0 %1790
        %v1792 = vsel %vm459, %v1704, 0.0
        %1793 = vadd.xlane.f32.xlu0 %v1792
        %v1794 = vpop.xlane.xlu0 %1793
        %v1795 = vsel %vm451, %v1706, 0.0
        %1796 = vadd.xlane.f32.xlu0 %v1795
        %v1797 = vpop.xlane.xlu0 %1796
        %v1798 = vsel %vm455, %v1708, 0.0
        %1799 = vadd.xlane.f32.xlu0 %v1798
        %v1800 = vpop.xlane.xlu0 %1799
        %v1801 = vsel %vm459, %v1710, 0.0
        %1802 = vadd.xlane.f32.xlu0 %v1801
        %v1803 = vpop.xlane.xlu0 %1802
        %v1804 = vsel %vm451, %v1712, 0.0
        %1805 = vadd.xlane.f32.xlu0 %v1804
        %v1806 = vpop.xlane.xlu0 %1805
        %v1807 = vsel %vm455, %v1714, 0.0
        %1808 = vadd.xlane.f32.xlu0 %v1807
        %v1809 = vpop.xlane.xlu0 %1808
        %v1810 = vsel %vm459, %v1716, 0.0
        %1811 = vadd.xlane.f32.xlu0 %v1810
        %v1812 = vpop.xlane.xlu0 %1811
        %v1813 = vmul.f32 %v1743, %v526
        %v1814 = vmul.f32 %v1746, %v526
        %v1815 = vmul.f32 %v1749, %v526
        %v1816 = vmul.f32 %v1752, %v526
        %v1817 = vmul.f32 %v1755, %v526
        %v1818 = vmul.f32 %v1758, %v526
        %v1819 = vmul.f32 %v1761, %v526
        %v1820 = vmul.f32 %v1764, %v526
        %v1821 = vmul.f32 %v1767, %v526
        %v1822 = vmul.f32 %v1770, %v526
        %v1823 = vmul.f32 %v1773, %v526
        %v1824 = vmul.f32 %v1776, %v526
        %v1825 = vmul.f32 %v1779, %v526
        %v1826 = vmul.f32 %v1782, %v526
        %v1827 = vmul.f32 %v1785, %v526
        %v1828 = vmul.f32 %v1788, %v526
        %v1829 = vmul.f32 %v1791, %v526
        %v1830 = vmul.f32 %v1794, %v526
        %v1831 = vmul.f32 %v1797, %v526
        %v1832 = vmul.f32 %v1800, %v526
        %v1833 = vmul.f32 %v1803, %v526
        %v1834 = vmul.f32 %v1806, %v526
        %v1835 = vmul.f32 %v1809, %v526
        %v1836 = vmul.f32 %v1812, %v526
        %v1861 = vrot.slane %v1813, 1
        %v1862 = vrot.slane %v1814, 1
        %v1863 = vsel %vm551, %v1861, %v1862
        %v1864 = vrot.slane %v1815, 1
        %v1865 = vsel %vm551, %v1862, %v1864
        %v1866 = vrot.slane %v1816, 1
        %v1867 = vrot.slane %v1817, 1
        %v1868 = vsel %vm551, %v1866, %v1867
        %v1869 = vrot.slane %v1818, 1
        %v1870 = vsel %vm551, %v1867, %v1869
        %v1871 = vrot.slane %v1819, 1
        %v1872 = vrot.slane %v1820, 1
        %v1873 = vsel %vm551, %v1871, %v1872
        %v1874 = vrot.slane %v1821, 1
        %v1875 = vsel %vm551, %v1872, %v1874
        %v1876 = vrot.slane %v1822, 1
        %v1877 = vrot.slane %v1823, 1
        %v1878 = vsel %vm551, %v1876, %v1877
        %v1879 = vrot.slane %v1824, 1
        %v1880 = vsel %vm551, %v1877, %v1879
        %v1881 = vrot.slane %v1825, 1
        %v1882 = vrot.slane %v1826, 1
        %v1883 = vsel %vm551, %v1881, %v1882
        %v1884 = vrot.slane %v1827, 1
        %v1885 = vsel %vm551, %v1882, %v1884
        %v1886 = vrot.slane %v1828, 1
        %v1887 = vrot.slane %v1829, 1
        %v1888 = vsel %vm551, %v1886, %v1887
        %v1889 = vrot.slane %v1830, 1
        %v1890 = vsel %vm551, %v1887, %v1889
        %v1891 = vrot.slane %v1831, 1
        %v1892 = vrot.slane %v1832, 1
        %v1893 = vsel %vm551, %v1891, %v1892
        %v1894 = vrot.slane %v1833, 1
        %v1895 = vsel %vm551, %v1892, %v1894
        %v1896 = vrot.slane %v1834, 1
        %v1897 = vrot.slane %v1835, 1
        %v1898 = vsel %vm551, %v1896, %v1897
        %v1899 = vrot.slane %v1836, 1
        %v1900 = vsel %vm551, %v1897, %v1899
        %v1917 = vadd.f32 %v1863, %v1865
        %v1918 = vrot.slane %v1917, 4
        %v1919 = vadd.f32 %v1917, %v1918
        %v1920 = vrot.slane %v1919, 2
        %v1921 = vadd.f32 %v1919, %v1920
        %v1922 = vrot.slane %v1921, 1
        %v1923 = vadd.f32 %v1921, %v1922
        %v1924 = vadd.f32 %v1868, %v1870
        %v1925 = vrot.slane %v1924, 4
        %v1926 = vadd.f32 %v1924, %v1925
        %v1927 = vrot.slane %v1926, 2
        %v1928 = vadd.f32 %v1926, %v1927
        %v1929 = vrot.slane %v1928, 1
        %v1930 = vadd.f32 %v1928, %v1929
        %v1931 = vadd.f32 %v1873, %v1875
        %v1932 = vrot.slane %v1931, 4
        %v1933 = vadd.f32 %v1931, %v1932
        %v1934 = vrot.slane %v1933, 2
        %v1935 = vadd.f32 %v1933, %v1934
        %v1936 = vrot.slane %v1935, 1
        %v1937 = vadd.f32 %v1935, %v1936
        %v1938 = vadd.f32 %v1878, %v1880
        %v1939 = vrot.slane %v1938, 4
        %v1940 = vadd.f32 %v1938, %v1939
        %v1941 = vrot.slane %v1940, 2
        %v1942 = vadd.f32 %v1940, %v1941
        %v1943 = vrot.slane %v1942, 1
        %v1944 = vadd.f32 %v1942, %v1943
        %v1945 = vadd.f32 %v1883, %v1885
        %v1946 = vrot.slane %v1945, 4
        %v1947 = vadd.f32 %v1945, %v1946
        %v1948 = vrot.slane %v1947, 2
        %v1949 = vadd.f32 %v1947, %v1948
        %v1950 = vrot.slane %v1949, 1
        %v1951 = vadd.f32 %v1949, %v1950
        %v1952 = vadd.f32 %v1888, %v1890
        %v1953 = vrot.slane %v1952, 4
        %v1954 = vadd.f32 %v1952, %v1953
        %v1955 = vrot.slane %v1954, 2
        %v1956 = vadd.f32 %v1954, %v1955
        %v1957 = vrot.slane %v1956, 1
        %v1958 = vadd.f32 %v1956, %v1957
        %v1959 = vadd.f32 %v1893, %v1895
        %v1960 = vrot.slane %v1959, 4
        %v1961 = vadd.f32 %v1959, %v1960
        %v1962 = vrot.slane %v1961, 2
        %v1963 = vadd.f32 %v1961, %v1962
        %v1964 = vrot.slane %v1963, 1
        %v1965 = vadd.f32 %v1963, %v1964
        %v1966 = vadd.f32 %v1898, %v1900
        %v1967 = vrot.slane %v1966, 4
        %v1968 = vadd.f32 %v1966, %v1967
        %v1969 = vrot.slane %v1968, 2
        %v1970 = vadd.f32 %v1968, %v1969
        %v1971 = vrot.slane %v1970, 1
        %v1972 = vadd.f32 %v1970, %v1971
        %v1973 = vmul.f32 %v1923, %v526
        %v1974 = vmul.f32 %v1930, %v526
        %v1975 = vmul.f32 %v1937, %v526
        %v1976 = vmul.f32 %v1944, %v526
        %v1977 = vmul.f32 %v1951, %v526
        %v1978 = vmul.f32 %v1958, %v526
        %v1979 = vmul.f32 %v1965, %v526
        %v1980 = vmul.f32 %v1972, %v526
        %v1981 = vadd.f32 %v1973, 1e-05
        %v1982 = vadd.f32 %v1974, 1e-05
        %v1983 = vadd.f32 %v1975, 1e-05
        %v1984 = vadd.f32 %v1976, 1e-05
        %v1985 = vadd.f32 %v1977, 1e-05
        %v1986 = vadd.f32 %v1978, 1e-05
        %v1987 = vadd.f32 %v1979, 1e-05
        %v1988 = vadd.f32 %v1980, 1e-05
        %v1989 = vrsqrt.pop %v1981
        %v1990 = vrsqrt.pop %v1982
        %v1991 = vrsqrt.pop %v1983
        %v1992 = vrsqrt.pop %v1984
        %v1993 = vrsqrt.pop %v1985
        %v1994 = vrsqrt.pop %v1986
        %v1995 = vrsqrt.pop %v1987
        %v1996 = vrsqrt.pop %v1988
        %v1997 = vmul.f32 %v1597, %v1989
        %v1998 = vmul.f32 %v1598, %v1989
        %v1999 = vmul.f32 %v1599, %v1989
        %v2000 = vmul.f32 %v1600, %v1990
        %v2001 = vmul.f32 %v1601, %v1990
        %v2002 = vmul.f32 %v1602, %v1990
        %v2003 = vmul.f32 %v1603, %v1991
        %v2004 = vmul.f32 %v1604, %v1991
        %v2005 = vmul.f32 %v1605, %v1991
        %v2006 = vmul.f32 %v1606, %v1992
        %v2007 = vmul.f32 %v1607, %v1992
        %v2008 = vmul.f32 %v1608, %v1992
        %v2009 = vmul.f32 %v1609, %v1993
        %v2010 = vmul.f32 %v1610, %v1993
        %v2011 = vmul.f32 %v1611, %v1993
        %v2012 = vmul.f32 %v1612, %v1994
        %v2013 = vmul.f32 %v1613, %v1994
        %v2014 = vmul.f32 %v1614, %v1994
        %v2015 = vmul.f32 %v1615, %v1995
        %v2016 = vmul.f32 %v1616, %v1995
        %v2017 = vmul.f32 %v1617, %v1995
        %v2018 = vmul.f32 %v1618, %v1996
        %v2019 = vmul.f32 %v1619, %v1996
        %v2020 = vmul.f32 %v1620, %v1996
        %v2023 = vlaneseq
        %v2024 = vshrl.u32 %v2023, 7
        %v2025 = vsub.s32 0, %v2024
        %v2026 = vrot.slane %v351, %v2025
        %v2027 = vlaneseq
        %v2028 = vshrl.u32 %v2027, 7
        %v2029 = vsub.s32 0, %v2028
        %v2030 = vrot.slane %v352, %v2029
        %2031 = vset.pattern.permute.xlu0 0
        %2032 = vperm.xlu0 %2031, %v2026
        %v2033 = vpop.permute.xlu0 %2032
        %2035 = vset.pattern.permute.xlu0 0
        %2036 = vperm.xlu0 %2035, %v2030
        %v2037 = vpop.permute.xlu0 %2036
        %v2039 = vmul.f32 %v1997, %v2033
        %v2040 = vmul.f32 %v1998, %v2033
        %v2041 = vmul.f32 %v1999, %v2033
        %v2042 = vmul.f32 %v2000, %v2037
        %v2043 = vmul.f32 %v2001, %v2037
        %v2044 = vmul.f32 %v2002, %v2037
        %v2045 = vmul.f32 %v2003, %v2033
        %v2046 = vmul.f32 %v2004, %v2033
        %v2047 = vmul.f32 %v2005, %v2033
        %v2048 = vmul.f32 %v2006, %v2037
        %v2049 = vmul.f32 %v2007, %v2037
        %v2050 = vmul.f32 %v2008, %v2037
        %v2051 = vmul.f32 %v2009, %v2033
        %v2052 = vmul.f32 %v2010, %v2033
        %v2053 = vmul.f32 %v2011, %v2033
        %v2054 = vmul.f32 %v2012, %v2037
        %v2055 = vmul.f32 %v2013, %v2037
        %v2056 = vmul.f32 %v2014, %v2037
        %v2057 = vmul.f32 %v2015, %v2033
        %v2058 = vmul.f32 %v2016, %v2033
        %v2059 = vmul.f32 %v2017, %v2033
        %v2060 = vmul.f32 %v2018, %v2037
        %v2061 = vmul.f32 %v2019, %v2037
        %v2062 = vmul.f32 %v2020, %v2037
        %v2065 = vlaneseq
        %v2066 = vshrl.u32 %v2065, 7
        %v2067 = vsub.s32 0, %v2066
        %v2068 = vrot.slane %v353, %v2067
        %v2069 = vlaneseq
        %v2070 = vshrl.u32 %v2069, 7
        %v2071 = vsub.s32 0, %v2070
        %v2072 = vrot.slane %v354, %v2071
        %2073 = vset.pattern.permute.xlu0 0
        %2074 = vperm.xlu0 %2073, %v2068
        %v2075 = vpop.permute.xlu0 %2074
        %2077 = vset.pattern.permute.xlu0 0
        %2078 = vperm.xlu0 %2077, %v2072
        %v2079 = vpop.permute.xlu0 %2078
        %v2081 = vadd.f32 %v2039, %v2075
        %v2082 = vadd.f32 %v2040, %v2075
        %v2083 = vadd.f32 %v2041, %v2075
        %v2084 = vadd.f32 %v2042, %v2079
        %v2085 = vadd.f32 %v2043, %v2079
        %v2086 = vadd.f32 %v2044, %v2079
        %v2087 = vadd.f32 %v2045, %v2075
        %v2088 = vadd.f32 %v2046, %v2075
        %v2089 = vadd.f32 %v2047, %v2075
        %v2090 = vadd.f32 %v2048, %v2079
        %v2091 = vadd.f32 %v2049, %v2079
        %v2092 = vadd.f32 %v2050, %v2079
        %v2093 = vadd.f32 %v2051, %v2075
        %v2094 = vadd.f32 %v2052, %v2075
        %v2095 = vadd.f32 %v2053, %v2075
        %v2096 = vadd.f32 %v2054, %v2079
        %v2097 = vadd.f32 %v2055, %v2079
        %v2098 = vadd.f32 %v2056, %v2079
        %v2099 = vadd.f32 %v2057, %v2075
        %v2100 = vadd.f32 %v2058, %v2075
        %v2101 = vadd.f32 %v2059, %v2075
        %v2102 = vadd.f32 %v2060, %v2079
        %v2103 = vadd.f32 %v2061, %v2079
        %v2104 = vadd.f32 %v2062, %v2079
        %v2107 = vlaneseq
        %v2108 = vshrl.u32 %v2107, 7
        %v2109 = vsub.s32 0, %v2108
        %v2110 = vrot.slane %v313, %v2109
        %v2111 = vlaneseq
        %v2112 = vshrl.u32 %v2111, 7
        %v2113 = vsub.s32 0, %v2112
        %v2114 = vrot.slane %v314, %v2113
        %2115 = vset.pattern.permute.xlu0 0
        %2116 = vperm.xlu0 %2115, %v2110
        %v2117 = vpop.permute.xlu0 %2116
        %2119 = vset.pattern.permute.xlu0 0
        %2120 = vperm.xlu0 %2119, %v2114
        %v2121 = vpop.permute.xlu0 %2120
        %v2123 = vmul.f32 %v2117, %v283
        %v2124 = vmul.f32 %v2117, %v284
        %v2125 = vmul.f32 %v2121, %v283
        %v2126 = vmul.f32 %v2121, %v284
        %v2127 = vmul.f32 %v2117, %v289
        %v2128 = vmul.f32 %v2117, %v290
        %v2129 = vmul.f32 %v2121, %v289
        %v2130 = vmul.f32 %v2121, %v290
        %v2131 = vmul.f32 %v2117, %v295
        %v2132 = vmul.f32 %v2117, %v296
        %v2133 = vmul.f32 %v2121, %v295
        %v2134 = vmul.f32 %v2121, %v296
        %v2135 = vmul.f32 %v2117, %v301
        %v2136 = vmul.f32 %v2117, %v302
        %v2137 = vmul.f32 %v2121, %v301
        %v2138 = vmul.f32 %v2121, %v302
        %v2141 = vlaneseq
        %v2142 = vshrl.u32 %v2141, 7
        %v2143 = vsub.s32 0, %v2142
        %v2144 = vrot.slane %v315, %v2143
        %v2145 = vlaneseq
        %v2146 = vshrl.u32 %v2145, 7
        %v2147 = vsub.s32 0, %v2146
        %v2148 = vrot.slane %v316, %v2147
        %2149 = vset.pattern.permute.xlu0 0
        %2150 = vperm.xlu0 %2149, %v2144
        %v2151 = vpop.permute.xlu0 %2150
        %2153 = vset.pattern.permute.xlu0 0
        %2154 = vperm.xlu0 %2153, %v2148
        %v2155 = vpop.permute.xlu0 %2154
        %v2157 = vmul.f32 %v2151, %v286
        %v2158 = vmul.f32 %v2151, %v287
        %v2159 = vmul.f32 %v2155, %v286
        %v2160 = vmul.f32 %v2155, %v287
        %v2161 = vmul.f32 %v2151, %v292
        %v2162 = vmul.f32 %v2151, %v293
        %v2163 = vmul.f32 %v2155, %v292
        %v2164 = vmul.f32 %v2155, %v293
        %v2165 = vmul.f32 %v2151, %v298
        %v2166 = vmul.f32 %v2151, %v299
        %v2167 = vmul.f32 %v2155, %v298
        %v2168 = vmul.f32 %v2155, %v299
        %v2169 = vmul.f32 %v2151, %v304
        %v2170 = vmul.f32 %v2151, %v305
        %v2171 = vmul.f32 %v2155, %v304
        %v2172 = vmul.f32 %v2155, %v305
        %v2173 = vadd.f32 %v2123, %v2157
        %v2174 = vadd.f32 %v2124, %v2158
        %v2175 = vadd.f32 %v2125, %v2159
        %v2176 = vadd.f32 %v2126, %v2160
        %v2177 = vadd.f32 %v2127, %v2161
        %v2178 = vadd.f32 %v2128, %v2162
        %v2179 = vadd.f32 %v2129, %v2163
        %v2180 = vadd.f32 %v2130, %v2164
        %v2181 = vadd.f32 %v2131, %v2165
        %v2182 = vadd.f32 %v2132, %v2166
        %v2183 = vadd.f32 %v2133, %v2167
        %v2184 = vadd.f32 %v2134, %v2168
        %v2185 = vadd.f32 %v2135, %v2169
        %v2186 = vadd.f32 %v2136, %v2170
        %v2187 = vadd.f32 %v2137, %v2171
        %v2188 = vadd.f32 %v2138, %v2172
        %v2191 = vlaneseq
        %v2192 = vshrl.u32 %v2191, 7
        %v2193 = vsub.s32 0, %v2192
        %v2194 = vrot.slane %v317, %v2193
        %v2195 = vlaneseq
        %v2196 = vshrl.u32 %v2195, 7
        %v2197 = vsub.s32 0, %v2196
        %v2198 = vrot.slane %v318, %v2197
        %2199 = vset.pattern.permute.xlu0 0
        %2200 = vperm.xlu0 %2199, %v2194
        %v2201 = vpop.permute.xlu0 %2200
        %2203 = vset.pattern.permute.xlu0 0
        %2204 = vperm.xlu0 %2203, %v2198
        %v2205 = vpop.permute.xlu0 %2204
        %v2207 = vmul.f32 %v2201, %v283
        %v2208 = vmul.f32 %v2201, %v284
        %v2209 = vmul.f32 %v2205, %v283
        %v2210 = vmul.f32 %v2205, %v284
        %v2211 = vmul.f32 %v2201, %v289
        %v2212 = vmul.f32 %v2201, %v290
        %v2213 = vmul.f32 %v2205, %v289
        %v2214 = vmul.f32 %v2205, %v290
        %v2215 = vmul.f32 %v2201, %v295
        %v2216 = vmul.f32 %v2201, %v296
        %v2217 = vmul.f32 %v2205, %v295
        %v2218 = vmul.f32 %v2205, %v296
        %v2219 = vmul.f32 %v2201, %v301
        %v2220 = vmul.f32 %v2201, %v302
        %v2221 = vmul.f32 %v2205, %v301
        %v2222 = vmul.f32 %v2205, %v302
        %2239 = vrot.lane.b32.xlu0 %v2207, 127
        %v2240 = vpop.permute.xlu0 %2239
        %2241 = vrot.lane.b32.xlu0 %v2208, 127
        %v2242 = vpop.permute.xlu0 %2241
        %2243 = vrot.lane.b32.xlu0 %v2209, 127
        %v2244 = vpop.permute.xlu0 %2243
        %2245 = vrot.lane.b32.xlu0 %v2210, 127
        %v2246 = vpop.permute.xlu0 %2245
        %2247 = vrot.lane.b32.xlu0 %v2211, 127
        %v2248 = vpop.permute.xlu0 %2247
        %2249 = vrot.lane.b32.xlu0 %v2212, 127
        %v2250 = vpop.permute.xlu0 %2249
        %2251 = vrot.lane.b32.xlu0 %v2213, 127
        %v2252 = vpop.permute.xlu0 %2251
        %2253 = vrot.lane.b32.xlu0 %v2214, 127
        %v2254 = vpop.permute.xlu0 %2253
        %2255 = vrot.lane.b32.xlu0 %v2215, 127
        %v2256 = vpop.permute.xlu0 %2255
        %2257 = vrot.lane.b32.xlu0 %v2216, 127
        %v2258 = vpop.permute.xlu0 %2257
        %2259 = vrot.lane.b32.xlu0 %v2217, 127
        %v2260 = vpop.permute.xlu0 %2259
        %2261 = vrot.lane.b32.xlu0 %v2218, 127
        %v2262 = vpop.permute.xlu0 %2261
        %2263 = vrot.lane.b32.xlu0 %v2219, 127
        %v2264 = vpop.permute.xlu0 %2263
        %2265 = vrot.lane.b32.xlu0 %v2220, 127
        %v2266 = vpop.permute.xlu0 %2265
        %2267 = vrot.lane.b32.xlu0 %v2221, 127
        %v2268 = vpop.permute.xlu0 %2267
        %2269 = vrot.lane.b32.xlu0 %v2222, 127
        %v2270 = vpop.permute.xlu0 %2269
        %v2287 = vadd.f32 %v2173, %v2240
        %v2288 = vadd.f32 %v2174, %v2242
        %v2289 = vadd.f32 %v2175, %v2244
        %v2290 = vadd.f32 %v2176, %v2246
        %v2291 = vadd.f32 %v2177, %v2248
        %v2292 = vadd.f32 %v2178, %v2250
        %v2293 = vadd.f32 %v2179, %v2252
        %v2294 = vadd.f32 %v2180, %v2254
        %v2295 = vadd.f32 %v2181, %v2256
        %v2296 = vadd.f32 %v2182, %v2258
        %v2297 = vadd.f32 %v2183, %v2260
        %v2298 = vadd.f32 %v2184, %v2262
        %v2299 = vadd.f32 %v2185, %v2264
        %v2300 = vadd.f32 %v2186, %v2266
        %v2301 = vadd.f32 %v2187, %v2268
        %v2302 = vadd.f32 %v2188, %v2270
        %v2305 = vlaneseq
        %v2306 = vshrl.u32 %v2305, 7
        %v2307 = vsub.s32 0, %v2306
        %v2308 = vrot.slane %v319, %v2307
        %v2309 = vlaneseq
        %v2310 = vshrl.u32 %v2309, 7
        %v2311 = vsub.s32 0, %v2310
        %v2312 = vrot.slane %v320, %v2311
        %2313 = vset.pattern.permute.xlu0 0
        %2314 = vperm.xlu0 %2313, %v2308
        %v2315 = vpop.permute.xlu0 %2314
        %2317 = vset.pattern.permute.xlu0 0
        %2318 = vperm.xlu0 %2317, %v2312
        %v2319 = vpop.permute.xlu0 %2318
        %v2321 = vmul.f32 %v2315, %v286
        %v2322 = vmul.f32 %v2315, %v287
        %v2323 = vmul.f32 %v2319, %v286
        %v2324 = vmul.f32 %v2319, %v287
        %v2325 = vmul.f32 %v2315, %v292
        %v2326 = vmul.f32 %v2315, %v293
        %v2327 = vmul.f32 %v2319, %v292
        %v2328 = vmul.f32 %v2319, %v293
        %v2329 = vmul.f32 %v2315, %v298
        %v2330 = vmul.f32 %v2315, %v299
        %v2331 = vmul.f32 %v2319, %v298
        %v2332 = vmul.f32 %v2319, %v299
        %v2333 = vmul.f32 %v2315, %v304
        %v2334 = vmul.f32 %v2315, %v305
        %v2335 = vmul.f32 %v2319, %v304
        %v2336 = vmul.f32 %v2319, %v305
        %2353 = vrot.lane.b32.xlu0 %v2321, 127
        %v2354 = vpop.permute.xlu0 %2353
        %2355 = vrot.lane.b32.xlu0 %v2322, 127
        %v2356 = vpop.permute.xlu0 %2355
        %2357 = vrot.lane.b32.xlu0 %v2323, 127
        %v2358 = vpop.permute.xlu0 %2357
        %2359 = vrot.lane.b32.xlu0 %v2324, 127
        %v2360 = vpop.permute.xlu0 %2359
        %2361 = vrot.lane.b32.xlu0 %v2325, 127
        %v2362 = vpop.permute.xlu0 %2361
        %2363 = vrot.lane.b32.xlu0 %v2326, 127
        %v2364 = vpop.permute.xlu0 %2363
        %2365 = vrot.lane.b32.xlu0 %v2327, 127
        %v2366 = vpop.permute.xlu0 %2365
        %2367 = vrot.lane.b32.xlu0 %v2328, 127
        %v2368 = vpop.permute.xlu0 %2367
        %2369 = vrot.lane.b32.xlu0 %v2329, 127
        %v2370 = vpop.permute.xlu0 %2369
        %2371 = vrot.lane.b32.xlu0 %v2330, 127
        %v2372 = vpop.permute.xlu0 %2371
        %2373 = vrot.lane.b32.xlu0 %v2331, 127
        %v2374 = vpop.permute.xlu0 %2373
        %2375 = vrot.lane.b32.xlu0 %v2332, 127
        %v2376 = vpop.permute.xlu0 %2375
        %2377 = vrot.lane.b32.xlu0 %v2333, 127
        %v2378 = vpop.permute.xlu0 %2377
        %2379 = vrot.lane.b32.xlu0 %v2334, 127
        %v2380 = vpop.permute.xlu0 %2379
        %2381 = vrot.lane.b32.xlu0 %v2335, 127
        %v2382 = vpop.permute.xlu0 %2381
        %2383 = vrot.lane.b32.xlu0 %v2336, 127
        %v2384 = vpop.permute.xlu0 %2383
        %v2401 = vadd.f32 %v2287, %v2354
        %v2402 = vadd.f32 %v2288, %v2356
        %v2403 = vadd.f32 %v2289, %v2358
        %v2404 = vadd.f32 %v2290, %v2360
        %v2405 = vadd.f32 %v2291, %v2362
        %v2406 = vadd.f32 %v2292, %v2364
        %v2407 = vadd.f32 %v2293, %v2366
        %v2408 = vadd.f32 %v2294, %v2368
        %v2409 = vadd.f32 %v2295, %v2370
        %v2410 = vadd.f32 %v2296, %v2372
        %v2411 = vadd.f32 %v2297, %v2374
        %v2412 = vadd.f32 %v2298, %v2376
        %v2413 = vadd.f32 %v2299, %v2378
        %v2414 = vadd.f32 %v2300, %v2380
        %v2415 = vadd.f32 %v2301, %v2382
        %v2416 = vadd.f32 %v2302, %v2384
        %v2419 = vlaneseq
        %v2420 = vshrl.u32 %v2419, 7
        %v2421 = vsub.s32 0, %v2420
        %v2422 = vrot.slane %v321, %v2421
        %v2423 = vlaneseq
        %v2424 = vshrl.u32 %v2423, 7
        %v2425 = vsub.s32 0, %v2424
        %v2426 = vrot.slane %v322, %v2425
        %2427 = vset.pattern.permute.xlu0 0
        %2428 = vperm.xlu0 %2427, %v2422
        %v2429 = vpop.permute.xlu0 %2428
        %2431 = vset.pattern.permute.xlu0 0
        %2432 = vperm.xlu0 %2431, %v2426
        %v2433 = vpop.permute.xlu0 %2432
        %v2435 = vmul.f32 %v2429, %v283
        %v2436 = vmul.f32 %v2429, %v284
        %v2437 = vmul.f32 %v2433, %v283
        %v2438 = vmul.f32 %v2433, %v284
        %v2439 = vmul.f32 %v2429, %v289
        %v2440 = vmul.f32 %v2429, %v290
        %v2441 = vmul.f32 %v2433, %v289
        %v2442 = vmul.f32 %v2433, %v290
        %v2443 = vmul.f32 %v2429, %v295
        %v2444 = vmul.f32 %v2429, %v296
        %v2445 = vmul.f32 %v2433, %v295
        %v2446 = vmul.f32 %v2433, %v296
        %v2447 = vmul.f32 %v2429, %v301
        %v2448 = vmul.f32 %v2429, %v302
        %v2449 = vmul.f32 %v2433, %v301
        %v2450 = vmul.f32 %v2433, %v302
        %2467 = vrot.lane.b32.xlu0 %v2435, 126
        %v2468 = vpop.permute.xlu0 %2467
        %2469 = vrot.lane.b32.xlu0 %v2436, 126
        %v2470 = vpop.permute.xlu0 %2469
        %2471 = vrot.lane.b32.xlu0 %v2437, 126
        %v2472 = vpop.permute.xlu0 %2471
        %2473 = vrot.lane.b32.xlu0 %v2438, 126
        %v2474 = vpop.permute.xlu0 %2473
        %2475 = vrot.lane.b32.xlu0 %v2439, 126
        %v2476 = vpop.permute.xlu0 %2475
        %2477 = vrot.lane.b32.xlu0 %v2440, 126
        %v2478 = vpop.permute.xlu0 %2477
        %2479 = vrot.lane.b32.xlu0 %v2441, 126
        %v2480 = vpop.permute.xlu0 %2479
        %2481 = vrot.lane.b32.xlu0 %v2442, 126
        %v2482 = vpop.permute.xlu0 %2481
        %2483 = vrot.lane.b32.xlu0 %v2443, 126
        %v2484 = vpop.permute.xlu0 %2483
        %2485 = vrot.lane.b32.xlu0 %v2444, 126
        %v2486 = vpop.permute.xlu0 %2485
        %2487 = vrot.lane.b32.xlu0 %v2445, 126
        %v2488 = vpop.permute.xlu0 %2487
        %2489 = vrot.lane.b32.xlu0 %v2446, 126
        %v2490 = vpop.permute.xlu0 %2489
        %2491 = vrot.lane.b32.xlu0 %v2447, 126
        %v2492 = vpop.permute.xlu0 %2491
        %2493 = vrot.lane.b32.xlu0 %v2448, 126
        %v2494 = vpop.permute.xlu0 %2493
        %2495 = vrot.lane.b32.xlu0 %v2449, 126
        %v2496 = vpop.permute.xlu0 %2495
        %2497 = vrot.lane.b32.xlu0 %v2450, 126
        %v2498 = vpop.permute.xlu0 %2497
        %v2515 = vadd.f32 %v2401, %v2468
        %v2516 = vadd.f32 %v2402, %v2470
        %v2517 = vadd.f32 %v2403, %v2472
        %v2518 = vadd.f32 %v2404, %v2474
        %v2519 = vadd.f32 %v2405, %v2476
        %v2520 = vadd.f32 %v2406, %v2478
        %v2521 = vadd.f32 %v2407, %v2480
        %v2522 = vadd.f32 %v2408, %v2482
        %v2523 = vadd.f32 %v2409, %v2484
        %v2524 = vadd.f32 %v2410, %v2486
        %v2525 = vadd.f32 %v2411, %v2488
        %v2526 = vadd.f32 %v2412, %v2490
        %v2527 = vadd.f32 %v2413, %v2492
        %v2528 = vadd.f32 %v2414, %v2494
        %v2529 = vadd.f32 %v2415, %v2496
        %v2530 = vadd.f32 %v2416, %v2498
        %v2533 = vlaneseq
        %v2534 = vshrl.u32 %v2533, 7
        %v2535 = vsub.s32 0, %v2534
        %v2536 = vrot.slane %v323, %v2535
        %v2537 = vlaneseq
        %v2538 = vshrl.u32 %v2537, 7
        %v2539 = vsub.s32 0, %v2538
        %v2540 = vrot.slane %v324, %v2539
        %2541 = vset.pattern.permute.xlu0 0
        %2542 = vperm.xlu0 %2541, %v2536
        %v2543 = vpop.permute.xlu0 %2542
        %2545 = vset.pattern.permute.xlu0 0
        %2546 = vperm.xlu0 %2545, %v2540
        %v2547 = vpop.permute.xlu0 %2546
        %v2549 = vmul.f32 %v2543, %v286
        %v2550 = vmul.f32 %v2543, %v287
        %v2551 = vmul.f32 %v2547, %v286
        %v2552 = vmul.f32 %v2547, %v287
        %v2553 = vmul.f32 %v2543, %v292
        %v2554 = vmul.f32 %v2543, %v293
        %v2555 = vmul.f32 %v2547, %v292
        %v2556 = vmul.f32 %v2547, %v293
        %v2557 = vmul.f32 %v2543, %v298
        %v2558 = vmul.f32 %v2543, %v299
        %v2559 = vmul.f32 %v2547, %v298
        %v2560 = vmul.f32 %v2547, %v299
        %v2561 = vmul.f32 %v2543, %v304
        %v2562 = vmul.f32 %v2543, %v305
        %v2563 = vmul.f32 %v2547, %v304
        %v2564 = vmul.f32 %v2547, %v305
        %2581 = vrot.lane.b32.xlu0 %v2549, 126
        %v2582 = vpop.permute.xlu0 %2581
        %2583 = vrot.lane.b32.xlu0 %v2550, 126
        %v2584 = vpop.permute.xlu0 %2583
        %2585 = vrot.lane.b32.xlu0 %v2551, 126
        %v2586 = vpop.permute.xlu0 %2585
        %2587 = vrot.lane.b32.xlu0 %v2552, 126
        %v2588 = vpop.permute.xlu0 %2587
        %2589 = vrot.lane.b32.xlu0 %v2553, 126
        %v2590 = vpop.permute.xlu0 %2589
        %2591 = vrot.lane.b32.xlu0 %v2554, 126
        %v2592 = vpop.permute.xlu0 %2591
        %2593 = vrot.lane.b32.xlu0 %v2555, 126
        %v2594 = vpop.permute.xlu0 %2593
        %2595 = vrot.lane.b32.xlu0 %v2556, 126
        %v2596 = vpop.permute.xlu0 %2595
        %2597 = vrot.lane.b32.xlu0 %v2557, 126
        %v2598 = vpop.permute.xlu0 %2597
        %2599 = vrot.lane.b32.xlu0 %v2558, 126
        %v2600 = vpop.permute.xlu0 %2599
        %2601 = vrot.lane.b32.xlu0 %v2559, 126
        %v2602 = vpop.permute.xlu0 %2601
        %2603 = vrot.lane.b32.xlu0 %v2560, 126
        %v2604 = vpop.permute.xlu0 %2603
        %2605 = vrot.lane.b32.xlu0 %v2561, 126
        %v2606 = vpop.permute.xlu0 %2605
        %2607 = vrot.lane.b32.xlu0 %v2562, 126
        %v2608 = vpop.permute.xlu0 %2607
        %2609 = vrot.lane.b32.xlu0 %v2563, 126
        %v2610 = vpop.permute.xlu0 %2609
        %2611 = vrot.lane.b32.xlu0 %v2564, 126
        %v2612 = vpop.permute.xlu0 %2611
        %v2629 = vadd.f32 %v2515, %v2582
        %v2630 = vadd.f32 %v2516, %v2584
        %v2631 = vadd.f32 %v2517, %v2586
        %v2632 = vadd.f32 %v2518, %v2588
        %v2633 = vadd.f32 %v2519, %v2590
        %v2634 = vadd.f32 %v2520, %v2592
        %v2635 = vadd.f32 %v2521, %v2594
        %v2636 = vadd.f32 %v2522, %v2596
        %v2637 = vadd.f32 %v2523, %v2598
        %v2638 = vadd.f32 %v2524, %v2600
        %v2639 = vadd.f32 %v2525, %v2602
        %v2640 = vadd.f32 %v2526, %v2604
        %v2641 = vadd.f32 %v2527, %v2606
        %v2642 = vadd.f32 %v2528, %v2608
        %v2643 = vadd.f32 %v2529, %v2610
        %v2644 = vadd.f32 %v2530, %v2612
        %v2647 = vlaneseq
        %v2648 = vshrl.u32 %v2647, 7
        %v2649 = vsub.s32 0, %v2648
        %v2650 = vrot.slane %v325, %v2649
        %v2651 = vlaneseq
        %v2652 = vshrl.u32 %v2651, 7
        %v2653 = vsub.s32 0, %v2652
        %v2654 = vrot.slane %v326, %v2653
        %2655 = vset.pattern.permute.xlu0 0
        %2656 = vperm.xlu0 %2655, %v2650
        %v2657 = vpop.permute.xlu0 %2656
        %2659 = vset.pattern.permute.xlu0 0
        %2660 = vperm.xlu0 %2659, %v2654
        %v2661 = vpop.permute.xlu0 %2660
        %v2663 = vmul.f32 %v2657, %v283
        %v2664 = vmul.f32 %v2657, %v284
        %v2665 = vmul.f32 %v2657, %v285
        %v2666 = vmul.f32 %v2661, %v283
        %v2667 = vmul.f32 %v2661, %v284
        %v2668 = vmul.f32 %v2661, %v285
        %v2669 = vmul.f32 %v2657, %v289
        %v2670 = vmul.f32 %v2657, %v290
        %v2671 = vmul.f32 %v2657, %v291
        %v2672 = vmul.f32 %v2661, %v289
        %v2673 = vmul.f32 %v2661, %v290
        %v2674 = vmul.f32 %v2661, %v291
        %v2675 = vmul.f32 %v2657, %v295
        %v2676 = vmul.f32 %v2657, %v296
        %v2677 = vmul.f32 %v2657, %v297
        %v2678 = vmul.f32 %v2661, %v295
        %v2679 = vmul.f32 %v2661, %v296
        %v2680 = vmul.f32 %v2661, %v297
        %v2681 = vmul.f32 %v2657, %v301
        %v2682 = vmul.f32 %v2657, %v302
        %v2683 = vmul.f32 %v2657, %v303
        %v2684 = vmul.f32 %v2661, %v301
        %v2685 = vmul.f32 %v2661, %v302
        %v2686 = vmul.f32 %v2661, %v303
        %v2711 = vrot.slane %v2663, 1
        %v2712 = vrot.slane %v2664, 1
        %v2713 = vsel %vm551, %v2711, %v2712
        %v2714 = vrot.slane %v2665, 1
        %v2715 = vsel %vm551, %v2712, %v2714
        %v2716 = vrot.slane %v2666, 1
        %v2717 = vrot.slane %v2667, 1
        %v2718 = vsel %vm551, %v2716, %v2717
        %v2719 = vrot.slane %v2668, 1
        %v2720 = vsel %vm551, %v2717, %v2719
        %v2721 = vrot.slane %v2669, 1
        %v2722 = vrot.slane %v2670, 1
        %v2723 = vsel %vm551, %v2721, %v2722
        %v2724 = vrot.slane %v2671, 1
        %v2725 = vsel %vm551, %v2722, %v2724
        %v2726 = vrot.slane %v2672, 1
        %v2727 = vrot.slane %v2673, 1
        %v2728 = vsel %vm551, %v2726, %v2727
        %v2729 = vrot.slane %v2674, 1
        %v2730 = vsel %vm551, %v2727, %v2729
        %v2731 = vrot.slane %v2675, 1
        %v2732 = vrot.slane %v2676, 1
        %v2733 = vsel %vm551, %v2731, %v2732
        %v2734 = vrot.slane %v2677, 1
        %v2735 = vsel %vm551, %v2732, %v2734
        %v2736 = vrot.slane %v2678, 1
        %v2737 = vrot.slane %v2679, 1
        %v2738 = vsel %vm551, %v2736, %v2737
        %v2739 = vrot.slane %v2680, 1
        %v2740 = vsel %vm551, %v2737, %v2739
        %v2741 = vrot.slane %v2681, 1
        %v2742 = vrot.slane %v2682, 1
        %v2743 = vsel %vm551, %v2741, %v2742
        %v2744 = vrot.slane %v2683, 1
        %v2745 = vsel %vm551, %v2742, %v2744
        %v2746 = vrot.slane %v2684, 1
        %v2747 = vrot.slane %v2685, 1
        %v2748 = vsel %vm551, %v2746, %v2747
        %v2749 = vrot.slane %v2686, 1
        %v2750 = vsel %vm551, %v2747, %v2749
        %v2767 = vadd.f32 %v2629, %v2713
        %v2768 = vadd.f32 %v2630, %v2715
        %v2769 = vadd.f32 %v2631, %v2718
        %v2770 = vadd.f32 %v2632, %v2720
        %v2771 = vadd.f32 %v2633, %v2723
        %v2772 = vadd.f32 %v2634, %v2725
        %v2773 = vadd.f32 %v2635, %v2728
        %v2774 = vadd.f32 %v2636, %v2730
        %v2775 = vadd.f32 %v2637, %v2733
        %v2776 = vadd.f32 %v2638, %v2735
        %v2777 = vadd.f32 %v2639, %v2738
        %v2778 = vadd.f32 %v2640, %v2740
        %v2779 = vadd.f32 %v2641, %v2743
        %v2780 = vadd.f32 %v2642, %v2745
        %v2781 = vadd.f32 %v2643, %v2748
        %v2782 = vadd.f32 %v2644, %v2750
        %v2785 = vlaneseq
        %v2786 = vshrl.u32 %v2785, 7
        %v2787 = vsub.s32 0, %v2786
        %v2788 = vrot.slane %v327, %v2787
        %v2789 = vlaneseq
        %v2790 = vshrl.u32 %v2789, 7
        %v2791 = vsub.s32 0, %v2790
        %v2792 = vrot.slane %v328, %v2791
        %2793 = vset.pattern.permute.xlu0 0
        %2794 = vperm.xlu0 %2793, %v2788
        %v2795 = vpop.permute.xlu0 %2794
        %2797 = vset.pattern.permute.xlu0 0
        %2798 = vperm.xlu0 %2797, %v2792
        %v2799 = vpop.permute.xlu0 %2798
        %v2801 = vmul.f32 %v2795, %v286
        %v2802 = vmul.f32 %v2795, %v287
        %v2803 = vmul.f32 %v2795, %v288
        %v2804 = vmul.f32 %v2799, %v286
        %v2805 = vmul.f32 %v2799, %v287
        %v2806 = vmul.f32 %v2799, %v288
        %v2807 = vmul.f32 %v2795, %v292
        %v2808 = vmul.f32 %v2795, %v293
        %v2809 = vmul.f32 %v2795, %v294
        %v2810 = vmul.f32 %v2799, %v292
        %v2811 = vmul.f32 %v2799, %v293
        %v2812 = vmul.f32 %v2799, %v294
        %v2813 = vmul.f32 %v2795, %v298
        %v2814 = vmul.f32 %v2795, %v299
        %v2815 = vmul.f32 %v2795, %v300
        %v2816 = vmul.f32 %v2799, %v298
        %v2817 = vmul.f32 %v2799, %v299
        %v2818 = vmul.f32 %v2799, %v300
        %v2819 = vmul.f32 %v2795, %v304
        %v2820 = vmul.f32 %v2795, %v305
        %v2821 = vmul.f32 %v2795, %v306
        %v2822 = vmul.f32 %v2799, %v304
        %v2823 = vmul.f32 %v2799, %v305
        %v2824 = vmul.f32 %v2799, %v306
        %v2849 = vrot.slane %v2801, 1
        %v2850 = vrot.slane %v2802, 1
        %v2851 = vsel %vm551, %v2849, %v2850
        %v2852 = vrot.slane %v2803, 1
        %v2853 = vsel %vm551, %v2850, %v2852
        %v2854 = vrot.slane %v2804, 1
        %v2855 = vrot.slane %v2805, 1
        %v2856 = vsel %vm551, %v2854, %v2855
        %v2857 = vrot.slane %v2806, 1
        %v2858 = vsel %vm551, %v2855, %v2857
        %v2859 = vrot.slane %v2807, 1
        %v2860 = vrot.slane %v2808, 1
        %v2861 = vsel %vm551, %v2859, %v2860
        %v2862 = vrot.slane %v2809, 1
        %v2863 = vsel %vm551, %v2860, %v2862
        %v2864 = vrot.slane %v2810, 1
        %v2865 = vrot.slane %v2811, 1
        %v2866 = vsel %vm551, %v2864, %v2865
        %v2867 = vrot.slane %v2812, 1
        %v2868 = vsel %vm551, %v2865, %v2867
        %v2869 = vrot.slane %v2813, 1
        %v2870 = vrot.slane %v2814, 1
        %v2871 = vsel %vm551, %v2869, %v2870
        %v2872 = vrot.slane %v2815, 1
        %v2873 = vsel %vm551, %v2870, %v2872
        %v2874 = vrot.slane %v2816, 1
        %v2875 = vrot.slane %v2817, 1
        %v2876 = vsel %vm551, %v2874, %v2875
        %v2877 = vrot.slane %v2818, 1
        %v2878 = vsel %vm551, %v2875, %v2877
        %v2879 = vrot.slane %v2819, 1
        %v2880 = vrot.slane %v2820, 1
        %v2881 = vsel %vm551, %v2879, %v2880
        %v2882 = vrot.slane %v2821, 1
        %v2883 = vsel %vm551, %v2880, %v2882
        %v2884 = vrot.slane %v2822, 1
        %v2885 = vrot.slane %v2823, 1
        %v2886 = vsel %vm551, %v2884, %v2885
        %v2887 = vrot.slane %v2824, 1
        %v2888 = vsel %vm551, %v2885, %v2887
        %v2905 = vadd.f32 %v2767, %v2851
        %v2906 = vadd.f32 %v2768, %v2853
        %v2907 = vadd.f32 %v2769, %v2856
        %v2908 = vadd.f32 %v2770, %v2858
        %v2909 = vadd.f32 %v2771, %v2861
        %v2910 = vadd.f32 %v2772, %v2863
        %v2911 = vadd.f32 %v2773, %v2866
        %v2912 = vadd.f32 %v2774, %v2868
        %v2913 = vadd.f32 %v2775, %v2871
        %v2914 = vadd.f32 %v2776, %v2873
        %v2915 = vadd.f32 %v2777, %v2876
        %v2916 = vadd.f32 %v2778, %v2878
        %v2917 = vadd.f32 %v2779, %v2881
        %v2918 = vadd.f32 %v2780, %v2883
        %v2919 = vadd.f32 %v2781, %v2886
        %v2920 = vadd.f32 %v2782, %v2888
        %v2923 = vlaneseq
        %v2924 = vshrl.u32 %v2923, 7
        %v2925 = vsub.s32 0, %v2924
        %v2926 = vrot.slane %v329, %v2925
        %v2927 = vlaneseq
        %v2928 = vshrl.u32 %v2927, 7
        %v2929 = vsub.s32 0, %v2928
        %v2930 = vrot.slane %v330, %v2929
        %2931 = vset.pattern.permute.xlu0 0
        %2932 = vperm.xlu0 %2931, %v2926
        %v2933 = vpop.permute.xlu0 %2932
        %2935 = vset.pattern.permute.xlu0 0
        %2936 = vperm.xlu0 %2935, %v2930
        %v2937 = vpop.permute.xlu0 %2936
        %v2939 = vmul.f32 %v2933, %v283
        %v2940 = vmul.f32 %v2933, %v284
        %v2941 = vmul.f32 %v2933, %v285
        %v2942 = vmul.f32 %v2937, %v283
        %v2943 = vmul.f32 %v2937, %v284
        %v2944 = vmul.f32 %v2937, %v285
        %v2945 = vmul.f32 %v2933, %v289
        %v2946 = vmul.f32 %v2933, %v290
        %v2947 = vmul.f32 %v2933, %v291
        %v2948 = vmul.f32 %v2937, %v289
        %v2949 = vmul.f32 %v2937, %v290
        %v2950 = vmul.f32 %v2937, %v291
        %v2951 = vmul.f32 %v2933, %v295
        %v2952 = vmul.f32 %v2933, %v296
        %v2953 = vmul.f32 %v2933, %v297
        %v2954 = vmul.f32 %v2937, %v295
        %v2955 = vmul.f32 %v2937, %v296
        %v2956 = vmul.f32 %v2937, %v297
        %v2957 = vmul.f32 %v2933, %v301
        %v2958 = vmul.f32 %v2933, %v302
        %v2959 = vmul.f32 %v2933, %v303
        %v2960 = vmul.f32 %v2937, %v301
        %v2961 = vmul.f32 %v2937, %v302
        %v2962 = vmul.f32 %v2937, %v303
        %v2987 = vrot.slane %v2939, 1
        %v2988 = vrot.slane %v2940, 1
        %v2989 = vsel %vm551, %v2987, %v2988
        %v2990 = vrot.slane %v2941, 1
        %v2991 = vsel %vm551, %v2988, %v2990
        %v2992 = vrot.slane %v2942, 1
        %v2993 = vrot.slane %v2943, 1
        %v2994 = vsel %vm551, %v2992, %v2993
        %v2995 = vrot.slane %v2944, 1
        %v2996 = vsel %vm551, %v2993, %v2995
        %v2997 = vrot.slane %v2945, 1
        %v2998 = vrot.slane %v2946, 1
        %v2999 = vsel %vm551, %v2997, %v2998
        %v3000 = vrot.slane %v2947, 1
        %v3001 = vsel %vm551, %v2998, %v3000
        %v3002 = vrot.slane %v2948, 1
        %v3003 = vrot.slane %v2949, 1
        %v3004 = vsel %vm551, %v3002, %v3003
        %v3005 = vrot.slane %v2950, 1
        %v3006 = vsel %vm551, %v3003, %v3005
        %v3007 = vrot.slane %v2951, 1
        %v3008 = vrot.slane %v2952, 1
        %v3009 = vsel %vm551, %v3007, %v3008
        %v3010 = vrot.slane %v2953, 1
        %v3011 = vsel %vm551, %v3008, %v3010
        %v3012 = vrot.slane %v2954, 1
        %v3013 = vrot.slane %v2955, 1
        %v3014 = vsel %vm551, %v3012, %v3013
        %v3015 = vrot.slane %v2956, 1
        %v3016 = vsel %vm551, %v3013, %v3015
        %v3017 = vrot.slane %v2957, 1
        %v3018 = vrot.slane %v2958, 1
        %v3019 = vsel %vm551, %v3017, %v3018
        %v3020 = vrot.slane %v2959, 1
        %v3021 = vsel %vm551, %v3018, %v3020
        %v3022 = vrot.slane %v2960, 1
        %v3023 = vrot.slane %v2961, 1
        %v3024 = vsel %vm551, %v3022, %v3023
        %v3025 = vrot.slane %v2962, 1
        %v3026 = vsel %vm551, %v3023, %v3025
        %3027 = vrot.lane.b32.xlu0 %v2989, 127
        %v3028 = vpop.permute.xlu0 %3027
        %3029 = vrot.lane.b32.xlu0 %v2991, 127
        %v3030 = vpop.permute.xlu0 %3029
        %3031 = vrot.lane.b32.xlu0 %v2994, 127
        %v3032 = vpop.permute.xlu0 %3031
        %3033 = vrot.lane.b32.xlu0 %v2996, 127
        %v3034 = vpop.permute.xlu0 %3033
        %3035 = vrot.lane.b32.xlu0 %v2999, 127
        %v3036 = vpop.permute.xlu0 %3035
        %3037 = vrot.lane.b32.xlu0 %v3001, 127
        %v3038 = vpop.permute.xlu0 %3037
        %3039 = vrot.lane.b32.xlu0 %v3004, 127
        %v3040 = vpop.permute.xlu0 %3039
        %3041 = vrot.lane.b32.xlu0 %v3006, 127
        %v3042 = vpop.permute.xlu0 %3041
        %3043 = vrot.lane.b32.xlu0 %v3009, 127
        %v3044 = vpop.permute.xlu0 %3043
        %3045 = vrot.lane.b32.xlu0 %v3011, 127
        %v3046 = vpop.permute.xlu0 %3045
        %3047 = vrot.lane.b32.xlu0 %v3014, 127
        %v3048 = vpop.permute.xlu0 %3047
        %3049 = vrot.lane.b32.xlu0 %v3016, 127
        %v3050 = vpop.permute.xlu0 %3049
        %3051 = vrot.lane.b32.xlu0 %v3019, 127
        %v3052 = vpop.permute.xlu0 %3051
        %3053 = vrot.lane.b32.xlu0 %v3021, 127
        %v3054 = vpop.permute.xlu0 %3053
        %3055 = vrot.lane.b32.xlu0 %v3024, 127
        %v3056 = vpop.permute.xlu0 %3055
        %3057 = vrot.lane.b32.xlu0 %v3026, 127
        %v3058 = vpop.permute.xlu0 %3057
        %v3075 = vadd.f32 %v2905, %v3028
        %v3076 = vadd.f32 %v2906, %v3030
        %v3077 = vadd.f32 %v2907, %v3032
        %v3078 = vadd.f32 %v2908, %v3034
        %v3079 = vadd.f32 %v2909, %v3036
        %v3080 = vadd.f32 %v2910, %v3038
        %v3081 = vadd.f32 %v2911, %v3040
        %v3082 = vadd.f32 %v2912, %v3042
        %v3083 = vadd.f32 %v2913, %v3044
        %v3084 = vadd.f32 %v2914, %v3046
        %v3085 = vadd.f32 %v2915, %v3048
        %v3086 = vadd.f32 %v2916, %v3050
        %v3087 = vadd.f32 %v2917, %v3052
        %v3088 = vadd.f32 %v2918, %v3054
        %v3089 = vadd.f32 %v2919, %v3056
        %v3090 = vadd.f32 %v2920, %v3058
        %v3093 = vlaneseq
        %v3094 = vshrl.u32 %v3093, 7
        %v3095 = vsub.s32 0, %v3094
        %v3096 = vrot.slane %v331, %v3095
        %v3097 = vlaneseq
        %v3098 = vshrl.u32 %v3097, 7
        %v3099 = vsub.s32 0, %v3098
        %v3100 = vrot.slane %v332, %v3099
        %3101 = vset.pattern.permute.xlu0 0
        %3102 = vperm.xlu0 %3101, %v3096
        %v3103 = vpop.permute.xlu0 %3102
        %3105 = vset.pattern.permute.xlu0 0
        %3106 = vperm.xlu0 %3105, %v3100
        %v3107 = vpop.permute.xlu0 %3106
        %v3109 = vmul.f32 %v3103, %v286
        %v3110 = vmul.f32 %v3103, %v287
        %v3111 = vmul.f32 %v3103, %v288
        %v3112 = vmul.f32 %v3107, %v286
        %v3113 = vmul.f32 %v3107, %v287
        %v3114 = vmul.f32 %v3107, %v288
        %v3115 = vmul.f32 %v3103, %v292
        %v3116 = vmul.f32 %v3103, %v293
        %v3117 = vmul.f32 %v3103, %v294
        %v3118 = vmul.f32 %v3107, %v292
        %v3119 = vmul.f32 %v3107, %v293
        %v3120 = vmul.f32 %v3107, %v294
        %v3121 = vmul.f32 %v3103, %v298
        %v3122 = vmul.f32 %v3103, %v299
        %v3123 = vmul.f32 %v3103, %v300
        %v3124 = vmul.f32 %v3107, %v298
        %v3125 = vmul.f32 %v3107, %v299
        %v3126 = vmul.f32 %v3107, %v300
        %v3127 = vmul.f32 %v3103, %v304
        %v3128 = vmul.f32 %v3103, %v305
        %v3129 = vmul.f32 %v3103, %v306
        %v3130 = vmul.f32 %v3107, %v304
        %v3131 = vmul.f32 %v3107, %v305
        %v3132 = vmul.f32 %v3107, %v306
        %v3157 = vrot.slane %v3109, 1
        %v3158 = vrot.slane %v3110, 1
        %v3159 = vsel %vm551, %v3157, %v3158
        %v3160 = vrot.slane %v3111, 1
        %v3161 = vsel %vm551, %v3158, %v3160
        %v3162 = vrot.slane %v3112, 1
        %v3163 = vrot.slane %v3113, 1
        %v3164 = vsel %vm551, %v3162, %v3163
        %v3165 = vrot.slane %v3114, 1
        %v3166 = vsel %vm551, %v3163, %v3165
        %v3167 = vrot.slane %v3115, 1
        %v3168 = vrot.slane %v3116, 1
        %v3169 = vsel %vm551, %v3167, %v3168
        %v3170 = vrot.slane %v3117, 1
        %v3171 = vsel %vm551, %v3168, %v3170
        %v3172 = vrot.slane %v3118, 1
        %v3173 = vrot.slane %v3119, 1
        %v3174 = vsel %vm551, %v3172, %v3173
        %v3175 = vrot.slane %v3120, 1
        %v3176 = vsel %vm551, %v3173, %v3175
        %v3177 = vrot.slane %v3121, 1
        %v3178 = vrot.slane %v3122, 1
        %v3179 = vsel %vm551, %v3177, %v3178
        %v3180 = vrot.slane %v3123, 1
        %v3181 = vsel %vm551, %v3178, %v3180
        %v3182 = vrot.slane %v3124, 1
        %v3183 = vrot.slane %v3125, 1
        %v3184 = vsel %vm551, %v3182, %v3183
        %v3185 = vrot.slane %v3126, 1
        %v3186 = vsel %vm551, %v3183, %v3185
        %v3187 = vrot.slane %v3127, 1
        %v3188 = vrot.slane %v3128, 1
        %v3189 = vsel %vm551, %v3187, %v3188
        %v3190 = vrot.slane %v3129, 1
        %v3191 = vsel %vm551, %v3188, %v3190
        %v3192 = vrot.slane %v3130, 1
        %v3193 = vrot.slane %v3131, 1
        %v3194 = vsel %vm551, %v3192, %v3193
        %v3195 = vrot.slane %v3132, 1
        %v3196 = vsel %vm551, %v3193, %v3195
        %3197 = vrot.lane.b32.xlu0 %v3159, 127
        %v3198 = vpop.permute.xlu0 %3197
        %3199 = vrot.lane.b32.xlu0 %v3161, 127
        %v3200 = vpop.permute.xlu0 %3199
        %3201 = vrot.lane.b32.xlu0 %v3164, 127
        %v3202 = vpop.permute.xlu0 %3201
        %3203 = vrot.lane.b32.xlu0 %v3166, 127
        %v3204 = vpop.permute.xlu0 %3203
        %3205 = vrot.lane.b32.xlu0 %v3169, 127
        %v3206 = vpop.permute.xlu0 %3205
        %3207 = vrot.lane.b32.xlu0 %v3171, 127
        %v3208 = vpop.permute.xlu0 %3207
        %3209 = vrot.lane.b32.xlu0 %v3174, 127
        %v3210 = vpop.permute.xlu0 %3209
        %3211 = vrot.lane.b32.xlu0 %v3176, 127
        %v3212 = vpop.permute.xlu0 %3211
        %3213 = vrot.lane.b32.xlu0 %v3179, 127
        %v3214 = vpop.permute.xlu0 %3213
        %3215 = vrot.lane.b32.xlu0 %v3181, 127
        %v3216 = vpop.permute.xlu0 %3215
        %3217 = vrot.lane.b32.xlu0 %v3184, 127
        %v3218 = vpop.permute.xlu0 %3217
        %3219 = vrot.lane.b32.xlu0 %v3186, 127
        %v3220 = vpop.permute.xlu0 %3219
        %3221 = vrot.lane.b32.xlu0 %v3189, 127
        %v3222 = vpop.permute.xlu0 %3221
        %3223 = vrot.lane.b32.xlu0 %v3191, 127
        %v3224 = vpop.permute.xlu0 %3223
        %3225 = vrot.lane.b32.xlu0 %v3194, 127
        %v3226 = vpop.permute.xlu0 %3225
        %3227 = vrot.lane.b32.xlu0 %v3196, 127
        %v3228 = vpop.permute.xlu0 %3227
        %v3245 = vadd.f32 %v3075, %v3198
        %v3246 = vadd.f32 %v3076, %v3200
        %v3247 = vadd.f32 %v3077, %v3202
        %v3248 = vadd.f32 %v3078, %v3204
        %v3249 = vadd.f32 %v3079, %v3206
        %v3250 = vadd.f32 %v3080, %v3208
        %v3251 = vadd.f32 %v3081, %v3210
        %v3252 = vadd.f32 %v3082, %v3212
        %v3253 = vadd.f32 %v3083, %v3214
        %v3254 = vadd.f32 %v3084, %v3216
        %v3255 = vadd.f32 %v3085, %v3218
        %v3256 = vadd.f32 %v3086, %v3220
        %v3257 = vadd.f32 %v3087, %v3222
        %v3258 = vadd.f32 %v3088, %v3224
        %v3259 = vadd.f32 %v3089, %v3226
        %v3260 = vadd.f32 %v3090, %v3228
        %v3263 = vlaneseq
        %v3264 = vshrl.u32 %v3263, 7
        %v3265 = vsub.s32 0, %v3264
        %v3266 = vrot.slane %v333, %v3265
        %v3267 = vlaneseq
        %v3268 = vshrl.u32 %v3267, 7
        %v3269 = vsub.s32 0, %v3268
        %v3270 = vrot.slane %v334, %v3269
        %3271 = vset.pattern.permute.xlu0 0
        %3272 = vperm.xlu0 %3271, %v3266
        %v3273 = vpop.permute.xlu0 %3272
        %3275 = vset.pattern.permute.xlu0 0
        %3276 = vperm.xlu0 %3275, %v3270
        %v3277 = vpop.permute.xlu0 %3276
        %v3279 = vmul.f32 %v3273, %v283
        %v3280 = vmul.f32 %v3273, %v284
        %v3281 = vmul.f32 %v3273, %v285
        %v3282 = vmul.f32 %v3277, %v283
        %v3283 = vmul.f32 %v3277, %v284
        %v3284 = vmul.f32 %v3277, %v285
        %v3285 = vmul.f32 %v3273, %v289
        %v3286 = vmul.f32 %v3273, %v290
        %v3287 = vmul.f32 %v3273, %v291
        %v3288 = vmul.f32 %v3277, %v289
        %v3289 = vmul.f32 %v3277, %v290
        %v3290 = vmul.f32 %v3277, %v291
        %v3291 = vmul.f32 %v3273, %v295
        %v3292 = vmul.f32 %v3273, %v296
        %v3293 = vmul.f32 %v3273, %v297
        %v3294 = vmul.f32 %v3277, %v295
        %v3295 = vmul.f32 %v3277, %v296
        %v3296 = vmul.f32 %v3277, %v297
        %v3297 = vmul.f32 %v3273, %v301
        %v3298 = vmul.f32 %v3273, %v302
        %v3299 = vmul.f32 %v3273, %v303
        %v3300 = vmul.f32 %v3277, %v301
        %v3301 = vmul.f32 %v3277, %v302
        %v3302 = vmul.f32 %v3277, %v303
        %v3327 = vrot.slane %v3279, 1
        %v3328 = vrot.slane %v3280, 1
        %v3329 = vsel %vm551, %v3327, %v3328
        %v3330 = vrot.slane %v3281, 1
        %v3331 = vsel %vm551, %v3328, %v3330
        %v3332 = vrot.slane %v3282, 1
        %v3333 = vrot.slane %v3283, 1
        %v3334 = vsel %vm551, %v3332, %v3333
        %v3335 = vrot.slane %v3284, 1
        %v3336 = vsel %vm551, %v3333, %v3335
        %v3337 = vrot.slane %v3285, 1
        %v3338 = vrot.slane %v3286, 1
        %v3339 = vsel %vm551, %v3337, %v3338
        %v3340 = vrot.slane %v3287, 1
        %v3341 = vsel %vm551, %v3338, %v3340
        %v3342 = vrot.slane %v3288, 1
        %v3343 = vrot.slane %v3289, 1
        %v3344 = vsel %vm551, %v3342, %v3343
        %v3345 = vrot.slane %v3290, 1
        %v3346 = vsel %vm551, %v3343, %v3345
        %v3347 = vrot.slane %v3291, 1
        %v3348 = vrot.slane %v3292, 1
        %v3349 = vsel %vm551, %v3347, %v3348
        %v3350 = vrot.slane %v3293, 1
        %v3351 = vsel %vm551, %v3348, %v3350
        %v3352 = vrot.slane %v3294, 1
        %v3353 = vrot.slane %v3295, 1
        %v3354 = vsel %vm551, %v3352, %v3353
        %v3355 = vrot.slane %v3296, 1
        %v3356 = vsel %vm551, %v3353, %v3355
        %v3357 = vrot.slane %v3297, 1
        %v3358 = vrot.slane %v3298, 1
        %v3359 = vsel %vm551, %v3357, %v3358
        %v3360 = vrot.slane %v3299, 1
        %v3361 = vsel %vm551, %v3358, %v3360
        %v3362 = vrot.slane %v3300, 1
        %v3363 = vrot.slane %v3301, 1
        %v3364 = vsel %vm551, %v3362, %v3363
        %v3365 = vrot.slane %v3302, 1
        %v3366 = vsel %vm551, %v3363, %v3365
        %3367 = vrot.lane.b32.xlu0 %v3329, 126
        %v3368 = vpop.permute.xlu0 %3367
        %3369 = vrot.lane.b32.xlu0 %v3331, 126
        %v3370 = vpop.permute.xlu0 %3369
        %3371 = vrot.lane.b32.xlu0 %v3334, 126
        %v3372 = vpop.permute.xlu0 %3371
        %3373 = vrot.lane.b32.xlu0 %v3336, 126
        %v3374 = vpop.permute.xlu0 %3373
        %3375 = vrot.lane.b32.xlu0 %v3339, 126
        %v3376 = vpop.permute.xlu0 %3375
        %3377 = vrot.lane.b32.xlu0 %v3341, 126
        %v3378 = vpop.permute.xlu0 %3377
        %3379 = vrot.lane.b32.xlu0 %v3344, 126
        %v3380 = vpop.permute.xlu0 %3379
        %3381 = vrot.lane.b32.xlu0 %v3346, 126
        %v3382 = vpop.permute.xlu0 %3381
        %3383 = vrot.lane.b32.xlu0 %v3349, 126
        %v3384 = vpop.permute.xlu0 %3383
        %3385 = vrot.lane.b32.xlu0 %v3351, 126
        %v3386 = vpop.permute.xlu0 %3385
        %3387 = vrot.lane.b32.xlu0 %v3354, 126
        %v3388 = vpop.permute.xlu0 %3387
        %3389 = vrot.lane.b32.xlu0 %v3356, 126
        %v3390 = vpop.permute.xlu0 %3389
        %3391 = vrot.lane.b32.xlu0 %v3359, 126
        %v3392 = vpop.permute.xlu0 %3391
        %3393 = vrot.lane.b32.xlu0 %v3361, 126
        %v3394 = vpop.permute.xlu0 %3393
        %3395 = vrot.lane.b32.xlu0 %v3364, 126
        %v3396 = vpop.permute.xlu0 %3395
        %3397 = vrot.lane.b32.xlu0 %v3366, 126
        %v3398 = vpop.permute.xlu0 %3397
        %v3415 = vadd.f32 %v3245, %v3368
        %v3416 = vadd.f32 %v3246, %v3370
        %v3417 = vadd.f32 %v3247, %v3372
        %v3418 = vadd.f32 %v3248, %v3374
        %v3419 = vadd.f32 %v3249, %v3376
        %v3420 = vadd.f32 %v3250, %v3378
        %v3421 = vadd.f32 %v3251, %v3380
        %v3422 = vadd.f32 %v3252, %v3382
        %v3423 = vadd.f32 %v3253, %v3384
        %v3424 = vadd.f32 %v3254, %v3386
        %v3425 = vadd.f32 %v3255, %v3388
        %v3426 = vadd.f32 %v3256, %v3390
        %v3427 = vadd.f32 %v3257, %v3392
        %v3428 = vadd.f32 %v3258, %v3394
        %v3429 = vadd.f32 %v3259, %v3396
        %v3430 = vadd.f32 %v3260, %v3398
        %v3433 = vlaneseq
        %v3434 = vshrl.u32 %v3433, 7
        %v3435 = vsub.s32 0, %v3434
        %v3436 = vrot.slane %v335, %v3435
        %v3437 = vlaneseq
        %v3438 = vshrl.u32 %v3437, 7
        %v3439 = vsub.s32 0, %v3438
        %v3440 = vrot.slane %v336, %v3439
        %3441 = vset.pattern.permute.xlu0 0
        %3442 = vperm.xlu0 %3441, %v3436
        %v3443 = vpop.permute.xlu0 %3442
        %3445 = vset.pattern.permute.xlu0 0
        %3446 = vperm.xlu0 %3445, %v3440
        %v3447 = vpop.permute.xlu0 %3446
        %v3449 = vmul.f32 %v3443, %v286
        %v3450 = vmul.f32 %v3443, %v287
        %v3451 = vmul.f32 %v3443, %v288
        %v3452 = vmul.f32 %v3447, %v286
        %v3453 = vmul.f32 %v3447, %v287
        %v3454 = vmul.f32 %v3447, %v288
        %v3455 = vmul.f32 %v3443, %v292
        %v3456 = vmul.f32 %v3443, %v293
        %v3457 = vmul.f32 %v3443, %v294
        %v3458 = vmul.f32 %v3447, %v292
        %v3459 = vmul.f32 %v3447, %v293
        %v3460 = vmul.f32 %v3447, %v294
        %v3461 = vmul.f32 %v3443, %v298
        %v3462 = vmul.f32 %v3443, %v299
        %v3463 = vmul.f32 %v3443, %v300
        %v3464 = vmul.f32 %v3447, %v298
        %v3465 = vmul.f32 %v3447, %v299
        %v3466 = vmul.f32 %v3447, %v300
        %v3467 = vmul.f32 %v3443, %v304
        %v3468 = vmul.f32 %v3443, %v305
        %v3469 = vmul.f32 %v3443, %v306
        %v3470 = vmul.f32 %v3447, %v304
        %v3471 = vmul.f32 %v3447, %v305
        %v3472 = vmul.f32 %v3447, %v306
        %v3497 = vrot.slane %v3449, 1
        %v3498 = vrot.slane %v3450, 1
        %v3499 = vsel %vm551, %v3497, %v3498
        %v3500 = vrot.slane %v3451, 1
        %v3501 = vsel %vm551, %v3498, %v3500
        %v3502 = vrot.slane %v3452, 1
        %v3503 = vrot.slane %v3453, 1
        %v3504 = vsel %vm551, %v3502, %v3503
        %v3505 = vrot.slane %v3454, 1
        %v3506 = vsel %vm551, %v3503, %v3505
        %v3507 = vrot.slane %v3455, 1
        %v3508 = vrot.slane %v3456, 1
        %v3509 = vsel %vm551, %v3507, %v3508
        %v3510 = vrot.slane %v3457, 1
        %v3511 = vsel %vm551, %v3508, %v3510
        %v3512 = vrot.slane %v3458, 1
        %v3513 = vrot.slane %v3459, 1
        %v3514 = vsel %vm551, %v3512, %v3513
        %v3515 = vrot.slane %v3460, 1
        %v3516 = vsel %vm551, %v3513, %v3515
        %v3517 = vrot.slane %v3461, 1
        %v3518 = vrot.slane %v3462, 1
        %v3519 = vsel %vm551, %v3517, %v3518
        %v3520 = vrot.slane %v3463, 1
        %v3521 = vsel %vm551, %v3518, %v3520
        %v3522 = vrot.slane %v3464, 1
        %v3523 = vrot.slane %v3465, 1
        %v3524 = vsel %vm551, %v3522, %v3523
        %v3525 = vrot.slane %v3466, 1
        %v3526 = vsel %vm551, %v3523, %v3525
        %v3527 = vrot.slane %v3467, 1
        %v3528 = vrot.slane %v3468, 1
        %v3529 = vsel %vm551, %v3527, %v3528
        %v3530 = vrot.slane %v3469, 1
        %v3531 = vsel %vm551, %v3528, %v3530
        %v3532 = vrot.slane %v3470, 1
        %v3533 = vrot.slane %v3471, 1
        %v3534 = vsel %vm551, %v3532, %v3533
        %v3535 = vrot.slane %v3472, 1
        %v3536 = vsel %vm551, %v3533, %v3535
        %3537 = vrot.lane.b32.xlu0 %v3499, 126
        %v3538 = vpop.permute.xlu0 %3537
        %3539 = vrot.lane.b32.xlu0 %v3501, 126
        %v3540 = vpop.permute.xlu0 %3539
        %3541 = vrot.lane.b32.xlu0 %v3504, 126
        %v3542 = vpop.permute.xlu0 %3541
        %3543 = vrot.lane.b32.xlu0 %v3506, 126
        %v3544 = vpop.permute.xlu0 %3543
        %3545 = vrot.lane.b32.xlu0 %v3509, 126
        %v3546 = vpop.permute.xlu0 %3545
        %3547 = vrot.lane.b32.xlu0 %v3511, 126
        %v3548 = vpop.permute.xlu0 %3547
        %3549 = vrot.lane.b32.xlu0 %v3514, 126
        %v3550 = vpop.permute.xlu0 %3549
        %3551 = vrot.lane.b32.xlu0 %v3516, 126
        %v3552 = vpop.permute.xlu0 %3551
        %3553 = vrot.lane.b32.xlu0 %v3519, 126
        %v3554 = vpop.permute.xlu0 %3553
        %3555 = vrot.lane.b32.xlu0 %v3521, 126
        %v3556 = vpop.permute.xlu0 %3555
        %3557 = vrot.lane.b32.xlu0 %v3524, 126
        %v3558 = vpop.permute.xlu0 %3557
        %3559 = vrot.lane.b32.xlu0 %v3526, 126
        %v3560 = vpop.permute.xlu0 %3559
        %3561 = vrot.lane.b32.xlu0 %v3529, 126
        %v3562 = vpop.permute.xlu0 %3561
        %3563 = vrot.lane.b32.xlu0 %v3531, 126
        %v3564 = vpop.permute.xlu0 %3563
        %3565 = vrot.lane.b32.xlu0 %v3534, 126
        %v3566 = vpop.permute.xlu0 %3565
        %3567 = vrot.lane.b32.xlu0 %v3536, 126
        %v3568 = vpop.permute.xlu0 %3567
        %v3585 = vadd.f32 %v3415, %v3538
        %v3586 = vadd.f32 %v3416, %v3540
        %v3587 = vadd.f32 %v3417, %v3542
        %v3588 = vadd.f32 %v3418, %v3544
        %v3589 = vadd.f32 %v3419, %v3546
        %v3590 = vadd.f32 %v3420, %v3548
        %v3591 = vadd.f32 %v3421, %v3550
        %v3592 = vadd.f32 %v3422, %v3552
        %v3593 = vadd.f32 %v3423, %v3554
        %v3594 = vadd.f32 %v3424, %v3556
        %v3595 = vadd.f32 %v3425, %v3558
        %v3596 = vadd.f32 %v3426, %v3560
        %v3597 = vadd.f32 %v3427, %v3562
        %v3598 = vadd.f32 %v3428, %v3564
        %v3599 = vadd.f32 %v3429, %v3566
        %v3600 = vadd.f32 %v3430, %v3568
        %v3603 = vlaneseq
        %v3604 = vshrl.u32 %v3603, 7
        %v3605 = vsub.s32 0, %v3604
        %v3606 = vrot.slane %v337, %v3605
        %v3607 = vlaneseq
        %v3608 = vshrl.u32 %v3607, 7
        %v3609 = vsub.s32 0, %v3608
        %v3610 = vrot.slane %v338, %v3609
        %3611 = vset.pattern.permute.xlu0 0
        %3612 = vperm.xlu0 %3611, %v3606
        %v3613 = vpop.permute.xlu0 %3612
        %3615 = vset.pattern.permute.xlu0 0
        %3616 = vperm.xlu0 %3615, %v3610
        %v3617 = vpop.permute.xlu0 %3616
        %v3619 = vmul.f32 %v3613, %v283
        %v3620 = vmul.f32 %v3613, %v284
        %v3621 = vmul.f32 %v3613, %v285
        %v3622 = vmul.f32 %v3617, %v283
        %v3623 = vmul.f32 %v3617, %v284
        %v3624 = vmul.f32 %v3617, %v285
        %v3625 = vmul.f32 %v3613, %v289
        %v3626 = vmul.f32 %v3613, %v290
        %v3627 = vmul.f32 %v3613, %v291
        %v3628 = vmul.f32 %v3617, %v289
        %v3629 = vmul.f32 %v3617, %v290
        %v3630 = vmul.f32 %v3617, %v291
        %v3631 = vmul.f32 %v3613, %v295
        %v3632 = vmul.f32 %v3613, %v296
        %v3633 = vmul.f32 %v3613, %v297
        %v3634 = vmul.f32 %v3617, %v295
        %v3635 = vmul.f32 %v3617, %v296
        %v3636 = vmul.f32 %v3617, %v297
        %v3637 = vmul.f32 %v3613, %v301
        %v3638 = vmul.f32 %v3613, %v302
        %v3639 = vmul.f32 %v3613, %v303
        %v3640 = vmul.f32 %v3617, %v301
        %v3641 = vmul.f32 %v3617, %v302
        %v3642 = vmul.f32 %v3617, %v303
        %vm3667 = vcmask 1045504
        %v3668 = vrot.slane %v3619, 2
        %v3669 = vrot.slane %v3620, 2
        %v3670 = vsel %vm3667, %v3668, %v3669
        %v3671 = vrot.slane %v3621, 2
        %v3672 = vsel %vm3667, %v3669, %v3671
        %v3673 = vrot.slane %v3622, 2
        %v3674 = vrot.slane %v3623, 2
        %v3675 = vsel %vm3667, %v3673, %v3674
        %v3676 = vrot.slane %v3624, 2
        %v3677 = vsel %vm3667, %v3674, %v3676
        %v3678 = vrot.slane %v3625, 2
        %v3679 = vrot.slane %v3626, 2
        %v3680 = vsel %vm3667, %v3678, %v3679
        %v3681 = vrot.slane %v3627, 2
        %v3682 = vsel %vm3667, %v3679, %v3681
        %v3683 = vrot.slane %v3628, 2
        %v3684 = vrot.slane %v3629, 2
        %v3685 = vsel %vm3667, %v3683, %v3684
        %v3686 = vrot.slane %v3630, 2
        %v3687 = vsel %vm3667, %v3684, %v3686
        %v3688 = vrot.slane %v3631, 2
        %v3689 = vrot.slane %v3632, 2
        %v3690 = vsel %vm3667, %v3688, %v3689
        %v3691 = vrot.slane %v3633, 2
        %v3692 = vsel %vm3667, %v3689, %v3691
        %v3693 = vrot.slane %v3634, 2
        %v3694 = vrot.slane %v3635, 2
        %v3695 = vsel %vm3667, %v3693, %v3694
        %v3696 = vrot.slane %v3636, 2
        %v3697 = vsel %vm3667, %v3694, %v3696
        %v3698 = vrot.slane %v3637, 2
        %v3699 = vrot.slane %v3638, 2
        %v3700 = vsel %vm3667, %v3698, %v3699
        %v3701 = vrot.slane %v3639, 2
        %v3702 = vsel %vm3667, %v3699, %v3701
        %v3703 = vrot.slane %v3640, 2
        %v3704 = vrot.slane %v3641, 2
        %v3705 = vsel %vm3667, %v3703, %v3704
        %v3706 = vrot.slane %v3642, 2
        %v3707 = vsel %vm3667, %v3704, %v3706
        %v3724 = vadd.f32 %v3585, %v3670
        %v3725 = vadd.f32 %v3586, %v3672
        %v3726 = vadd.f32 %v3587, %v3675
        %v3727 = vadd.f32 %v3588, %v3677
        %v3728 = vadd.f32 %v3589, %v3680
        %v3729 = vadd.f32 %v3590, %v3682
        %v3730 = vadd.f32 %v3591, %v3685
        %v3731 = vadd.f32 %v3592, %v3687
        %v3732 = vadd.f32 %v3593, %v3690
        %v3733 = vadd.f32 %v3594, %v3692
        %v3734 = vadd.f32 %v3595, %v3695
        %v3735 = vadd.f32 %v3596, %v3697
        %v3736 = vadd.f32 %v3597, %v3700
        %v3737 = vadd.f32 %v3598, %v3702
        %v3738 = vadd.f32 %v3599, %v3705
        %v3739 = vadd.f32 %v3600, %v3707
        %v3742 = vlaneseq
        %v3743 = vshrl.u32 %v3742, 7
        %v3744 = vsub.s32 0, %v3743
        %v3745 = vrot.slane %v339, %v3744
        %v3746 = vlaneseq
        %v3747 = vshrl.u32 %v3746, 7
        %v3748 = vsub.s32 0, %v3747
        %v3749 = vrot.slane %v340, %v3748
        %3750 = vset.pattern.permute.xlu0 0
        %3751 = vperm.xlu0 %3750, %v3745
        %v3752 = vpop.permute.xlu0 %3751
        %3754 = vset.pattern.permute.xlu0 0
        %3755 = vperm.xlu0 %3754, %v3749
        %v3756 = vpop.permute.xlu0 %3755
        %v3758 = vmul.f32 %v3752, %v286
        %v3759 = vmul.f32 %v3752, %v287
        %v3760 = vmul.f32 %v3752, %v288
        %v3761 = vmul.f32 %v3756, %v286
        %v3762 = vmul.f32 %v3756, %v287
        %v3763 = vmul.f32 %v3756, %v288
        %v3764 = vmul.f32 %v3752, %v292
        %v3765 = vmul.f32 %v3752, %v293
        %v3766 = vmul.f32 %v3752, %v294
        %v3767 = vmul.f32 %v3756, %v292
        %v3768 = vmul.f32 %v3756, %v293
        %v3769 = vmul.f32 %v3756, %v294
        %v3770 = vmul.f32 %v3752, %v298
        %v3771 = vmul.f32 %v3752, %v299
        %v3772 = vmul.f32 %v3752, %v300
        %v3773 = vmul.f32 %v3756, %v298
        %v3774 = vmul.f32 %v3756, %v299
        %v3775 = vmul.f32 %v3756, %v300
        %v3776 = vmul.f32 %v3752, %v304
        %v3777 = vmul.f32 %v3752, %v305
        %v3778 = vmul.f32 %v3752, %v306
        %v3779 = vmul.f32 %v3756, %v304
        %v3780 = vmul.f32 %v3756, %v305
        %v3781 = vmul.f32 %v3756, %v306
        %v3806 = vrot.slane %v3758, 2
        %v3807 = vrot.slane %v3759, 2
        %v3808 = vsel %vm3667, %v3806, %v3807
        %v3809 = vrot.slane %v3760, 2
        %v3810 = vsel %vm3667, %v3807, %v3809
        %v3811 = vrot.slane %v3761, 2
        %v3812 = vrot.slane %v3762, 2
        %v3813 = vsel %vm3667, %v3811, %v3812
        %v3814 = vrot.slane %v3763, 2
        %v3815 = vsel %vm3667, %v3812, %v3814
        %v3816 = vrot.slane %v3764, 2
        %v3817 = vrot.slane %v3765, 2
        %v3818 = vsel %vm3667, %v3816, %v3817
        %v3819 = vrot.slane %v3766, 2
        %v3820 = vsel %vm3667, %v3817, %v3819
        %v3821 = vrot.slane %v3767, 2
        %v3822 = vrot.slane %v3768, 2
        %v3823 = vsel %vm3667, %v3821, %v3822
        %v3824 = vrot.slane %v3769, 2
        %v3825 = vsel %vm3667, %v3822, %v3824
        %v3826 = vrot.slane %v3770, 2
        %v3827 = vrot.slane %v3771, 2
        %v3828 = vsel %vm3667, %v3826, %v3827
        %v3829 = vrot.slane %v3772, 2
        %v3830 = vsel %vm3667, %v3827, %v3829
        %v3831 = vrot.slane %v3773, 2
        %v3832 = vrot.slane %v3774, 2
        %v3833 = vsel %vm3667, %v3831, %v3832
        %v3834 = vrot.slane %v3775, 2
        %v3835 = vsel %vm3667, %v3832, %v3834
        %v3836 = vrot.slane %v3776, 2
        %v3837 = vrot.slane %v3777, 2
        %v3838 = vsel %vm3667, %v3836, %v3837
        %v3839 = vrot.slane %v3778, 2
        %v3840 = vsel %vm3667, %v3837, %v3839
        %v3841 = vrot.slane %v3779, 2
        %v3842 = vrot.slane %v3780, 2
        %v3843 = vsel %vm3667, %v3841, %v3842
        %v3844 = vrot.slane %v3781, 2
        %v3845 = vsel %vm3667, %v3842, %v3844
        %v3862 = vadd.f32 %v3724, %v3808
        %v3863 = vadd.f32 %v3725, %v3810
        %v3864 = vadd.f32 %v3726, %v3813
        %v3865 = vadd.f32 %v3727, %v3815
        %v3866 = vadd.f32 %v3728, %v3818
        %v3867 = vadd.f32 %v3729, %v3820
        %v3868 = vadd.f32 %v3730, %v3823
        %v3869 = vadd.f32 %v3731, %v3825
        %v3870 = vadd.f32 %v3732, %v3828
        %v3871 = vadd.f32 %v3733, %v3830
        %v3872 = vadd.f32 %v3734, %v3833
        %v3873 = vadd.f32 %v3735, %v3835
        %v3874 = vadd.f32 %v3736, %v3838
        %v3875 = vadd.f32 %v3737, %v3840
        %v3876 = vadd.f32 %v3738, %v3843
        %v3877 = vadd.f32 %v3739, %v3845
        %v3880 = vlaneseq
        %v3881 = vshrl.u32 %v3880, 7
        %v3882 = vsub.s32 0, %v3881
        %v3883 = vrot.slane %v341, %v3882
        %v3884 = vlaneseq
        %v3885 = vshrl.u32 %v3884, 7
        %v3886 = vsub.s32 0, %v3885
        %v3887 = vrot.slane %v342, %v3886
        %3888 = vset.pattern.permute.xlu0 0
        %3889 = vperm.xlu0 %3888, %v3883
        %v3890 = vpop.permute.xlu0 %3889
        %3892 = vset.pattern.permute.xlu0 0
        %3893 = vperm.xlu0 %3892, %v3887
        %v3894 = vpop.permute.xlu0 %3893
        %v3896 = vmul.f32 %v3890, %v283
        %v3897 = vmul.f32 %v3890, %v284
        %v3898 = vmul.f32 %v3890, %v285
        %v3899 = vmul.f32 %v3894, %v283
        %v3900 = vmul.f32 %v3894, %v284
        %v3901 = vmul.f32 %v3894, %v285
        %v3902 = vmul.f32 %v3890, %v289
        %v3903 = vmul.f32 %v3890, %v290
        %v3904 = vmul.f32 %v3890, %v291
        %v3905 = vmul.f32 %v3894, %v289
        %v3906 = vmul.f32 %v3894, %v290
        %v3907 = vmul.f32 %v3894, %v291
        %v3908 = vmul.f32 %v3890, %v295
        %v3909 = vmul.f32 %v3890, %v296
        %v3910 = vmul.f32 %v3890, %v297
        %v3911 = vmul.f32 %v3894, %v295
        %v3912 = vmul.f32 %v3894, %v296
        %v3913 = vmul.f32 %v3894, %v297
        %v3914 = vmul.f32 %v3890, %v301
        %v3915 = vmul.f32 %v3890, %v302
        %v3916 = vmul.f32 %v3890, %v303
        %v3917 = vmul.f32 %v3894, %v301
        %v3918 = vmul.f32 %v3894, %v302
        %v3919 = vmul.f32 %v3894, %v303
        %v3944 = vrot.slane %v3896, 2
        %v3945 = vrot.slane %v3897, 2
        %v3946 = vsel %vm3667, %v3944, %v3945
        %v3947 = vrot.slane %v3898, 2
        %v3948 = vsel %vm3667, %v3945, %v3947
        %v3949 = vrot.slane %v3899, 2
        %v3950 = vrot.slane %v3900, 2
        %v3951 = vsel %vm3667, %v3949, %v3950
        %v3952 = vrot.slane %v3901, 2
        %v3953 = vsel %vm3667, %v3950, %v3952
        %v3954 = vrot.slane %v3902, 2
        %v3955 = vrot.slane %v3903, 2
        %v3956 = vsel %vm3667, %v3954, %v3955
        %v3957 = vrot.slane %v3904, 2
        %v3958 = vsel %vm3667, %v3955, %v3957
        %v3959 = vrot.slane %v3905, 2
        %v3960 = vrot.slane %v3906, 2
        %v3961 = vsel %vm3667, %v3959, %v3960
        %v3962 = vrot.slane %v3907, 2
        %v3963 = vsel %vm3667, %v3960, %v3962
        %v3964 = vrot.slane %v3908, 2
        %v3965 = vrot.slane %v3909, 2
        %v3966 = vsel %vm3667, %v3964, %v3965
        %v3967 = vrot.slane %v3910, 2
        %v3968 = vsel %vm3667, %v3965, %v3967
        %v3969 = vrot.slane %v3911, 2
        %v3970 = vrot.slane %v3912, 2
        %v3971 = vsel %vm3667, %v3969, %v3970
        %v3972 = vrot.slane %v3913, 2
        %v3973 = vsel %vm3667, %v3970, %v3972
        %v3974 = vrot.slane %v3914, 2
        %v3975 = vrot.slane %v3915, 2
        %v3976 = vsel %vm3667, %v3974, %v3975
        %v3977 = vrot.slane %v3916, 2
        %v3978 = vsel %vm3667, %v3975, %v3977
        %v3979 = vrot.slane %v3917, 2
        %v3980 = vrot.slane %v3918, 2
        %v3981 = vsel %vm3667, %v3979, %v3980
        %v3982 = vrot.slane %v3919, 2
        %v3983 = vsel %vm3667, %v3980, %v3982
        %3984 = vrot.lane.b32.xlu0 %v3946, 127
        %v3985 = vpop.permute.xlu0 %3984
        %3986 = vrot.lane.b32.xlu0 %v3948, 127
        %v3987 = vpop.permute.xlu0 %3986
        %3988 = vrot.lane.b32.xlu0 %v3951, 127
        %v3989 = vpop.permute.xlu0 %3988
        %3990 = vrot.lane.b32.xlu0 %v3953, 127
        %v3991 = vpop.permute.xlu0 %3990
        %3992 = vrot.lane.b32.xlu0 %v3956, 127
        %v3993 = vpop.permute.xlu0 %3992
        %3994 = vrot.lane.b32.xlu0 %v3958, 127
        %v3995 = vpop.permute.xlu0 %3994
        %3996 = vrot.lane.b32.xlu0 %v3961, 127
        %v3997 = vpop.permute.xlu0 %3996
        %3998 = vrot.lane.b32.xlu0 %v3963, 127
        %v3999 = vpop.permute.xlu0 %3998
        %4000 = vrot.lane.b32.xlu0 %v3966, 127
        %v4001 = vpop.permute.xlu0 %4000
        %4002 = vrot.lane.b32.xlu0 %v3968, 127
        %v4003 = vpop.permute.xlu0 %4002
        %4004 = vrot.lane.b32.xlu0 %v3971, 127
        %v4005 = vpop.permute.xlu0 %4004
        %4006 = vrot.lane.b32.xlu0 %v3973, 127
        %v4007 = vpop.permute.xlu0 %4006
        %4008 = vrot.lane.b32.xlu0 %v3976, 127
        %v4009 = vpop.permute.xlu0 %4008
        %4010 = vrot.lane.b32.xlu0 %v3978, 127
        %v4011 = vpop.permute.xlu0 %4010
        %4012 = vrot.lane.b32.xlu0 %v3981, 127
        %v4013 = vpop.permute.xlu0 %4012
        %4014 = vrot.lane.b32.xlu0 %v3983, 127
        %v4015 = vpop.permute.xlu0 %4014
        %v4032 = vadd.f32 %v3862, %v3985
        %v4033 = vadd.f32 %v3863, %v3987
        %v4034 = vadd.f32 %v3864, %v3989
        %v4035 = vadd.f32 %v3865, %v3991
        %v4036 = vadd.f32 %v3866, %v3993
        %v4037 = vadd.f32 %v3867, %v3995
        %v4038 = vadd.f32 %v3868, %v3997
        %v4039 = vadd.f32 %v3869, %v3999
        %v4040 = vadd.f32 %v3870, %v4001
        %v4041 = vadd.f32 %v3871, %v4003
        %v4042 = vadd.f32 %v3872, %v4005
        %v4043 = vadd.f32 %v3873, %v4007
        %v4044 = vadd.f32 %v3874, %v4009
        %v4045 = vadd.f32 %v3875, %v4011
        %v4046 = vadd.f32 %v3876, %v4013
        %v4047 = vadd.f32 %v3877, %v4015
        %v4050 = vlaneseq
        %v4051 = vshrl.u32 %v4050, 7
        %v4052 = vsub.s32 0, %v4051
        %v4053 = vrot.slane %v343, %v4052
        %v4054 = vlaneseq
        %v4055 = vshrl.u32 %v4054, 7
        %v4056 = vsub.s32 0, %v4055
        %v4057 = vrot.slane %v344, %v4056
        %4058 = vset.pattern.permute.xlu0 0
        %4059 = vperm.xlu0 %4058, %v4053
        %v4060 = vpop.permute.xlu0 %4059
        %4062 = vset.pattern.permute.xlu0 0
        %4063 = vperm.xlu0 %4062, %v4057
        %v4064 = vpop.permute.xlu0 %4063
        %v4066 = vmul.f32 %v4060, %v286
        %v4067 = vmul.f32 %v4060, %v287
        %v4068 = vmul.f32 %v4060, %v288
        %v4069 = vmul.f32 %v4064, %v286
        %v4070 = vmul.f32 %v4064, %v287
        %v4071 = vmul.f32 %v4064, %v288
        %v4072 = vmul.f32 %v4060, %v292
        %v4073 = vmul.f32 %v4060, %v293
        %v4074 = vmul.f32 %v4060, %v294
        %v4075 = vmul.f32 %v4064, %v292
        %v4076 = vmul.f32 %v4064, %v293
        %v4077 = vmul.f32 %v4064, %v294
        %v4078 = vmul.f32 %v4060, %v298
        %v4079 = vmul.f32 %v4060, %v299
        %v4080 = vmul.f32 %v4060, %v300
        %v4081 = vmul.f32 %v4064, %v298
        %v4082 = vmul.f32 %v4064, %v299
        %v4083 = vmul.f32 %v4064, %v300
        %v4084 = vmul.f32 %v4060, %v304
        %v4085 = vmul.f32 %v4060, %v305
        %v4086 = vmul.f32 %v4060, %v306
        %v4087 = vmul.f32 %v4064, %v304
        %v4088 = vmul.f32 %v4064, %v305
        %v4089 = vmul.f32 %v4064, %v306
        %v4114 = vrot.slane %v4066, 2
        %v4115 = vrot.slane %v4067, 2
        %v4116 = vsel %vm3667, %v4114, %v4115
        %v4117 = vrot.slane %v4068, 2
        %v4118 = vsel %vm3667, %v4115, %v4117
        %v4119 = vrot.slane %v4069, 2
        %v4120 = vrot.slane %v4070, 2
        %v4121 = vsel %vm3667, %v4119, %v4120
        %v4122 = vrot.slane %v4071, 2
        %v4123 = vsel %vm3667, %v4120, %v4122
        %v4124 = vrot.slane %v4072, 2
        %v4125 = vrot.slane %v4073, 2
        %v4126 = vsel %vm3667, %v4124, %v4125
        %v4127 = vrot.slane %v4074, 2
        %v4128 = vsel %vm3667, %v4125, %v4127
        %v4129 = vrot.slane %v4075, 2
        %v4130 = vrot.slane %v4076, 2
        %v4131 = vsel %vm3667, %v4129, %v4130
        %v4132 = vrot.slane %v4077, 2
        %v4133 = vsel %vm3667, %v4130, %v4132
        %v4134 = vrot.slane %v4078, 2
        %v4135 = vrot.slane %v4079, 2
        %v4136 = vsel %vm3667, %v4134, %v4135
        %v4137 = vrot.slane %v4080, 2
        %v4138 = vsel %vm3667, %v4135, %v4137
        %v4139 = vrot.slane %v4081, 2
        %v4140 = vrot.slane %v4082, 2
        %v4141 = vsel %vm3667, %v4139, %v4140
        %v4142 = vrot.slane %v4083, 2
        %v4143 = vsel %vm3667, %v4140, %v4142
        %v4144 = vrot.slane %v4084, 2
        %v4145 = vrot.slane %v4085, 2
        %v4146 = vsel %vm3667, %v4144, %v4145
        %v4147 = vrot.slane %v4086, 2
        %v4148 = vsel %vm3667, %v4145, %v4147
        %v4149 = vrot.slane %v4087, 2
        %v4150 = vrot.slane %v4088, 2
        %v4151 = vsel %vm3667, %v4149, %v4150
        %v4152 = vrot.slane %v4089, 2
        %v4153 = vsel %vm3667, %v4150, %v4152
        %4154 = vrot.lane.b32.xlu0 %v4116, 127
        %v4155 = vpop.permute.xlu0 %4154
        %4156 = vrot.lane.b32.xlu0 %v4118, 127
        %v4157 = vpop.permute.xlu0 %4156
        %4158 = vrot.lane.b32.xlu0 %v4121, 127
        %v4159 = vpop.permute.xlu0 %4158
        %4160 = vrot.lane.b32.xlu0 %v4123, 127
        %v4161 = vpop.permute.xlu0 %4160
        %4162 = vrot.lane.b32.xlu0 %v4126, 127
        %v4163 = vpop.permute.xlu0 %4162
        %4164 = vrot.lane.b32.xlu0 %v4128, 127
        %v4165 = vpop.permute.xlu0 %4164
        %4166 = vrot.lane.b32.xlu0 %v4131, 127
        %v4167 = vpop.permute.xlu0 %4166
        %4168 = vrot.lane.b32.xlu0 %v4133, 127
        %v4169 = vpop.permute.xlu0 %4168
        %4170 = vrot.lane.b32.xlu0 %v4136, 127
        %v4171 = vpop.permute.xlu0 %4170
        %4172 = vrot.lane.b32.xlu0 %v4138, 127
        %v4173 = vpop.permute.xlu0 %4172
        %4174 = vrot.lane.b32.xlu0 %v4141, 127
        %v4175 = vpop.permute.xlu0 %4174
        %4176 = vrot.lane.b32.xlu0 %v4143, 127
        %v4177 = vpop.permute.xlu0 %4176
        %4178 = vrot.lane.b32.xlu0 %v4146, 127
        %v4179 = vpop.permute.xlu0 %4178
        %4180 = vrot.lane.b32.xlu0 %v4148, 127
        %v4181 = vpop.permute.xlu0 %4180
        %4182 = vrot.lane.b32.xlu0 %v4151, 127
        %v4183 = vpop.permute.xlu0 %4182
        %4184 = vrot.lane.b32.xlu0 %v4153, 127
        %v4185 = vpop.permute.xlu0 %4184
        %v4202 = vadd.f32 %v4032, %v4155
        %v4203 = vadd.f32 %v4033, %v4157
        %v4204 = vadd.f32 %v4034, %v4159
        %v4205 = vadd.f32 %v4035, %v4161
        %v4206 = vadd.f32 %v4036, %v4163
        %v4207 = vadd.f32 %v4037, %v4165
        %v4208 = vadd.f32 %v4038, %v4167
        %v4209 = vadd.f32 %v4039, %v4169
        %v4210 = vadd.f32 %v4040, %v4171
        %v4211 = vadd.f32 %v4041, %v4173
        %v4212 = vadd.f32 %v4042, %v4175
        %v4213 = vadd.f32 %v4043, %v4177
        %v4214 = vadd.f32 %v4044, %v4179
        %v4215 = vadd.f32 %v4045, %v4181
        %v4216 = vadd.f32 %v4046, %v4183
        %v4217 = vadd.f32 %v4047, %v4185
        %v4220 = vlaneseq
        %v4221 = vshrl.u32 %v4220, 7
        %v4222 = vsub.s32 0, %v4221
        %v4223 = vrot.slane %v345, %v4222
        %v4224 = vlaneseq
        %v4225 = vshrl.u32 %v4224, 7
        %v4226 = vsub.s32 0, %v4225
        %v4227 = vrot.slane %v346, %v4226
        %4228 = vset.pattern.permute.xlu0 0
        %4229 = vperm.xlu0 %4228, %v4223
        %v4230 = vpop.permute.xlu0 %4229
        %4232 = vset.pattern.permute.xlu0 0
        %4233 = vperm.xlu0 %4232, %v4227
        %v4234 = vpop.permute.xlu0 %4233
        %v4236 = vmul.f32 %v4230, %v283
        %v4237 = vmul.f32 %v4230, %v284
        %v4238 = vmul.f32 %v4230, %v285
        %v4239 = vmul.f32 %v4234, %v283
        %v4240 = vmul.f32 %v4234, %v284
        %v4241 = vmul.f32 %v4234, %v285
        %v4242 = vmul.f32 %v4230, %v289
        %v4243 = vmul.f32 %v4230, %v290
        %v4244 = vmul.f32 %v4230, %v291
        %v4245 = vmul.f32 %v4234, %v289
        %v4246 = vmul.f32 %v4234, %v290
        %v4247 = vmul.f32 %v4234, %v291
        %v4248 = vmul.f32 %v4230, %v295
        %v4249 = vmul.f32 %v4230, %v296
        %v4250 = vmul.f32 %v4230, %v297
        %v4251 = vmul.f32 %v4234, %v295
        %v4252 = vmul.f32 %v4234, %v296
        %v4253 = vmul.f32 %v4234, %v297
        %v4254 = vmul.f32 %v4230, %v301
        %v4255 = vmul.f32 %v4230, %v302
        %v4256 = vmul.f32 %v4230, %v303
        %v4257 = vmul.f32 %v4234, %v301
        %v4258 = vmul.f32 %v4234, %v302
        %v4259 = vmul.f32 %v4234, %v303
        %v4284 = vrot.slane %v4236, 2
        %v4285 = vrot.slane %v4237, 2
        %v4286 = vsel %vm3667, %v4284, %v4285
        %v4287 = vrot.slane %v4238, 2
        %v4288 = vsel %vm3667, %v4285, %v4287
        %v4289 = vrot.slane %v4239, 2
        %v4290 = vrot.slane %v4240, 2
        %v4291 = vsel %vm3667, %v4289, %v4290
        %v4292 = vrot.slane %v4241, 2
        %v4293 = vsel %vm3667, %v4290, %v4292
        %v4294 = vrot.slane %v4242, 2
        %v4295 = vrot.slane %v4243, 2
        %v4296 = vsel %vm3667, %v4294, %v4295
        %v4297 = vrot.slane %v4244, 2
        %v4298 = vsel %vm3667, %v4295, %v4297
        %v4299 = vrot.slane %v4245, 2
        %v4300 = vrot.slane %v4246, 2
        %v4301 = vsel %vm3667, %v4299, %v4300
        %v4302 = vrot.slane %v4247, 2
        %v4303 = vsel %vm3667, %v4300, %v4302
        %v4304 = vrot.slane %v4248, 2
        %v4305 = vrot.slane %v4249, 2
        %v4306 = vsel %vm3667, %v4304, %v4305
        %v4307 = vrot.slane %v4250, 2
        %v4308 = vsel %vm3667, %v4305, %v4307
        %v4309 = vrot.slane %v4251, 2
        %v4310 = vrot.slane %v4252, 2
        %v4311 = vsel %vm3667, %v4309, %v4310
        %v4312 = vrot.slane %v4253, 2
        %v4313 = vsel %vm3667, %v4310, %v4312
        %v4314 = vrot.slane %v4254, 2
        %v4315 = vrot.slane %v4255, 2
        %v4316 = vsel %vm3667, %v4314, %v4315
        %v4317 = vrot.slane %v4256, 2
        %v4318 = vsel %vm3667, %v4315, %v4317
        %v4319 = vrot.slane %v4257, 2
        %v4320 = vrot.slane %v4258, 2
        %v4321 = vsel %vm3667, %v4319, %v4320
        %v4322 = vrot.slane %v4259, 2
        %v4323 = vsel %vm3667, %v4320, %v4322
        %4324 = vrot.lane.b32.xlu0 %v4286, 126
        %v4325 = vpop.permute.xlu0 %4324
        %4326 = vrot.lane.b32.xlu0 %v4288, 126
        %v4327 = vpop.permute.xlu0 %4326
        %4328 = vrot.lane.b32.xlu0 %v4291, 126
        %v4329 = vpop.permute.xlu0 %4328
        %4330 = vrot.lane.b32.xlu0 %v4293, 126
        %v4331 = vpop.permute.xlu0 %4330
        %4332 = vrot.lane.b32.xlu0 %v4296, 126
        %v4333 = vpop.permute.xlu0 %4332
        %4334 = vrot.lane.b32.xlu0 %v4298, 126
        %v4335 = vpop.permute.xlu0 %4334
        %4336 = vrot.lane.b32.xlu0 %v4301, 126
        %v4337 = vpop.permute.xlu0 %4336
        %4338 = vrot.lane.b32.xlu0 %v4303, 126
        %v4339 = vpop.permute.xlu0 %4338
        %4340 = vrot.lane.b32.xlu0 %v4306, 126
        %v4341 = vpop.permute.xlu0 %4340
        %4342 = vrot.lane.b32.xlu0 %v4308, 126
        %v4343 = vpop.permute.xlu0 %4342
        %4344 = vrot.lane.b32.xlu0 %v4311, 126
        %v4345 = vpop.permute.xlu0 %4344
        %4346 = vrot.lane.b32.xlu0 %v4313, 126
        %v4347 = vpop.permute.xlu0 %4346
        %4348 = vrot.lane.b32.xlu0 %v4316, 126
        %v4349 = vpop.permute.xlu0 %4348
        %4350 = vrot.lane.b32.xlu0 %v4318, 126
        %v4351 = vpop.permute.xlu0 %4350
        %4352 = vrot.lane.b32.xlu0 %v4321, 126
        %v4353 = vpop.permute.xlu0 %4352
        %4354 = vrot.lane.b32.xlu0 %v4323, 126
        %v4355 = vpop.permute.xlu0 %4354
        %v4372 = vadd.f32 %v4202, %v4325
        %v4373 = vadd.f32 %v4203, %v4327
        %v4374 = vadd.f32 %v4204, %v4329
        %v4375 = vadd.f32 %v4205, %v4331
        %v4376 = vadd.f32 %v4206, %v4333
        %v4377 = vadd.f32 %v4207, %v4335
        %v4378 = vadd.f32 %v4208, %v4337
        %v4379 = vadd.f32 %v4209, %v4339
        %v4380 = vadd.f32 %v4210, %v4341
        %v4381 = vadd.f32 %v4211, %v4343
        %v4382 = vadd.f32 %v4212, %v4345
        %v4383 = vadd.f32 %v4213, %v4347
        %v4384 = vadd.f32 %v4214, %v4349
        %v4385 = vadd.f32 %v4215, %v4351
        %v4386 = vadd.f32 %v4216, %v4353
        %v4387 = vadd.f32 %v4217, %v4355
        %v4390 = vlaneseq
        %v4391 = vshrl.u32 %v4390, 7
        %v4392 = vsub.s32 0, %v4391
        %v4393 = vrot.slane %v347, %v4392
        %v4394 = vlaneseq
        %v4395 = vshrl.u32 %v4394, 7
        %v4396 = vsub.s32 0, %v4395
        %v4397 = vrot.slane %v348, %v4396
        %4398 = vset.pattern.permute.xlu0 0
        %4399 = vperm.xlu0 %4398, %v4393
        %v4400 = vpop.permute.xlu0 %4399
        %4402 = vset.pattern.permute.xlu0 0
        %4403 = vperm.xlu0 %4402, %v4397
        %v4404 = vpop.permute.xlu0 %4403
        %v4406 = vmul.f32 %v4400, %v286
        %v4407 = vmul.f32 %v4400, %v287
        %v4408 = vmul.f32 %v4400, %v288
        %v4409 = vmul.f32 %v4404, %v286
        %v4410 = vmul.f32 %v4404, %v287
        %v4411 = vmul.f32 %v4404, %v288
        %v4412 = vmul.f32 %v4400, %v292
        %v4413 = vmul.f32 %v4400, %v293
        %v4414 = vmul.f32 %v4400, %v294
        %v4415 = vmul.f32 %v4404, %v292
        %v4416 = vmul.f32 %v4404, %v293
        %v4417 = vmul.f32 %v4404, %v294
        %v4418 = vmul.f32 %v4400, %v298
        %v4419 = vmul.f32 %v4400, %v299
        %v4420 = vmul.f32 %v4400, %v300
        %v4421 = vmul.f32 %v4404, %v298
        %v4422 = vmul.f32 %v4404, %v299
        %v4423 = vmul.f32 %v4404, %v300
        %v4424 = vmul.f32 %v4400, %v304
        %v4425 = vmul.f32 %v4400, %v305
        %v4426 = vmul.f32 %v4400, %v306
        %v4427 = vmul.f32 %v4404, %v304
        %v4428 = vmul.f32 %v4404, %v305
        %v4429 = vmul.f32 %v4404, %v306
        %v4454 = vrot.slane %v4406, 2
        %v4455 = vrot.slane %v4407, 2
        %v4456 = vsel %vm3667, %v4454, %v4455
        %v4457 = vrot.slane %v4408, 2
        %v4458 = vsel %vm3667, %v4455, %v4457
        %v4459 = vrot.slane %v4409, 2
        %v4460 = vrot.slane %v4410, 2
        %v4461 = vsel %vm3667, %v4459, %v4460
        %v4462 = vrot.slane %v4411, 2
        %v4463 = vsel %vm3667, %v4460, %v4462
        %v4464 = vrot.slane %v4412, 2
        %v4465 = vrot.slane %v4413, 2
        %v4466 = vsel %vm3667, %v4464, %v4465
        %v4467 = vrot.slane %v4414, 2
        %v4468 = vsel %vm3667, %v4465, %v4467
        %v4469 = vrot.slane %v4415, 2
        %v4470 = vrot.slane %v4416, 2
        %v4471 = vsel %vm3667, %v4469, %v4470
        %v4472 = vrot.slane %v4417, 2
        %v4473 = vsel %vm3667, %v4470, %v4472
        %v4474 = vrot.slane %v4418, 2
        %v4475 = vrot.slane %v4419, 2
        %v4476 = vsel %vm3667, %v4474, %v4475
        %v4477 = vrot.slane %v4420, 2
        %v4478 = vsel %vm3667, %v4475, %v4477
        %v4479 = vrot.slane %v4421, 2
        %v4480 = vrot.slane %v4422, 2
        %v4481 = vsel %vm3667, %v4479, %v4480
        %v4482 = vrot.slane %v4423, 2
        %v4483 = vsel %vm3667, %v4480, %v4482
        %v4484 = vrot.slane %v4424, 2
        %v4485 = vrot.slane %v4425, 2
        %v4486 = vsel %vm3667, %v4484, %v4485
        %v4487 = vrot.slane %v4426, 2
        %v4488 = vsel %vm3667, %v4485, %v4487
        %v4489 = vrot.slane %v4427, 2
        %v4490 = vrot.slane %v4428, 2
        %v4491 = vsel %vm3667, %v4489, %v4490
        %v4492 = vrot.slane %v4429, 2
        %v4493 = vsel %vm3667, %v4490, %v4492
        %4494 = vrot.lane.b32.xlu0 %v4456, 126
        %v4495 = vpop.permute.xlu0 %4494
        %4496 = vrot.lane.b32.xlu0 %v4458, 126
        %v4497 = vpop.permute.xlu0 %4496
        %4498 = vrot.lane.b32.xlu0 %v4461, 126
        %v4499 = vpop.permute.xlu0 %4498
        %4500 = vrot.lane.b32.xlu0 %v4463, 126
        %v4501 = vpop.permute.xlu0 %4500
        %4502 = vrot.lane.b32.xlu0 %v4466, 126
        %v4503 = vpop.permute.xlu0 %4502
        %4504 = vrot.lane.b32.xlu0 %v4468, 126
        %v4505 = vpop.permute.xlu0 %4504
        %4506 = vrot.lane.b32.xlu0 %v4471, 126
        %v4507 = vpop.permute.xlu0 %4506
        %4508 = vrot.lane.b32.xlu0 %v4473, 126
        %v4509 = vpop.permute.xlu0 %4508
        %4510 = vrot.lane.b32.xlu0 %v4476, 126
        %v4511 = vpop.permute.xlu0 %4510
        %4512 = vrot.lane.b32.xlu0 %v4478, 126
        %v4513 = vpop.permute.xlu0 %4512
        %4514 = vrot.lane.b32.xlu0 %v4481, 126
        %v4515 = vpop.permute.xlu0 %4514
        %4516 = vrot.lane.b32.xlu0 %v4483, 126
        %v4517 = vpop.permute.xlu0 %4516
        %4518 = vrot.lane.b32.xlu0 %v4486, 126
        %v4519 = vpop.permute.xlu0 %4518
        %4520 = vrot.lane.b32.xlu0 %v4488, 126
        %v4521 = vpop.permute.xlu0 %4520
        %4522 = vrot.lane.b32.xlu0 %v4491, 126
        %v4523 = vpop.permute.xlu0 %4522
        %4524 = vrot.lane.b32.xlu0 %v4493, 126
        %v4525 = vpop.permute.xlu0 %4524
        %v4542 = vadd.f32 %v4372, %v4495
        %v4543 = vadd.f32 %v4373, %v4497
        %v4544 = vadd.f32 %v4374, %v4499
        %v4545 = vadd.f32 %v4375, %v4501
        %v4546 = vadd.f32 %v4376, %v4503
        %v4547 = vadd.f32 %v4377, %v4505
        %v4548 = vadd.f32 %v4378, %v4507
        %v4549 = vadd.f32 %v4379, %v4509
        %v4550 = vadd.f32 %v4380, %v4511
        %v4551 = vadd.f32 %v4381, %v4513
        %v4552 = vadd.f32 %v4382, %v4515
        %v4553 = vadd.f32 %v4383, %v4517
        %v4554 = vadd.f32 %v4384, %v4519
        %v4555 = vadd.f32 %v4385, %v4521
        %v4556 = vadd.f32 %v4386, %v4523
        %v4557 = vadd.f32 %v4387, %v4525
        %v4560 = vlaneseq
        %v4561 = vshrl.u32 %v4560, 7
        %v4562 = vsub.s32 0, %v4561
        %v4563 = vrot.slane %v349, %v4562
        %v4564 = vlaneseq
        %v4565 = vshrl.u32 %v4564, 7
        %v4566 = vsub.s32 0, %v4565
        %v4567 = vrot.slane %v350, %v4566
        %4568 = vset.pattern.permute.xlu0 0
        %4569 = vperm.xlu0 %4568, %v4563
        %v4570 = vpop.permute.xlu0 %4569
        %4572 = vset.pattern.permute.xlu0 0
        %4573 = vperm.xlu0 %4572, %v4567
        %v4574 = vpop.permute.xlu0 %4573
        %v4576 = vadd.f32 %v4542, %v4570
        %v4577 = vadd.f32 %v4543, %v4570
        %v4578 = vadd.f32 %v4544, %v4574
        %v4579 = vadd.f32 %v4545, %v4574
        %v4580 = vadd.f32 %v4546, %v4570
        %v4581 = vadd.f32 %v4547, %v4570
        %v4582 = vadd.f32 %v4548, %v4574
        %v4583 = vadd.f32 %v4549, %v4574
        %v4584 = vadd.f32 %v4550, %v4570
        %v4585 = vadd.f32 %v4551, %v4570
        %v4586 = vadd.f32 %v4552, %v4574
        %v4587 = vadd.f32 %v4553, %v4574
        %v4588 = vadd.f32 %v4554, %v4570
        %v4589 = vadd.f32 %v4555, %v4570
        %v4590 = vadd.f32 %v4556, %v4574
        %v4591 = vadd.f32 %v4557, %v4574
        %4616 = vrot.lane.b32.xlu0 %v2081, 127
        %v4617 = vpop.permute.xlu0 %4616
        %4618 = vrot.lane.b32.xlu0 %v2082, 127
        %v4619 = vpop.permute.xlu0 %4618
        %4620 = vrot.lane.b32.xlu0 %v2083, 127
        %v4621 = vpop.permute.xlu0 %4620
        %4622 = vrot.lane.b32.xlu0 %v2084, 127
        %v4623 = vpop.permute.xlu0 %4622
        %4624 = vrot.lane.b32.xlu0 %v2085, 127
        %v4625 = vpop.permute.xlu0 %4624
        %4626 = vrot.lane.b32.xlu0 %v2086, 127
        %v4627 = vpop.permute.xlu0 %4626
        %4628 = vrot.lane.b32.xlu0 %v2087, 127
        %v4629 = vpop.permute.xlu0 %4628
        %4630 = vrot.lane.b32.xlu0 %v2088, 127
        %v4631 = vpop.permute.xlu0 %4630
        %4632 = vrot.lane.b32.xlu0 %v2089, 127
        %v4633 = vpop.permute.xlu0 %4632
        %4634 = vrot.lane.b32.xlu0 %v2090, 127
        %v4635 = vpop.permute.xlu0 %4634
        %4636 = vrot.lane.b32.xlu0 %v2091, 127
        %v4637 = vpop.permute.xlu0 %4636
        %4638 = vrot.lane.b32.xlu0 %v2092, 127
        %v4639 = vpop.permute.xlu0 %4638
        %4640 = vrot.lane.b32.xlu0 %v2093, 127
        %v4641 = vpop.permute.xlu0 %4640
        %4642 = vrot.lane.b32.xlu0 %v2094, 127
        %v4643 = vpop.permute.xlu0 %4642
        %4644 = vrot.lane.b32.xlu0 %v2095, 127
        %v4645 = vpop.permute.xlu0 %4644
        %4646 = vrot.lane.b32.xlu0 %v2096, 127
        %v4647 = vpop.permute.xlu0 %4646
        %4648 = vrot.lane.b32.xlu0 %v2097, 127
        %v4649 = vpop.permute.xlu0 %4648
        %4650 = vrot.lane.b32.xlu0 %v2098, 127
        %v4651 = vpop.permute.xlu0 %4650
        %4652 = vrot.lane.b32.xlu0 %v2099, 127
        %v4653 = vpop.permute.xlu0 %4652
        %4654 = vrot.lane.b32.xlu0 %v2100, 127
        %v4655 = vpop.permute.xlu0 %4654
        %4656 = vrot.lane.b32.xlu0 %v2101, 127
        %v4657 = vpop.permute.xlu0 %4656
        %4658 = vrot.lane.b32.xlu0 %v2102, 127
        %v4659 = vpop.permute.xlu0 %4658
        %4660 = vrot.lane.b32.xlu0 %v2103, 127
        %v4661 = vpop.permute.xlu0 %4660
        %4662 = vrot.lane.b32.xlu0 %v2104, 127
        %v4663 = vpop.permute.xlu0 %4662
        %v4688 = vsel %vm451, %v4617, 0.0
        %4689 = vadd.xlane.f32.xlu0 %v4688
        %v4690 = vpop.xlane.xlu0 %4689
        %v4691 = vsel %vm455, %v4619, 0.0
        %4692 = vadd.xlane.f32.xlu0 %v4691
        %v4693 = vpop.xlane.xlu0 %4692
        %v4694 = vsel %vm459, %v4621, 0.0
        %4695 = vadd.xlane.f32.xlu0 %v4694
        %v4696 = vpop.xlane.xlu0 %4695
        %v4697 = vsel %vm451, %v4623, 0.0
        %4698 = vadd.xlane.f32.xlu0 %v4697
        %v4699 = vpop.xlane.xlu0 %4698
        %v4700 = vsel %vm455, %v4625, 0.0
        %4701 = vadd.xlane.f32.xlu0 %v4700
        %v4702 = vpop.xlane.xlu0 %4701
        %v4703 = vsel %vm459, %v4627, 0.0
        %4704 = vadd.xlane.f32.xlu0 %v4703
        %v4705 = vpop.xlane.xlu0 %4704
        %v4706 = vsel %vm451, %v4629, 0.0
        %4707 = vadd.xlane.f32.xlu0 %v4706
        %v4708 = vpop.xlane.xlu0 %4707
        %v4709 = vsel %vm455, %v4631, 0.0
        %4710 = vadd.xlane.f32.xlu0 %v4709
        %v4711 = vpop.xlane.xlu0 %4710
        %v4712 = vsel %vm459, %v4633, 0.0
        %4713 = vadd.xlane.f32.xlu0 %v4712
        %v4714 = vpop.xlane.xlu0 %4713
        %v4715 = vsel %vm451, %v4635, 0.0
        %4716 = vadd.xlane.f32.xlu0 %v4715
        %v4717 = vpop.xlane.xlu0 %4716
        %v4718 = vsel %vm455, %v4637, 0.0
        %4719 = vadd.xlane.f32.xlu0 %v4718
        %v4720 = vpop.xlane.xlu0 %4719
        %v4721 = vsel %vm459, %v4639, 0.0
        %4722 = vadd.xlane.f32.xlu0 %v4721
        %v4723 = vpop.xlane.xlu0 %4722
        %v4724 = vsel %vm451, %v4641, 0.0
        %4725 = vadd.xlane.f32.xlu0 %v4724
        %v4726 = vpop.xlane.xlu0 %4725
        %v4727 = vsel %vm455, %v4643, 0.0
        %4728 = vadd.xlane.f32.xlu0 %v4727
        %v4729 = vpop.xlane.xlu0 %4728
        %v4730 = vsel %vm459, %v4645, 0.0
        %4731 = vadd.xlane.f32.xlu0 %v4730
        %v4732 = vpop.xlane.xlu0 %4731
        %v4733 = vsel %vm451, %v4647, 0.0
        %4734 = vadd.xlane.f32.xlu0 %v4733
        %v4735 = vpop.xlane.xlu0 %4734
        %v4736 = vsel %vm455, %v4649, 0.0
        %4737 = vadd.xlane.f32.xlu0 %v4736
        %v4738 = vpop.xlane.xlu0 %4737
        %v4739 = vsel %vm459, %v4651, 0.0
        %4740 = vadd.xlane.f32.xlu0 %v4739
        %v4741 = vpop.xlane.xlu0 %4740
        %v4742 = vsel %vm451, %v4653, 0.0
        %4743 = vadd.xlane.f32.xlu0 %v4742
        %v4744 = vpop.xlane.xlu0 %4743
        %v4745 = vsel %vm455, %v4655, 0.0
        %4746 = vadd.xlane.f32.xlu0 %v4745
        %v4747 = vpop.xlane.xlu0 %4746
        %v4748 = vsel %vm459, %v4657, 0.0
        %4749 = vadd.xlane.f32.xlu0 %v4748
        %v4750 = vpop.xlane.xlu0 %4749
        %v4751 = vsel %vm451, %v4659, 0.0
        %4752 = vadd.xlane.f32.xlu0 %v4751
        %v4753 = vpop.xlane.xlu0 %4752
        %v4754 = vsel %vm455, %v4661, 0.0
        %4755 = vadd.xlane.f32.xlu0 %v4754
        %v4756 = vpop.xlane.xlu0 %4755
        %v4757 = vsel %vm459, %v4663, 0.0
        %4758 = vadd.xlane.f32.xlu0 %v4757
        %v4759 = vpop.xlane.xlu0 %4758
        %v4760 = vmul.f32 %v4690, %v526
        %v4761 = vmul.f32 %v4693, %v526
        %v4762 = vmul.f32 %v4696, %v526
        %v4763 = vmul.f32 %v4699, %v526
        %v4764 = vmul.f32 %v4702, %v526
        %v4765 = vmul.f32 %v4705, %v526
        %v4766 = vmul.f32 %v4708, %v526
        %v4767 = vmul.f32 %v4711, %v526
        %v4768 = vmul.f32 %v4714, %v526
        %v4769 = vmul.f32 %v4717, %v526
        %v4770 = vmul.f32 %v4720, %v526
        %v4771 = vmul.f32 %v4723, %v526
        %v4772 = vmul.f32 %v4726, %v526
        %v4773 = vmul.f32 %v4729, %v526
        %v4774 = vmul.f32 %v4732, %v526
        %v4775 = vmul.f32 %v4735, %v526
        %v4776 = vmul.f32 %v4738, %v526
        %v4777 = vmul.f32 %v4741, %v526
        %v4778 = vmul.f32 %v4744, %v526
        %v4779 = vmul.f32 %v4747, %v526
        %v4780 = vmul.f32 %v4750, %v526
        %v4781 = vmul.f32 %v4753, %v526
        %v4782 = vmul.f32 %v4756, %v526
        %v4783 = vmul.f32 %v4759, %v526
        %v4808 = vrot.slane %v4760, 1
        %v4809 = vrot.slane %v4761, 1
        %v4810 = vsel %vm551, %v4808, %v4809
        %v4811 = vrot.slane %v4762, 1
        %v4812 = vsel %vm551, %v4809, %v4811
        %v4813 = vrot.slane %v4763, 1
        %v4814 = vrot.slane %v4764, 1
        %v4815 = vsel %vm551, %v4813, %v4814
        %v4816 = vrot.slane %v4765, 1
        %v4817 = vsel %vm551, %v4814, %v4816
        %v4818 = vrot.slane %v4766, 1
        %v4819 = vrot.slane %v4767, 1
        %v4820 = vsel %vm551, %v4818, %v4819
        %v4821 = vrot.slane %v4768, 1
        %v4822 = vsel %vm551, %v4819, %v4821
        %v4823 = vrot.slane %v4769, 1
        %v4824 = vrot.slane %v4770, 1
        %v4825 = vsel %vm551, %v4823, %v4824
        %v4826 = vrot.slane %v4771, 1
        %v4827 = vsel %vm551, %v4824, %v4826
        %v4828 = vrot.slane %v4772, 1
        %v4829 = vrot.slane %v4773, 1
        %v4830 = vsel %vm551, %v4828, %v4829
        %v4831 = vrot.slane %v4774, 1
        %v4832 = vsel %vm551, %v4829, %v4831
        %v4833 = vrot.slane %v4775, 1
        %v4834 = vrot.slane %v4776, 1
        %v4835 = vsel %vm551, %v4833, %v4834
        %v4836 = vrot.slane %v4777, 1
        %v4837 = vsel %vm551, %v4834, %v4836
        %v4838 = vrot.slane %v4778, 1
        %v4839 = vrot.slane %v4779, 1
        %v4840 = vsel %vm551, %v4838, %v4839
        %v4841 = vrot.slane %v4780, 1
        %v4842 = vsel %vm551, %v4839, %v4841
        %v4843 = vrot.slane %v4781, 1
        %v4844 = vrot.slane %v4782, 1
        %v4845 = vsel %vm551, %v4843, %v4844
        %v4846 = vrot.slane %v4783, 1
        %v4847 = vsel %vm551, %v4844, %v4846
        %v4864 = vadd.f32 %v4810, %v4812
        %v4865 = vrot.slane %v4864, 4
        %v4866 = vadd.f32 %v4864, %v4865
        %v4867 = vrot.slane %v4866, 2
        %v4868 = vadd.f32 %v4866, %v4867
        %v4869 = vrot.slane %v4868, 1
        %v4870 = vadd.f32 %v4868, %v4869
        %v4871 = vadd.f32 %v4815, %v4817
        %v4872 = vrot.slane %v4871, 4
        %v4873 = vadd.f32 %v4871, %v4872
        %v4874 = vrot.slane %v4873, 2
        %v4875 = vadd.f32 %v4873, %v4874
        %v4876 = vrot.slane %v4875, 1
        %v4877 = vadd.f32 %v4875, %v4876
        %v4878 = vadd.f32 %v4820, %v4822
        %v4879 = vrot.slane %v4878, 4
        %v4880 = vadd.f32 %v4878, %v4879
        %v4881 = vrot.slane %v4880, 2
        %v4882 = vadd.f32 %v4880, %v4881
        %v4883 = vrot.slane %v4882, 1
        %v4884 = vadd.f32 %v4882, %v4883
        %v4885 = vadd.f32 %v4825, %v4827
        %v4886 = vrot.slane %v4885, 4
        %v4887 = vadd.f32 %v4885, %v4886
        %v4888 = vrot.slane %v4887, 2
        %v4889 = vadd.f32 %v4887, %v4888
        %v4890 = vrot.slane %v4889, 1
        %v4891 = vadd.f32 %v4889, %v4890
        %v4892 = vadd.f32 %v4830, %v4832
        %v4893 = vrot.slane %v4892, 4
        %v4894 = vadd.f32 %v4892, %v4893
        %v4895 = vrot.slane %v4894, 2
        %v4896 = vadd.f32 %v4894, %v4895
        %v4897 = vrot.slane %v4896, 1
        %v4898 = vadd.f32 %v4896, %v4897
        %v4899 = vadd.f32 %v4835, %v4837
        %v4900 = vrot.slane %v4899, 4
        %v4901 = vadd.f32 %v4899, %v4900
        %v4902 = vrot.slane %v4901, 2
        %v4903 = vadd.f32 %v4901, %v4902
        %v4904 = vrot.slane %v4903, 1
        %v4905 = vadd.f32 %v4903, %v4904
        %v4906 = vadd.f32 %v4840, %v4842
        %v4907 = vrot.slane %v4906, 4
        %v4908 = vadd.f32 %v4906, %v4907
        %v4909 = vrot.slane %v4908, 2
        %v4910 = vadd.f32 %v4908, %v4909
        %v4911 = vrot.slane %v4910, 1
        %v4912 = vadd.f32 %v4910, %v4911
        %v4913 = vadd.f32 %v4845, %v4847
        %v4914 = vrot.slane %v4913, 4
        %v4915 = vadd.f32 %v4913, %v4914
        %v4916 = vrot.slane %v4915, 2
        %v4917 = vadd.f32 %v4915, %v4916
        %v4918 = vrot.slane %v4917, 1
        %v4919 = vadd.f32 %v4917, %v4918
        %v4920 = vmul.f32 %v4870, %v526
        %v4921 = vmul.f32 %v4877, %v526
        %v4922 = vmul.f32 %v4884, %v526
        %v4923 = vmul.f32 %v4891, %v526
        %v4924 = vmul.f32 %v4898, %v526
        %v4925 = vmul.f32 %v4905, %v526
        %v4926 = vmul.f32 %v4912, %v526
        %v4927 = vmul.f32 %v4919, %v526
        %v4928 = vsel %vm455, %v4576, 0.0
        %4929 = vadd.xlane.f32.xlu0 %v4928
        %v4930 = vpop.xlane.xlu0 %4929
        %v4931 = vsel %vm455, %v4577, 0.0
        %4932 = vadd.xlane.f32.xlu0 %v4931
        %v4933 = vpop.xlane.xlu0 %4932
        %v4934 = vsel %vm455, %v4578, 0.0
        %4935 = vadd.xlane.f32.xlu0 %v4934
        %v4936 = vpop.xlane.xlu0 %4935
        %v4937 = vsel %vm455, %v4579, 0.0
        %4938 = vadd.xlane.f32.xlu0 %v4937
        %v4939 = vpop.xlane.xlu0 %4938
        %v4940 = vsel %vm455, %v4580, 0.0
        %4941 = vadd.xlane.f32.xlu0 %v4940
        %v4942 = vpop.xlane.xlu0 %4941
        %v4943 = vsel %vm455, %v4581, 0.0
        %4944 = vadd.xlane.f32.xlu0 %v4943
        %v4945 = vpop.xlane.xlu0 %4944
        %v4946 = vsel %vm455, %v4582, 0.0
        %4947 = vadd.xlane.f32.xlu0 %v4946
        %v4948 = vpop.xlane.xlu0 %4947
        %v4949 = vsel %vm455, %v4583, 0.0
        %4950 = vadd.xlane.f32.xlu0 %v4949
        %v4951 = vpop.xlane.xlu0 %4950
        %v4952 = vsel %vm455, %v4584, 0.0
        %4953 = vadd.xlane.f32.xlu0 %v4952
        %v4954 = vpop.xlane.xlu0 %4953
        %v4955 = vsel %vm455, %v4585, 0.0
        %4956 = vadd.xlane.f32.xlu0 %v4955
        %v4957 = vpop.xlane.xlu0 %4956
        %v4958 = vsel %vm455, %v4586, 0.0
        %4959 = vadd.xlane.f32.xlu0 %v4958
        %v4960 = vpop.xlane.xlu0 %4959
        %v4961 = vsel %vm455, %v4587, 0.0
        %4962 = vadd.xlane.f32.xlu0 %v4961
        %v4963 = vpop.xlane.xlu0 %4962
        %v4964 = vsel %vm455, %v4588, 0.0
        %4965 = vadd.xlane.f32.xlu0 %v4964
        %v4966 = vpop.xlane.xlu0 %4965
        %v4967 = vsel %vm455, %v4589, 0.0
        %4968 = vadd.xlane.f32.xlu0 %v4967
        %v4969 = vpop.xlane.xlu0 %4968
        %v4970 = vsel %vm455, %v4590, 0.0
        %4971 = vadd.xlane.f32.xlu0 %v4970
        %v4972 = vpop.xlane.xlu0 %4971
        %v4973 = vsel %vm455, %v4591, 0.0
        %4974 = vadd.xlane.f32.xlu0 %v4973
        %v4975 = vpop.xlane.xlu0 %4974
        %v4976 = vmul.f32 %v4930, %v526
        %v4977 = vmul.f32 %v4933, %v526
        %v4978 = vmul.f32 %v4936, %v526
        %v4979 = vmul.f32 %v4939, %v526
        %v4980 = vmul.f32 %v4942, %v526
        %v4981 = vmul.f32 %v4945, %v526
        %v4982 = vmul.f32 %v4948, %v526
        %v4983 = vmul.f32 %v4951, %v526
        %v4984 = vmul.f32 %v4954, %v526
        %v4985 = vmul.f32 %v4957, %v526
        %v4986 = vmul.f32 %v4960, %v526
        %v4987 = vmul.f32 %v4963, %v526
        %v4988 = vmul.f32 %v4966, %v526
        %v4989 = vmul.f32 %v4969, %v526
        %v4990 = vmul.f32 %v4972, %v526
        %v4991 = vmul.f32 %v4975, %v526
        %v4992 = vadd.f32 %v4976, %v4977
        %v4993 = vrot.slane %v4992, 4
        %v4994 = vadd.f32 %v4992, %v4993
        %v4995 = vrot.slane %v4994, 2
        %v4996 = vadd.f32 %v4994, %v4995
        %v4997 = vrot.slane %v4996, 1
        %v4998 = vadd.f32 %v4996, %v4997
        %v4999 = vadd.f32 %v4978, %v4979
        %v5000 = vrot.slane %v4999, 4
        %v5001 = vadd.f32 %v4999, %v5000
        %v5002 = vrot.slane %v5001, 2
        %v5003 = vadd.f32 %v5001, %v5002
        %v5004 = vrot.slane %v5003, 1
        %v5005 = vadd.f32 %v5003, %v5004
        %v5006 = vadd.f32 %v4980, %v4981
        %v5007 = vrot.slane %v5006, 4
        %v5008 = vadd.f32 %v5006, %v5007
        %v5009 = vrot.slane %v5008, 2
        %v5010 = vadd.f32 %v5008, %v5009
        %v5011 = vrot.slane %v5010, 1
        %v5012 = vadd.f32 %v5010, %v5011
        %v5013 = vadd.f32 %v4982, %v4983
        %v5014 = vrot.slane %v5013, 4
        %v5015 = vadd.f32 %v5013, %v5014
        %v5016 = vrot.slane %v5015, 2
        %v5017 = vadd.f32 %v5015, %v5016
        %v5018 = vrot.slane %v5017, 1
        %v5019 = vadd.f32 %v5017, %v5018
        %v5020 = vadd.f32 %v4984, %v4985
        %v5021 = vrot.slane %v5020, 4
        %v5022 = vadd.f32 %v5020, %v5021
        %v5023 = vrot.slane %v5022, 2
        %v5024 = vadd.f32 %v5022, %v5023
        %v5025 = vrot.slane %v5024, 1
        %v5026 = vadd.f32 %v5024, %v5025
        %v5027 = vadd.f32 %v4986, %v4987
        %v5028 = vrot.slane %v5027, 4
        %v5029 = vadd.f32 %v5027, %v5028
        %v5030 = vrot.slane %v5029, 2
        %v5031 = vadd.f32 %v5029, %v5030
        %v5032 = vrot.slane %v5031, 1
        %v5033 = vadd.f32 %v5031, %v5032
        %v5034 = vadd.f32 %v4988, %v4989
        %v5035 = vrot.slane %v5034, 4
        %v5036 = vadd.f32 %v5034, %v5035
        %v5037 = vrot.slane %v5036, 2
        %v5038 = vadd.f32 %v5036, %v5037
        %v5039 = vrot.slane %v5038, 1
        %v5040 = vadd.f32 %v5038, %v5039
        %v5041 = vadd.f32 %v4990, %v4991
        %v5042 = vrot.slane %v5041, 4
        %v5043 = vadd.f32 %v5041, %v5042
        %v5044 = vrot.slane %v5043, 2
        %v5045 = vadd.f32 %v5043, %v5044
        %v5046 = vrot.slane %v5045, 1
        %v5047 = vadd.f32 %v5045, %v5046
        %v5048 = vmul.f32 %v4998, %v526
        %v5049 = vmul.f32 %v5005, %v526
        %v5050 = vmul.f32 %v5012, %v526
        %v5051 = vmul.f32 %v5019, %v526
        %v5052 = vmul.f32 %v5026, %v526
        %v5053 = vmul.f32 %v5033, %v526
        %v5054 = vmul.f32 %v5040, %v526
        %v5055 = vmul.f32 %v5047, %v526
        %v5056 = vmax.f32 %v4920, %v4921
        %v5057 = vmax.f32 %v4922, %v4923
        %v5058 = vmax.f32 %v4924, %v4925
        %v5059 = vmax.f32 %v4926, %v4927
        %v5060 = vsub.f32 %v4920, %v5056
        %v5061 = vsub.f32 %v4922, %v5057
        %v5062 = vsub.f32 %v4924, %v5058
        %v5063 = vsub.f32 %v4926, %v5059
        %v5064 = vmul.f32 %v5060, 1.442695
        %v5065 = vpow.pop %v5064
        %v5066 = vmul.f32 %v5061, 1.442695
        %v5067 = vpow.pop %v5066
        %v5068 = vmul.f32 %v5062, 1.442695
        %v5069 = vpow.pop %v5068
        %v5070 = vmul.f32 %v5063, 1.442695
        %v5071 = vpow.pop %v5070
        %v5072 = vsub.f32 %v4921, %v5056
        %v5073 = vsub.f32 %v4923, %v5057
        %v5074 = vsub.f32 %v4925, %v5058
        %v5075 = vsub.f32 %v4927, %v5059
        %v5076 = vmul.f32 %v5072, 1.442695
        %v5077 = vpow.pop %v5076
        %v5078 = vmul.f32 %v5073, 1.442695
        %v5079 = vpow.pop %v5078
        %v5080 = vmul.f32 %v5074, 1.442695
        %v5081 = vpow.pop %v5080
        %v5082 = vmul.f32 %v5075, 1.442695
        %v5083 = vpow.pop %v5082
        %v5084 = vadd.f32 %v5065, %v5077
        %v5085 = vadd.f32 %v5067, %v5079
        %v5086 = vadd.f32 %v5069, %v5081
        %v5087 = vadd.f32 %v5071, %v5083
        %v5088 = vrcp.pop %v5084
        %v5089 = vmul.f32 %v5065, %v5088
        %v5090 = vrcp.pop %v5085
        %v5091 = vmul.f32 %v5067, %v5090
        %v5092 = vrcp.pop %v5086
        %v5093 = vmul.f32 %v5069, %v5092
        %v5094 = vrcp.pop %v5087
        %v5095 = vmul.f32 %v5071, %v5094
        %v5096 = vmul.f32 %v5077, %v5088
        %v5097 = vmul.f32 %v5079, %v5090
        %v5098 = vmul.f32 %v5081, %v5092
        %v5099 = vmul.f32 %v5083, %v5094
        %v5100 = vmax.f32 %v5048, %v5049
        %v5101 = vmax.f32 %v5050, %v5051
        %v5102 = vmax.f32 %v5052, %v5053
        %v5103 = vmax.f32 %v5054, %v5055
        %v5104 = vsub.f32 %v5048, %v5100
        %v5105 = vsub.f32 %v5050, %v5101
        %v5106 = vsub.f32 %v5052, %v5102
        %v5107 = vsub.f32 %v5054, %v5103
        %v5108 = vmul.f32 %v5104, 1.442695
        %v5109 = vpow.pop %v5108
        %v5110 = vmul.f32 %v5105, 1.442695
        %v5111 = vpow.pop %v5110
        %v5112 = vmul.f32 %v5106, 1.442695
        %v5113 = vpow.pop %v5112
        %v5114 = vmul.f32 %v5107, 1.442695
        %v5115 = vpow.pop %v5114
        %v5116 = vsub.f32 %v5049, %v5100
        %v5117 = vsub.f32 %v5051, %v5101
        %v5118 = vsub.f32 %v5053, %v5102
        %v5119 = vsub.f32 %v5055, %v5103
        %v5120 = vmul.f32 %v5116, 1.442695
        %v5121 = vpow.pop %v5120
        %v5122 = vmul.f32 %v5117, 1.442695
        %v5123 = vpow.pop %v5122
        %v5124 = vmul.f32 %v5118, 1.442695
        %v5125 = vpow.pop %v5124
        %v5126 = vmul.f32 %v5119, 1.442695
        %v5127 = vpow.pop %v5126
        %v5128 = vadd.f32 %v5109, %v5121
        %v5129 = vadd.f32 %v5111, %v5123
        %v5130 = vadd.f32 %v5113, %v5125
        %v5131 = vadd.f32 %v5115, %v5127
        %v5132 = vrcp.pop %v5128
        %v5133 = vmul.f32 %v5109, %v5132
        %v5134 = vrcp.pop %v5129
        %v5135 = vmul.f32 %v5111, %v5134
        %v5136 = vrcp.pop %v5130
        %v5137 = vmul.f32 %v5113, %v5136
        %v5138 = vrcp.pop %v5131
        %v5139 = vmul.f32 %v5115, %v5138
        %v5140 = vmul.f32 %v5121, %v5132
        %v5141 = vmul.f32 %v5123, %v5134
        %v5142 = vmul.f32 %v5125, %v5136
        %v5143 = vmul.f32 %v5127, %v5138
        %v5144 = vmul.f32 %v5089, %v4576
        %v5145 = vmul.f32 %v5089, %v4577
        %v5146 = vmul.f32 %v5091, %v4580
        %v5147 = vmul.f32 %v5091, %v4581
        %v5148 = vmul.f32 %v5093, %v4584
        %v5149 = vmul.f32 %v5093, %v4585
        %v5150 = vmul.f32 %v5095, %v4588
        %v5151 = vmul.f32 %v5095, %v4589
        %v5152 = vmul.f32 %v5133, %v2081
        %v5153 = vmul.f32 %v5133, %v2082
        %v5154 = vmul.f32 %v5133, %v2083
        %v5155 = vmul.f32 %v5135, %v2087
        %v5156 = vmul.f32 %v5135, %v2088
        %v5157 = vmul.f32 %v5135, %v2089
        %v5158 = vmul.f32 %v5137, %v2093
        %v5159 = vmul.f32 %v5137, %v2094
        %v5160 = vmul.f32 %v5137, %v2095
        %v5161 = vmul.f32 %v5139, %v2099
        %v5162 = vmul.f32 %v5139, %v2100
        %v5163 = vmul.f32 %v5139, %v2101
        %v5176 = vrot.slane %v5152, 1
        %v5177 = vrot.slane %v5153, 1
        %v5178 = vsel %vm551, %v5176, %v5177
        %v5179 = vrot.slane %v5154, 1
        %v5180 = vsel %vm551, %v5177, %v5179
        %v5181 = vrot.slane %v5155, 1
        %v5182 = vrot.slane %v5156, 1
        %v5183 = vsel %vm551, %v5181, %v5182
        %v5184 = vrot.slane %v5157, 1
        %v5185 = vsel %vm551, %v5182, %v5184
        %v5186 = vrot.slane %v5158, 1
        %v5187 = vrot.slane %v5159, 1
        %v5188 = vsel %vm551, %v5186, %v5187
        %v5189 = vrot.slane %v5160, 1
        %v5190 = vsel %vm551, %v5187, %v5189
        %v5191 = vrot.slane %v5161, 1
        %v5192 = vrot.slane %v5162, 1
        %v5193 = vsel %vm551, %v5191, %v5192
        %v5194 = vrot.slane %v5163, 1
        %v5195 = vsel %vm551, %v5192, %v5194
        %5196 = vrot.lane.b32.xlu0 %v5178, 127
        %v5197 = vpop.permute.xlu0 %5196
        %5198 = vrot.lane.b32.xlu0 %v5180, 127
        %v5199 = vpop.permute.xlu0 %5198
        %5200 = vrot.lane.b32.xlu0 %v5183, 127
        %v5201 = vpop.permute.xlu0 %5200
        %5202 = vrot.lane.b32.xlu0 %v5185, 127
        %v5203 = vpop.permute.xlu0 %5202
        %5204 = vrot.lane.b32.xlu0 %v5188, 127
        %v5205 = vpop.permute.xlu0 %5204
        %5206 = vrot.lane.b32.xlu0 %v5190, 127
        %v5207 = vpop.permute.xlu0 %5206
        %5208 = vrot.lane.b32.xlu0 %v5193, 127
        %v5209 = vpop.permute.xlu0 %5208
        %5210 = vrot.lane.b32.xlu0 %v5195, 127
        %v5211 = vpop.permute.xlu0 %5210
        %v5220 = vadd.f32 %v5144, %v5197
        %v5221 = vadd.f32 %v5145, %v5199
        %v5222 = vadd.f32 %v5146, %v5201
        %v5223 = vadd.f32 %v5147, %v5203
        %v5224 = vadd.f32 %v5148, %v5205
        %v5225 = vadd.f32 %v5149, %v5207
        %v5226 = vadd.f32 %v5150, %v5209
        %v5227 = vadd.f32 %v5151, %v5211
        %v5228 = vmul.f32 %v5096, %v4578
        %v5229 = vmul.f32 %v5096, %v4579
        %v5230 = vmul.f32 %v5097, %v4582
        %v5231 = vmul.f32 %v5097, %v4583
        %v5232 = vmul.f32 %v5098, %v4586
        %v5233 = vmul.f32 %v5098, %v4587
        %v5234 = vmul.f32 %v5099, %v4590
        %v5235 = vmul.f32 %v5099, %v4591
        %v5236 = vmul.f32 %v5140, %v2084
        %v5237 = vmul.f32 %v5140, %v2085
        %v5238 = vmul.f32 %v5140, %v2086
        %v5239 = vmul.f32 %v5141, %v2090
        %v5240 = vmul.f32 %v5141, %v2091
        %v5241 = vmul.f32 %v5141, %v2092
        %v5242 = vmul.f32 %v5142, %v2096
        %v5243 = vmul.f32 %v5142, %v2097
        %v5244 = vmul.f32 %v5142, %v2098
        %v5245 = vmul.f32 %v5143, %v2102
        %v5246 = vmul.f32 %v5143, %v2103
        %v5247 = vmul.f32 %v5143, %v2104
        %v5260 = vrot.slane %v5236, 1
        %v5261 = vrot.slane %v5237, 1
        %v5262 = vsel %vm551, %v5260, %v5261
        %v5263 = vrot.slane %v5238, 1
        %v5264 = vsel %vm551, %v5261, %v5263
        %v5265 = vrot.slane %v5239, 1
        %v5266 = vrot.slane %v5240, 1
        %v5267 = vsel %vm551, %v5265, %v5266
        %v5268 = vrot.slane %v5241, 1
        %v5269 = vsel %vm551, %v5266, %v5268
        %v5270 = vrot.slane %v5242, 1
        %v5271 = vrot.slane %v5243, 1
        %v5272 = vsel %vm551, %v5270, %v5271
        %v5273 = vrot.slane %v5244, 1
        %v5274 = vsel %vm551, %v5271, %v5273
        %v5275 = vrot.slane %v5245, 1
        %v5276 = vrot.slane %v5246, 1
        %v5277 = vsel %vm551, %v5275, %v5276
        %v5278 = vrot.slane %v5247, 1
        %v5279 = vsel %vm551, %v5276, %v5278
        %5280 = vrot.lane.b32.xlu0 %v5262, 127
        %v5281 = vpop.permute.xlu0 %5280
        %5282 = vrot.lane.b32.xlu0 %v5264, 127
        %v5283 = vpop.permute.xlu0 %5282
        %5284 = vrot.lane.b32.xlu0 %v5267, 127
        %v5285 = vpop.permute.xlu0 %5284
        %5286 = vrot.lane.b32.xlu0 %v5269, 127
        %v5287 = vpop.permute.xlu0 %5286
        %5288 = vrot.lane.b32.xlu0 %v5272, 127
        %v5289 = vpop.permute.xlu0 %5288
        %5290 = vrot.lane.b32.xlu0 %v5274, 127
        %v5291 = vpop.permute.xlu0 %5290
        %5292 = vrot.lane.b32.xlu0 %v5277, 127
        %v5293 = vpop.permute.xlu0 %5292
        %5294 = vrot.lane.b32.xlu0 %v5279, 127
        %v5295 = vpop.permute.xlu0 %5294
        %v5304 = vadd.f32 %v5228, %v5281
        %v5305 = vadd.f32 %v5229, %v5283
        %v5306 = vadd.f32 %v5230, %v5285
        %v5307 = vadd.f32 %v5231, %v5287
        %v5308 = vadd.f32 %v5232, %v5289
        %v5309 = vadd.f32 %v5233, %v5291
        %v5310 = vadd.f32 %v5234, %v5293
        %v5311 = vadd.f32 %v5235, %v5295
        %v5312 = vadd.f32 %v5220, %v5304
        %v5313 = vadd.f32 %v5221, %v5305
        %v5314 = vadd.f32 %v5222, %v5306
        %v5315 = vadd.f32 %v5223, %v5307
        %v5316 = vadd.f32 %v5224, %v5308
        %v5317 = vadd.f32 %v5225, %v5309
        %v5318 = vadd.f32 %v5226, %v5310
        %v5319 = vadd.f32 %v5227, %v5311
        %v5320 = vxor.u32 %v5312, 2147483648
        %v5321 = vxor.u32 %v5313, 2147483648
        %v5322 = vxor.u32 %v5314, 2147483648
        %v5323 = vxor.u32 %v5315, 2147483648
        %v5324 = vxor.u32 %v5316, 2147483648
        %v5325 = vxor.u32 %v5317, 2147483648
        %v5326 = vxor.u32 %v5318, 2147483648
        %v5327 = vxor.u32 %v5319, 2147483648
        %v5328 = vmul.f32 %v5320, 1.442695
        %v5329 = vpow.pop %v5328
        %v5330 = vmul.f32 %v5321, 1.442695
        %v5331 = vpow.pop %v5330
        %v5332 = vmul.f32 %v5322, 1.442695
        %v5333 = vpow.pop %v5332
        %v5334 = vmul.f32 %v5323, 1.442695
        %v5335 = vpow.pop %v5334
        %v5336 = vmul.f32 %v5324, 1.442695
        %v5337 = vpow.pop %v5336
        %v5338 = vmul.f32 %v5325, 1.442695
        %v5339 = vpow.pop %v5338
        %v5340 = vmul.f32 %v5326, 1.442695
        %v5341 = vpow.pop %v5340
        %v5342 = vmul.f32 %v5327, 1.442695
        %v5343 = vpow.pop %v5342
        %v5344 = vadd.f32 %v5329, 1.0
        %v5345 = vadd.f32 %v5331, 1.0
        %v5346 = vadd.f32 %v5333, 1.0
        %v5347 = vadd.f32 %v5335, 1.0
        %v5348 = vadd.f32 %v5337, 1.0
        %v5349 = vadd.f32 %v5339, 1.0
        %v5350 = vadd.f32 %v5341, 1.0
        %v5351 = vadd.f32 %v5343, 1.0
        %v5352 = vrcp.pop %v5344
        %v5353 = vmul.f32 1.0, %v5352
        %v5354 = vrcp.pop %v5345
        %v5355 = vmul.f32 1.0, %v5354
        %v5356 = vrcp.pop %v5346
        %v5357 = vmul.f32 1.0, %v5356
        %v5358 = vrcp.pop %v5347
        %v5359 = vmul.f32 1.0, %v5358
        %v5360 = vrcp.pop %v5348
        %v5361 = vmul.f32 1.0, %v5360
        %v5362 = vrcp.pop %v5349
        %v5363 = vmul.f32 1.0, %v5362
        %v5364 = vrcp.pop %v5350
        %v5365 = vmul.f32 1.0, %v5364
        %v5366 = vrcp.pop %v5351
        %v5367 = vmul.f32 1.0, %v5366
        %vm5376 = vcmask 1040384
        %v5377 = vrot.slane %v5353, 7
        %v5378 = vrot.slane %v5355, 7
        %v5379 = vsel %vm5376, %v5377, %v5378
        %v5380 = vrot.slane %v5357, 7
        %v5381 = vrot.slane %v5359, 7
        %v5382 = vsel %vm5376, %v5380, %v5381
        %v5383 = vrot.slane %v5361, 7
        %v5384 = vrot.slane %v5363, 7
        %v5385 = vsel %vm5376, %v5383, %v5384
        %v5386 = vrot.slane %v5365, 7
        %v5387 = vrot.slane %v5367, 7
        %v5388 = vsel %vm5376, %v5386, %v5387
        %5389 = vrot.lane.b32.xlu0 %v5377, 1
        %v5390 = vpop.permute.xlu0 %5389
        %5391 = vrot.lane.b32.xlu0 %v5379, 1
        %v5392 = vpop.permute.xlu0 %5391
        %5393 = vrot.lane.b32.xlu0 %v5378, 1
        %v5394 = vpop.permute.xlu0 %5393
        %5395 = vrot.lane.b32.xlu0 %v5380, 1
        %v5396 = vpop.permute.xlu0 %5395
        %5397 = vrot.lane.b32.xlu0 %v5382, 1
        %v5398 = vpop.permute.xlu0 %5397
        %5399 = vrot.lane.b32.xlu0 %v5381, 1
        %v5400 = vpop.permute.xlu0 %5399
        %5401 = vrot.lane.b32.xlu0 %v5383, 1
        %v5402 = vpop.permute.xlu0 %5401
        %5403 = vrot.lane.b32.xlu0 %v5385, 1
        %v5404 = vpop.permute.xlu0 %5403
        %5405 = vrot.lane.b32.xlu0 %v5384, 1
        %v5406 = vpop.permute.xlu0 %5405
        %5407 = vrot.lane.b32.xlu0 %v5386, 1
        %v5408 = vpop.permute.xlu0 %5407
        %5409 = vrot.lane.b32.xlu0 %v5388, 1
        %v5410 = vpop.permute.xlu0 %5409
        %5411 = vrot.lane.b32.xlu0 %v5387, 1
        %v5412 = vpop.permute.xlu0 %5411
        %v5425 = vmul.f32 %v283, %v5390
        %v5426 = vmul.f32 %v284, %v5392
        %v5427 = vmul.f32 %v285, %v5394
        %v5428 = vmul.f32 %v286, %v5390
        %v5429 = vmul.f32 %v287, %v5392
        %v5430 = vmul.f32 %v288, %v5394
        %v5431 = vmul.f32 %v289, %v5396
        %v5432 = vmul.f32 %v290, %v5398
        %v5433 = vmul.f32 %v291, %v5400
        %v5434 = vmul.f32 %v292, %v5396
        %v5435 = vmul.f32 %v293, %v5398
        %v5436 = vmul.f32 %v294, %v5400
        %v5437 = vmul.f32 %v295, %v5402
        %v5438 = vmul.f32 %v296, %v5404
        %v5439 = vmul.f32 %v297, %v5406
        %v5440 = vmul.f32 %v298, %v5402
        %v5441 = vmul.f32 %v299, %v5404
        %v5442 = vmul.f32 %v300, %v5406
        %v5443 = vmul.f32 %v301, %v5408
        %v5444 = vmul.f32 %v302, %v5410
        %v5445 = vmul.f32 %v303, %v5412
        %v5446 = vmul.f32 %v304, %v5408
        %v5447 = vmul.f32 %v305, %v5410
        %v5448 = vmul.f32 %v306, %v5412
        %5473 = vrot.lane.b32.xlu0 %v5425, 127
        %v5474 = vpop.permute.xlu0 %5473
        %5475 = vrot.lane.b32.xlu0 %v5426, 127
        %v5476 = vpop.permute.xlu0 %5475
        %5477 = vrot.lane.b32.xlu0 %v5427, 127
        %v5478 = vpop.permute.xlu0 %5477
        %5479 = vrot.lane.b32.xlu0 %v5428, 127
        %v5480 = vpop.permute.xlu0 %5479
        %5481 = vrot.lane.b32.xlu0 %v5429, 127
        %v5482 = vpop.permute.xlu0 %5481
        %5483 = vrot.lane.b32.xlu0 %v5430, 127
        %v5484 = vpop.permute.xlu0 %5483
        %5485 = vrot.lane.b32.xlu0 %v5431, 127
        %v5486 = vpop.permute.xlu0 %5485
        %5487 = vrot.lane.b32.xlu0 %v5432, 127
        %v5488 = vpop.permute.xlu0 %5487
        %5489 = vrot.lane.b32.xlu0 %v5433, 127
        %v5490 = vpop.permute.xlu0 %5489
        %5491 = vrot.lane.b32.xlu0 %v5434, 127
        %v5492 = vpop.permute.xlu0 %5491
        %5493 = vrot.lane.b32.xlu0 %v5435, 127
        %v5494 = vpop.permute.xlu0 %5493
        %5495 = vrot.lane.b32.xlu0 %v5436, 127
        %v5496 = vpop.permute.xlu0 %5495
        %5497 = vrot.lane.b32.xlu0 %v5437, 127
        %v5498 = vpop.permute.xlu0 %5497
        %5499 = vrot.lane.b32.xlu0 %v5438, 127
        %v5500 = vpop.permute.xlu0 %5499
        %5501 = vrot.lane.b32.xlu0 %v5439, 127
        %v5502 = vpop.permute.xlu0 %5501
        %5503 = vrot.lane.b32.xlu0 %v5440, 127
        %v5504 = vpop.permute.xlu0 %5503
        %5505 = vrot.lane.b32.xlu0 %v5441, 127
        %v5506 = vpop.permute.xlu0 %5505
        %5507 = vrot.lane.b32.xlu0 %v5442, 127
        %v5508 = vpop.permute.xlu0 %5507
        %5509 = vrot.lane.b32.xlu0 %v5443, 127
        %v5510 = vpop.permute.xlu0 %5509
        %5511 = vrot.lane.b32.xlu0 %v5444, 127
        %v5512 = vpop.permute.xlu0 %5511
        %5513 = vrot.lane.b32.xlu0 %v5445, 127
        %v5514 = vpop.permute.xlu0 %5513
        %5515 = vrot.lane.b32.xlu0 %v5446, 127
        %v5516 = vpop.permute.xlu0 %5515
        %5517 = vrot.lane.b32.xlu0 %v5447, 127
        %v5518 = vpop.permute.xlu0 %5517
        %5519 = vrot.lane.b32.xlu0 %v5448, 127
        %v5520 = vpop.permute.xlu0 %5519
        %5545 = vst.msk [vmem:[%s274 - $0x1] sm:$0xfe] %vm451, %v5474
        %5546 = vst.msk [vmem:[%s274 + $0x7] sm:$0xff] %vm455, %v5476
        %5547 = vst.msk [vmem:[%s274 + $0xf] sm:$0x1] %vm459, %v5478
        %5548 = vst.msk [vmem:[%s274 + $0xf] sm:$0xfe] %vm451, %v5480
        %5549 = vst.msk [vmem:[%s274 + $0x17] sm:$0xff] %vm455, %v5482
        %5550 = vst.msk [vmem:[%s274 + $0x1f] sm:$0x1] %vm459, %v5484
        %5551 = vst.msk [vmem:[%s274 + $0x1f] sm:$0xfe] %vm451, %v5486
        %5552 = vst.msk [vmem:[%s274 + $0x27] sm:$0xff] %vm455, %v5488
        %5553 = vst.msk [vmem:[%s274 + $0x2f] sm:$0x1] %vm459, %v5490
        %5554 = vst.msk [vmem:[%s274 + $0x2f] sm:$0xfe] %vm451, %v5492
        %5555 = vst.msk [vmem:[%s274 + $0x37] sm:$0xff] %vm455, %v5494
        %5556 = vst.msk [vmem:[%s274 + $0x3f] sm:$0x1] %vm459, %v5496
        %5557 = vst.msk [vmem:[%s274 + $0x3f] sm:$0xfe] %vm451, %v5498
        %5558 = vst.msk [vmem:[%s274 + $0x47] sm:$0xff] %vm455, %v5500
        %5559 = vst.msk [vmem:[%s274 + $0x4f] sm:$0x1] %vm459, %v5502
        %5560 = vst.msk [vmem:[%s274 + $0x4f] sm:$0xfe] %vm451, %v5504
        %5561 = vst.msk [vmem:[%s274 + $0x57] sm:$0xff] %vm455, %v5506
        %5562 = vst.msk [vmem:[%s274 + $0x5f] sm:$0x1] %vm459, %v5508
        %5563 = vst.msk [vmem:[%s274 + $0x5f] sm:$0xfe] %vm451, %v5510
        %5564 = vst.msk [vmem:[%s274 + $0x67] sm:$0xff] %vm455, %v5512
        %5565 = vst.msk [vmem:[%s274 + $0x6f] sm:$0x1] %vm459, %v5514
        %5566 = vst.msk [vmem:[%s274 + $0x6f] sm:$0xfe] %vm451, %v5516
        %5567 = vst.msk [vmem:[%s274 + $0x77] sm:$0xff] %vm455, %v5518
        %5568 = vst.msk [vmem:[%s274 + $0x7f] sm:$0x1] %vm459, %v5520
        %s5569 = sand.u32 %s181, 1
        %s5570 = scalar_lea.sflag [#allocation3], %s5569
        %s5571 = sand.u32 %s181, 1
        %s5572 = smul.addr %s5571, 128
        %s5573 = scalar_lea.vmem [#allocation2], %s5572
        // Predicated region
        $region49: #{tpu_custom_call.1} parent=47 // pred_check
          %p5574 = pneg %p191
        $region50: #{tpu_custom_call.1} parent=47 // pred_check_branch
          %5576 = sbr.rel (%p5574) target = $region52
        $region51: #{tpu_custom_call.1} parent=47 // pred_region
          %s5577 = smul.u32 4, %s21
          %s5579 = ssub.s32 2048, 2048
          %5580 = vsyncadd %s5570, %s5579
          %s5581 = smul.addr %s5577, 4
          %s5582 = smul.addr %s5581, 128
          %s5583 = scalar_lea.hbm %s7, %s5582
          %s5584 = sshll.u32 %s5573, 4
          %s5585 = int_to_ptr.vmem [resolvable:$true] %s5584
          %5590 = dma.vmem_to_hbm [thread:$0]  %s5585, 2048, %s5583, %s5570, 128, 128, 8
        $region52: #{tpu_custom_call.1} parent=47 // pred_fallthru
          _
      $region48: #{tpu_custom_call.1} parent=5 // pred_fallthru
        _
      %p5591 = scmp.le.s32.totalorder 2, %s16
      // Predicated region
      $region53: #{tpu_custom_call.1} parent=5 // pred_check
        %p5592 = pneg %p5591
      $region54: #{tpu_custom_call.1} parent=5 // pred_check_branch
        %5594 = sbr.rel (%p5592) target = $region56
      $region55: #{tpu_custom_call.1} parent=5 // pred_region
        %s5595 = ssub.s32 %s16, 2
        // Predicated region
        $region57: #{tpu_custom_call.1} parent=55 // pred_check
          %p5596 = pneg %p197
        $region58: #{tpu_custom_call.1} parent=55 // pred_check_branch
          %5598 = sbr.rel (%p5596) target = $region60
        $region59: #{tpu_custom_call.1} parent=55 // pred_region
          %s5599 = sand.u32 %s182, 1
          %s5600 = scalar_lea.sflag [#allocation3], %s5599
          %s5601 = sand.u32 %s182, 1
          %s5602 = smul.addr %s5601, 128
          %s5603 = scalar_lea.vmem [#allocation2], %s5602
          %5604 = dma.done %s5600, 2048
        $region60: #{tpu_custom_call.1} parent=55 // pred_fallthru
          _
      $region56: #{tpu_custom_call.1} parent=5 // pred_fallthru
        _
    $region6: #{tpu_custom_call.1} parent=1 // loop_footer
      %s20 = sadd.s32 1, %s16
    $region7: #{tpu_custom_call.1} parent=1 // loop_footer_branch
      %15 = sbr.rel target = $region3
    $region8: #{tpu_custom_call.1} parent=1 // loop_exit
      _
    %5605 = vsyncpa [#allocation3], 1
    %s5606 = scalar_lea.sflag [#allocation3], 1
    %5607 = vsyncpa %s5606, 1

</llo_original>
